<compile_context>
chip_gen: v7x
topology: tpu7x:2x2x1
jax: 0.10.0
libtpu: 0.0.40
codegen_flags: <defaults>
</compile_context>

<pallas_src>
import math
import jax
import jax.numpy as jnp
from jax.experimental import pallas as pl
from jax.experimental.pallas import tpu as pltpu

# ---- configuration (sys.argv[5] -> NHEAD, sys.argv[6] -> NUM_LAYERS in the original) ----
EMBED_DIM = 128
VOCAB_SIZE = 32          # original uses len(stoi); synthetic small vocab here
VOCAB_PAD = 128          # lane-dense padded vocab for the kernel output
NHEAD = 4
NUM_LAYERS = 2
FFN_DIM = 512
LN_EPS = 1e-5
HEAD_DIM = EMBED_DIM // NHEAD
NEG_INF = -1e30          # large finite negative (avoids 0/0 NaN if a row ever fully masks)


# ---------------------------------------------------------------------------
# plain-JAX glue: positional encoding (same formula as getPositionEncoding)
# ---------------------------------------------------------------------------
def get_position_encoding(seq_len, d, n=100):
    k = jnp.arange(seq_len, dtype=jnp.float32)[:, None]          # (T, 1)
    i = jnp.arange(d // 2, dtype=jnp.float32)[None, :]           # (1, d/2)
    denom = jnp.power(jnp.float32(n), 2.0 * i / d)
    angle = k / denom                                            # (T, d/2)
    P = jnp.zeros((seq_len, d), dtype=jnp.float32)
    P = P.at[:, 0::2].set(jnp.sin(angle))
    P = P.at[:, 1::2].set(jnp.cos(angle))
    return P


# ---------------------------------------------------------------------------
# Pallas kernel: all encoder layers + final linear, Bb sequences per grid step
# ---------------------------------------------------------------------------
def _layernorm(y, gamma, beta):
    mean = jnp.mean(y, axis=-1, keepdims=True)
    var = jnp.mean((y - mean) ** 2, axis=-1, keepdims=True)
    return (y - mean) * jax.lax.rsqrt(var + LN_EPS) * gamma + beta


def fused_encoder_kernel(x_ref,
                         wqkv_ref, bqkv_ref,
                         wo_ref, bo_ref,
                         g1_ref, be1_ref,
                         w1_ref, b1_ref, w2_ref, b2_ref,
                         g2_ref, be2_ref,
                         fcw_ref, fcb_ref,
                         o_ref):
    Bb, T, E = x_ref.shape
    R = Bb * T
    x = x_ref[...].reshape(R, E)                      # (R, E) f32, all rows this step

    # boolean causal mask, regenerated cheaply in-kernel (iota + cmp)
    row = jax.lax.broadcasted_iota(jnp.int32, (T, T), 0)
    col = jax.lax.broadcasted_iota(jnp.int32, (T, T), 1)
    causal = row >= col                               # True where attention allowed

    # TODO(synk): dropout inside TransformerEncoderLayer is omitted (eval-mode identity).
    for l in range(NUM_LAYERS):                       # static unroll over layers
        xb = x.astype(jnp.bfloat16)

        # --- fused lane-dense QKV projection: one (R,128)x(128,384) MXU push ---
        # (1/sqrt(head_dim) is folded into the Q columns of wqkv/bqkv at prep time)
        qkv = jnp.dot(xb, wqkv_ref[l], preferred_element_type=jnp.float32) + bqkv_ref[l]
        q = qkv[:, 0:E]
        k = qkv[:, E:2 * E]
        v = qkv[:, 2 * E:3 * E]

        # --- per-sequence, per-head attention; heads lane-concatenated to (T,E) ---
        ctx_rows = []
        for s in range(Bb):                           # static unroll over sequences
            qs = q[s * T:(s + 1) * T]
            ks = k[s * T:(s + 1) * T]
            vs = v[s * T:(s + 1) * T]
            heads = []
            for h in range(NHEAD):                    # static unroll over heads
                sl = slice(h * HEAD_DIM, (h + 1) * HEAD_DIM)    # free 32-lane slice
                sc = jax.lax.dot_general(qs[:, sl], ks[:, sl],
                                         (((1,), (1,)), ((), ())),
                                         preferred_element_type=jnp.float32)   # (T, T)
                sc = jnp.where(causal, sc, NEG_INF)
                sc = sc - jnp.max(sc, axis=-1, keepdims=True)
                p = jnp.exp(sc)
                p = p * pl.reciprocal(jnp.sum(p, axis=-1, keepdims=True), approx=True)
                heads.append(jnp.dot(p.astype(jnp.bfloat16),
                                     vs[:, sl].astype(jnp.bfloat16),
                                     preferred_element_type=jnp.float32))      # (T, hd)
            ctx_rows.append(jnp.concatenate(heads, axis=-1))    # (T, E)
        ctx = ctx_rows[0] if Bb == 1 else jnp.concatenate(ctx_rows, axis=0)    # (R, E)

        # --- single lane-dense Wo matmul: (R,128)x(128,128) ---
        attn = jnp.dot(ctx.astype(jnp.bfloat16), wo_ref[l],
                       preferred_element_type=jnp.float32) + bo_ref[l]

        # residual + LayerNorm1 (f32)
        y = _layernorm(x + attn, g1_ref[l], be1_ref[l])

        # --- feed forward (ReLU), on the full (R, E) slab ---
        yb = y.astype(jnp.bfloat16)
        h1 = jnp.maximum(
            jnp.dot(yb, w1_ref[l], preferred_element_type=jnp.float32) + b1_ref[l], 0.0)
        h2 = jnp.dot(h1.astype(jnp.bfloat16), w2_ref[l],
                     preferred_element_type=jnp.float32) + b2_ref[l]

        # residual + LayerNorm2 (f32)
        x = _layernorm(y + h2, g2_ref[l], be2_ref[l])

    # final linear to lane-dense padded vocab (sliced back to VOCAB_SIZE in wrapper)
    out = jnp.dot(x.astype(jnp.bfloat16), fcw_ref[...],
                  preferred_element_type=jnp.float32) + fcb_ref[...]
    o_ref[...] = out.reshape(Bb, T, VOCAB_PAD)


# ---------------------------------------------------------------------------
# wrappers
# ---------------------------------------------------------------------------
def fused_transformer(x, kp):
    B, T, E = x.shape
    L = NUM_LAYERS

    # v7x: 2 balanced chunks keep both TensorCores busy; v5e/v6e: fewer, fatter
    # grid steps amortize the ~0.35 us/step overhead and improve MXU row fill.
    n_chunks = 2 if (B % 2 == 0) else 1
    bb = B // n_chunks

    def full(shape):
        return pl.BlockSpec(shape, lambda c, _s=shape: tuple(0 for _ in _s))

    in_specs = [
        pl.BlockSpec((bb, T, E), lambda c: (c, 0, 0)),       # x (Bb sequences per step)
        full((L, E, 3 * E)), full((L, 1, 3 * E)),            # wqkv, bqkv (scale folded in)
        full((L, E, E)), full((L, 1, E)),                    # wo, bo
        full((L, 1, E)), full((L, 1, E)),                    # ln1 gamma/beta
        full((L, E, FFN_DIM)), full((L, 1, FFN_DIM)),        # w1, b1
        full((L, FFN_DIM, E)), full((L, 1, E)),              # w2, b2
        full((L, 1, E)), full((L, 1, E)),                    # ln2 gamma/beta
        full((E, VOCAB_PAD)), full((1, VOCAB_PAD)),          # fc1 (padded, lane-dense)
    ]

    return pl.pallas_call(
        fused_encoder_kernel,
        out_shape=jax.ShapeDtypeStruct((B, T, VOCAB_PAD), jnp.float32),
        grid_spec=pltpu.PrefetchScalarGridSpec(
            num_scalar_prefetch=0,
            grid=(n_chunks,),
            in_specs=in_specs,
            out_specs=pl.BlockSpec((bb, T, VOCAB_PAD), lambda c: (c, 0, 0)),
        ),
        compiler_params=pltpu.CompilerParams(
            dimension_semantics=("parallel",)),
    )(x,
      kp["wqkv"], kp["bqkv"], kp["wo"], kp["bo"],
      kp["g1"], kp["be1"], kp["w1"], kp["b1"], kp["w2"], kp["b2"],
      kp["g2"], kp["be2"], kp["fcw"], kp["fcb"])


def prepare_kernel_params(params):
    """Stack per-layer weights, fold the attention scale into the Q columns of the
    fused QKV weight, cast matmul weights to bf16, pad the vocab projection to 128
    lanes.  Called ONCE outside jit; the resulting pytree is passed to forward()."""
    E = EMBED_DIM
    scale = 1.0 / math.sqrt(HEAD_DIM)
    # fold 1/sqrt(head_dim) into the Q third of the fused QKV projection
    scale_vec = jnp.concatenate([jnp.full((E,), scale, jnp.float32),
                                 jnp.ones((2 * E,), jnp.float32)])      # (3E,)

    def stack(name):
        return jnp.stack([lp[name] for lp in params["layers"]], axis=0)

    kp = {
        "wqkv": (stack("wqkv") * scale_vec).astype(jnp.bfloat16),       # (L, E, 3E)
        "bqkv": (stack("bqkv") * scale_vec).astype(jnp.float32),        # (L, 1, 3E)
        "wo": stack("wo").astype(jnp.bfloat16),                         # (L, E, E)
        "bo": stack("bo").astype(jnp.float32),                          # (L, 1, E)
        "g1": stack("g1").astype(jnp.float32), "be1": stack("be1").astype(jnp.float32),
        "w1": stack("w1").astype(jnp.bfloat16), "b1": stack("b1").astype(jnp.float32),
        "w2": stack("w2").astype(jnp.bfloat16), "b2": stack("b2").astype(jnp.float32),
        "g2": stack("g2").astype(jnp.float32), "be2": stack("be2").astype(jnp.float32),
    }

    fcw = jnp.zeros((E, VOCAB_PAD), jnp.float32).at[:, :VOCAB_SIZE].set(params["fc1_w"])
    fcb = jnp.zeros((1, VOCAB_PAD), jnp.float32).at[:, :VOCAB_SIZE].set(params["fc1_b"])
    kp["fcw"] = fcw.astype(jnp.bfloat16)
    kp["fcb"] = fcb
    return kp


def init_params(key):
    def nrm(k, shape, scale=0.02):
        return (scale * jax.random.normal(k, shape)).astype(jnp.float32)

    keys = jax.random.split(key, 4 + 6 * NUM_LAYERS)
    params = {
        "embedding": nrm(keys[0], (VOCAB_SIZE, EMBED_DIM), 1.0),   # nn.Embedding ~ N(0,1)
        "fc1_w": nrm(keys[1], (EMBED_DIM, VOCAB_SIZE)),
        "fc1_b": jnp.zeros((1, VOCAB_SIZE), jnp.float32),
        "layers": [],
    }
    for l in range(NUM_LAYERS):
        ks = keys[4 + 6 * l: 4 + 6 * (l + 1)]
        params["layers"].append({
            "wqkv": nrm(ks[0], (EMBED_DIM, 3 * EMBED_DIM)),
            "bqkv": jnp.zeros((1, 3 * EMBED_DIM), jnp.float32),
            "wo": nrm(ks[1], (EMBED_DIM, EMBED_DIM)),
            "bo": jnp.zeros((1, EMBED_DIM), jnp.float32),
            "g1": jnp.ones((1, EMBED_DIM), jnp.float32),
            "be1": jnp.zeros((1, EMBED_DIM), jnp.float32),
            "w1": nrm(ks[2], (EMBED_DIM, FFN_DIM)),
            "b1": jnp.zeros((1, FFN_DIM), jnp.float32),
            "w2": nrm(ks[3], (FFN_DIM, EMBED_DIM)),
            "b2": jnp.zeros((1, EMBED_DIM), jnp.float32),
            "g2": jnp.ones((1, EMBED_DIM), jnp.float32),
            "be2": jnp.zeros((1, EMBED_DIM), jnp.float32),
        })
    return params


def forward(kp, embedding, token_ids):
    # embedding lookup + positional encoding (glue, plain JAX); weight prep is
    # NOT done here — kp is prepared once outside jit.
    x = jnp.take(embedding, token_ids, axis=0)                    # (B, T, E)
    B, T, _ = x.shape
    x = (x + get_position_encoding(T, EMBED_DIM)).astype(jnp.float32)
    logits = fused_transformer(x, kp)                             # (B, T, VOCAB_PAD)
    return logits[..., :VOCAB_SIZE]                               # (B, T, V)


if __name__ == "__main__":
    key = jax.random.PRNGKey(0)
    k_ids, k_params = jax.random.split(key)
    B, T = 2, 8
    token_ids = jax.random.randint(k_ids, (B, T), 0, VOCAB_SIZE, dtype=jnp.int32)
    params = init_params(k_params)
    kp = prepare_kernel_params(params)        # hoisted: runs once, not per forward call

    fwd = jax.jit(forward)
    out = fwd(kp, params["embedding"], token_ids)
    jax.block_until_ready(out)
    assert out.shape == (B, T, VOCAB_SIZE) and out.dtype == jnp.float32
    assert bool(jnp.all(jnp.isfinite(out)))
    print("KERNEL_OK")
</pallas_src>

<mosaic_0001>
module attributes {stable_mosaic.version = 11 : i64} {
  func.func @fused_encoder_kernel(%arg0: i32, %arg1: memref<1x8x128xf32, #tpu.memory_space<vmem>>, %arg2: memref<2x128x384xbf16, #tpu.memory_space<vmem>>, %arg3: memref<2x1x384xf32, #tpu.memory_space<vmem>>, %arg4: memref<2x128x128xbf16, #tpu.memory_space<vmem>>, %arg5: memref<2x1x128xf32, #tpu.memory_space<vmem>>, %arg6: memref<2x1x128xf32, #tpu.memory_space<vmem>>, %arg7: memref<2x1x128xf32, #tpu.memory_space<vmem>>, %arg8: memref<2x128x512xbf16, #tpu.memory_space<vmem>>, %arg9: memref<2x1x512xf32, #tpu.memory_space<vmem>>, %arg10: memref<2x512x128xbf16, #tpu.memory_space<vmem>>, %arg11: memref<2x1x128xf32, #tpu.memory_space<vmem>>, %arg12: memref<2x1x128xf32, #tpu.memory_space<vmem>>, %arg13: memref<2x1x128xf32, #tpu.memory_space<vmem>>, %arg14: memref<128x128xbf16, #tpu.memory_space<vmem>>, %arg15: memref<1x128xf32, #tpu.memory_space<vmem>>, %arg16: memref<1x8x128xf32, #tpu.memory_space<vmem>>) attributes {dimension_semantics = [#tpu.dimension_semantics<parallel>], iteration_bounds = array<i64: 2>, scalar_prefetch = 0 : i64, scratch_operands = 0 : i64, tpu.core_type = #tpu.core_type<tc>, window_params = [{transform_indices = @transform_0, window_bounds = array<i64: 1, 8, 128>}, {pipeline_mode = #tpu.pipeline_mode<synchronous>, transform_indices = @transform_1, window_bounds = array<i64: 2, 128, 384>}, {pipeline_mode = #tpu.pipeline_mode<synchronous>, transform_indices = @transform_2, window_bounds = array<i64: 2, 1, 384>}, {pipeline_mode = #tpu.pipeline_mode<synchronous>, transform_indices = @transform_3, window_bounds = array<i64: 2, 128, 128>}, {pipeline_mode = #tpu.pipeline_mode<synchronous>, transform_indices = @transform_4, window_bounds = array<i64: 2, 1, 128>}, {pipeline_mode = #tpu.pipeline_mode<synchronous>, transform_indices = @transform_5, window_bounds = array<i64: 2, 1, 128>}, {pipeline_mode = #tpu.pipeline_mode<synchronous>, transform_indices = @transform_6, window_bounds = array<i64: 2, 1, 128>}, {pipeline_mode = #tpu.pipeline_mode<synchronous>, transform_indices = @transform_7, window_bounds = array<i64: 2, 128, 512>}, {pipeline_mode = #tpu.pipeline_mode<synchronous>, transform_indices = @transform_8, window_bounds = array<i64: 2, 1, 512>}, {pipeline_mode = #tpu.pipeline_mode<synchronous>, transform_indices = @transform_9, window_bounds = array<i64: 2, 512, 128>}, {pipeline_mode = #tpu.pipeline_mode<synchronous>, transform_indices = @transform_10, window_bounds = array<i64: 2, 1, 128>}, {pipeline_mode = #tpu.pipeline_mode<synchronous>, transform_indices = @transform_11, window_bounds = array<i64: 2, 1, 128>}, {pipeline_mode = #tpu.pipeline_mode<synchronous>, transform_indices = @transform_12, window_bounds = array<i64: 2, 1, 128>}, {pipeline_mode = #tpu.pipeline_mode<synchronous>, transform_indices = @transform_13, window_bounds = array<i64: 128, 128>}, {pipeline_mode = #tpu.pipeline_mode<synchronous>, transform_indices = @transform_14, window_bounds = array<i64: 1, 128>}, {transform_indices = @transform_15, window_bounds = array<i64: 1, 8, 128>}]} {
    %c0 = arith.constant 0 : index
    %c0_0 = arith.constant 0 : index
    %c0_1 = arith.constant 0 : index
    %0 = vector.load %arg1[%c0, %c0_0, %c0_1] : memref<1x8x128xf32, #tpu.memory_space<vmem>>, vector<1x8x128xf32>
    %1 = vector.shape_cast %0 : vector<1x8x128xf32> to vector<8x128xf32>
    %2 = tpu.iota {dimensions = array<i32: 0>} : vector<8x8xi32>
    %3 = tpu.iota {dimensions = array<i32: 1>} : vector<8x8xi32>
    %4 = arith.cmpi sge, %2, %3 : vector<8x8xi32>
    %5 = arith.truncf %1 : vector<8x128xf32> to vector<8x128xbf16>
    %c0_2 = arith.constant 0 : index
    %c0_3 = arith.constant 0 : index
    %c0_4 = arith.constant 0 : index
    %6 = vector.load %arg2[%c0_2, %c0_3, %c0_4] : memref<2x128x384xbf16, #tpu.memory_space<vmem>>, vector<1x128x384xbf16>
    %7 = vector.shape_cast %6 : vector<1x128x384xbf16> to vector<128x384xbf16>
    %cst = arith.constant dense<0.000000e+00> : vector<8x384xf32>
    %8 = tpu.matmul %5, %7, %cst {dimension_numbers = #tpu.dot_dimension_numbers<[1], [0], [0], [1], [0, 0, 1, 1], [], []>} : vector<8x128xbf16>, vector<128x384xbf16>, vector<8x384xf32> -> vector<8x384xf32>
    %c0_5 = arith.constant 0 : index
    %c0_6 = arith.constant 0 : index
    %c0_7 = arith.constant 0 : index
    %9 = vector.load %arg3[%c0_5, %c0_6, %c0_7] : memref<2x1x384xf32, #tpu.memory_space<vmem>>, vector<1x1x384xf32>
    %10 = vector.shape_cast %9 : vector<1x1x384xf32> to vector<1x384xf32>
    %11 = vector.broadcast %10 : vector<1x384xf32> to vector<8x384xf32>
    %12 = arith.addf %8, %11 : vector<8x384xf32>
    %13 = vector.extract_strided_slice %12 {offsets = [0, 0], sizes = [8, 128], strides = [1, 1]} : vector<8x384xf32> to vector<8x128xf32>
    %14 = vector.extract_strided_slice %12 {offsets = [0, 128], sizes = [8, 128], strides = [1, 1]} : vector<8x384xf32> to vector<8x128xf32>
    %15 = vector.extract_strided_slice %12 {offsets = [0, 256], sizes = [8, 128], strides = [1, 1]} : vector<8x384xf32> to vector<8x128xf32>
    %16 = vector.extract_strided_slice %13 {offsets = [0, 0], sizes = [8, 32], strides = [1, 1]} : vector<8x128xf32> to vector<8x32xf32>
    %17 = vector.extract_strided_slice %14 {offsets = [0, 0], sizes = [8, 32], strides = [1, 1]} : vector<8x128xf32> to vector<8x32xf32>
    %cst_8 = arith.constant dense<0.000000e+00> : vector<8x8xf32>
    %18 = tpu.matmul %16, %17, %cst_8 {dimension_numbers = #tpu.dot_dimension_numbers<[1], [1], [0], [0], [0, 0, 1, 0], [], []>} : vector<8x32xf32>, vector<8x32xf32>, vector<8x8xf32> -> vector<8x8xf32>
    %cst_9 = arith.constant -1.000000e+30 : f32
    %19 = vector.broadcast %cst_9 : f32 to vector<8x8xf32>
    %20 = arith.select %4, %18, %19 : vector<8x8xi1>, vector<8x8xf32>
    %cst_10 = arith.constant dense<0xFF800000> : vector<8xf32>
    %21 = vector.multi_reduction <maximumf>, %20, %cst_10 [1] : vector<8x8xf32> to vector<8xf32>
    %22 = vector.shape_cast %21 : vector<8xf32> to vector<8x1xf32>
    %23 = vector.broadcast %22 : vector<8x1xf32> to vector<8x8xf32>
    %24 = arith.subf %20, %23 : vector<8x8xf32>
    %25 = math.exp %24 : vector<8x8xf32>
    %cst_11 = arith.constant dense<0.000000e+00> : vector<8xf32>
    %26 = vector.multi_reduction <add>, %25, %cst_11 [1] : vector<8x8xf32> to vector<8xf32>
    %27 = vector.shape_cast %26 : vector<8xf32> to vector<8x1xf32>
    %28 = tpu.reciprocal %27 {approx = true} : vector<8x1xf32> -> vector<8x1xf32>
    %29 = vector.broadcast %28 : vector<8x1xf32> to vector<8x8xf32>
    %30 = arith.mulf %25, %29 : vector<8x8xf32>
    %31 = arith.truncf %30 : vector<8x8xf32> to vector<8x8xbf16>
    %32 = vector.extract_strided_slice %15 {offsets = [0, 0], sizes = [8, 32], strides = [1, 1]} : vector<8x128xf32> to vector<8x32xf32>
    %33 = arith.truncf %32 : vector<8x32xf32> to vector<8x32xbf16>
    %cst_12 = arith.constant dense<0.000000e+00> : vector<8x32xf32>
    %34 = tpu.matmul %31, %33, %cst_12 {dimension_numbers = #tpu.dot_dimension_numbers<[1], [0], [0], [1], [0, 0, 1, 1], [], []>} : vector<8x8xbf16>, vector<8x32xbf16>, vector<8x32xf32> -> vector<8x32xf32>
    %35 = vector.extract_strided_slice %13 {offsets = [0, 32], sizes = [8, 32], strides = [1, 1]} : vector<8x128xf32> to vector<8x32xf32>
    %36 = vector.extract_strided_slice %14 {offsets = [0, 32], sizes = [8, 32], strides = [1, 1]} : vector<8x128xf32> to vector<8x32xf32>
    %cst_13 = arith.constant dense<0.000000e+00> : vector<8x8xf32>
    %37 = tpu.matmul %35, %36, %cst_13 {dimension_numbers = #tpu.dot_dimension_numbers<[1], [1], [0], [0], [0, 0, 1, 0], [], []>} : vector<8x32xf32>, vector<8x32xf32>, vector<8x8xf32> -> vector<8x8xf32>
    %cst_14 = arith.constant -1.000000e+30 : f32
    %38 = vector.broadcast %cst_14 : f32 to vector<8x8xf32>
    %39 = arith.select %4, %37, %38 : vector<8x8xi1>, vector<8x8xf32>
    %cst_15 = arith.constant dense<0xFF800000> : vector<8xf32>
    %40 = vector.multi_reduction <maximumf>, %39, %cst_15 [1] : vector<8x8xf32> to vector<8xf32>
    %41 = vector.shape_cast %40 : vector<8xf32> to vector<8x1xf32>
    %42 = vector.broadcast %41 : vector<8x1xf32> to vector<8x8xf32>
    %43 = arith.subf %39, %42 : vector<8x8xf32>
    %44 = math.exp %43 : vector<8x8xf32>
    %cst_16 = arith.constant dense<0.000000e+00> : vector<8xf32>
    %45 = vector.multi_reduction <add>, %44, %cst_16 [1] : vector<8x8xf32> to vector<8xf32>
    %46 = vector.shape_cast %45 : vector<8xf32> to vector<8x1xf32>
    %47 = tpu.reciprocal %46 {approx = true} : vector<8x1xf32> -> vector<8x1xf32>
    %48 = vector.broadcast %47 : vector<8x1xf32> to vector<8x8xf32>
    %49 = arith.mulf %44, %48 : vector<8x8xf32>
    %50 = arith.truncf %49 : vector<8x8xf32> to vector<8x8xbf16>
    %51 = vector.extract_strided_slice %15 {offsets = [0, 32], sizes = [8, 32], strides = [1, 1]} : vector<8x128xf32> to vector<8x32xf32>
    %52 = arith.truncf %51 : vector<8x32xf32> to vector<8x32xbf16>
    %cst_17 = arith.constant dense<0.000000e+00> : vector<8x32xf32>
    %53 = tpu.matmul %50, %52, %cst_17 {dimension_numbers = #tpu.dot_dimension_numbers<[1], [0], [0], [1], [0, 0, 1, 1], [], []>} : vector<8x8xbf16>, vector<8x32xbf16>, vector<8x32xf32> -> vector<8x32xf32>
    %54 = vector.extract_strided_slice %13 {offsets = [0, 64], sizes = [8, 32], strides = [1, 1]} : vector<8x128xf32> to vector<8x32xf32>
    %55 = vector.extract_strided_slice %14 {offsets = [0, 64], sizes = [8, 32], strides = [1, 1]} : vector<8x128xf32> to vector<8x32xf32>
    %cst_18 = arith.constant dense<0.000000e+00> : vector<8x8xf32>
    %56 = tpu.matmul %54, %55, %cst_18 {dimension_numbers = #tpu.dot_dimension_numbers<[1], [1], [0], [0], [0, 0, 1, 0], [], []>} : vector<8x32xf32>, vector<8x32xf32>, vector<8x8xf32> -> vector<8x8xf32>
    %cst_19 = arith.constant -1.000000e+30 : f32
    %57 = vector.broadcast %cst_19 : f32 to vector<8x8xf32>
    %58 = arith.select %4, %56, %57 : vector<8x8xi1>, vector<8x8xf32>
    %cst_20 = arith.constant dense<0xFF800000> : vector<8xf32>
    %59 = vector.multi_reduction <maximumf>, %58, %cst_20 [1] : vector<8x8xf32> to vector<8xf32>
    %60 = vector.shape_cast %59 : vector<8xf32> to vector<8x1xf32>
    %61 = vector.broadcast %60 : vector<8x1xf32> to vector<8x8xf32>
    %62 = arith.subf %58, %61 : vector<8x8xf32>
    %63 = math.exp %62 : vector<8x8xf32>
    %cst_21 = arith.constant dense<0.000000e+00> : vector<8xf32>
    %64 = vector.multi_reduction <add>, %63, %cst_21 [1] : vector<8x8xf32> to vector<8xf32>
    %65 = vector.shape_cast %64 : vector<8xf32> to vector<8x1xf32>
    %66 = tpu.reciprocal %65 {approx = true} : vector<8x1xf32> -> vector<8x1xf32>
    %67 = vector.broadcast %66 : vector<8x1xf32> to vector<8x8xf32>
    %68 = arith.mulf %63, %67 : vector<8x8xf32>
    %69 = arith.truncf %68 : vector<8x8xf32> to vector<8x8xbf16>
    %70 = vector.extract_strided_slice %15 {offsets = [0, 64], sizes = [8, 32], strides = [1, 1]} : vector<8x128xf32> to vector<8x32xf32>
    %71 = arith.truncf %70 : vector<8x32xf32> to vector<8x32xbf16>
    %cst_22 = arith.constant dense<0.000000e+00> : vector<8x32xf32>
    %72 = tpu.matmul %69, %71, %cst_22 {dimension_numbers = #tpu.dot_dimension_numbers<[1], [0], [0], [1], [0, 0, 1, 1], [], []>} : vector<8x8xbf16>, vector<8x32xbf16>, vector<8x32xf32> -> vector<8x32xf32>
    %73 = vector.extract_strided_slice %13 {offsets = [0, 96], sizes = [8, 32], strides = [1, 1]} : vector<8x128xf32> to vector<8x32xf32>
    %74 = vector.extract_strided_slice %14 {offsets = [0, 96], sizes = [8, 32], strides = [1, 1]} : vector<8x128xf32> to vector<8x32xf32>
    %cst_23 = arith.constant dense<0.000000e+00> : vector<8x8xf32>
    %75 = tpu.matmul %73, %74, %cst_23 {dimension_numbers = #tpu.dot_dimension_numbers<[1], [1], [0], [0], [0, 0, 1, 0], [], []>} : vector<8x32xf32>, vector<8x32xf32>, vector<8x8xf32> -> vector<8x8xf32>
    %cst_24 = arith.constant -1.000000e+30 : f32
    %76 = vector.broadcast %cst_24 : f32 to vector<8x8xf32>
    %77 = arith.select %4, %75, %76 : vector<8x8xi1>, vector<8x8xf32>
    %cst_25 = arith.constant dense<0xFF800000> : vector<8xf32>
    %78 = vector.multi_reduction <maximumf>, %77, %cst_25 [1] : vector<8x8xf32> to vector<8xf32>
    %79 = vector.shape_cast %78 : vector<8xf32> to vector<8x1xf32>
    %80 = vector.broadcast %79 : vector<8x1xf32> to vector<8x8xf32>
    %81 = arith.subf %77, %80 : vector<8x8xf32>
    %82 = math.exp %81 : vector<8x8xf32>
    %cst_26 = arith.constant dense<0.000000e+00> : vector<8xf32>
    %83 = vector.multi_reduction <add>, %82, %cst_26 [1] : vector<8x8xf32> to vector<8xf32>
    %84 = vector.shape_cast %83 : vector<8xf32> to vector<8x1xf32>
    %85 = tpu.reciprocal %84 {approx = true} : vector<8x1xf32> -> vector<8x1xf32>
    %86 = vector.broadcast %85 : vector<8x1xf32> to vector<8x8xf32>
    %87 = arith.mulf %82, %86 : vector<8x8xf32>
    %88 = arith.truncf %87 : vector<8x8xf32> to vector<8x8xbf16>
    %89 = vector.extract_strided_slice %15 {offsets = [0, 96], sizes = [8, 32], strides = [1, 1]} : vector<8x128xf32> to vector<8x32xf32>
    %90 = arith.truncf %89 : vector<8x32xf32> to vector<8x32xbf16>
    %cst_27 = arith.constant dense<0.000000e+00> : vector<8x32xf32>
    %91 = tpu.matmul %88, %90, %cst_27 {dimension_numbers = #tpu.dot_dimension_numbers<[1], [0], [0], [1], [0, 0, 1, 1], [], []>} : vector<8x8xbf16>, vector<8x32xbf16>, vector<8x32xf32> -> vector<8x32xf32>
    %92 = tpu.concatenate %34, %53, %72, %91 in 1 : vector<8x32xf32>, vector<8x32xf32>, vector<8x32xf32>, vector<8x32xf32> -> vector<8x128xf32>
    %93 = arith.truncf %92 : vector<8x128xf32> to vector<8x128xbf16>
    %c0_28 = arith.constant 0 : index
    %c0_29 = arith.constant 0 : index
    %c0_30 = arith.constant 0 : index
    %94 = vector.load %arg4[%c0_28, %c0_29, %c0_30] : memref<2x128x128xbf16, #tpu.memory_space<vmem>>, vector<1x128x128xbf16>
    %95 = vector.shape_cast %94 : vector<1x128x128xbf16> to vector<128x128xbf16>
    %cst_31 = arith.constant dense<0.000000e+00> : vector<8x128xf32>
    %96 = tpu.matmul %93, %95, %cst_31 {dimension_numbers = #tpu.dot_dimension_numbers<[1], [0], [0], [1], [0, 0, 1, 1], [], []>} : vector<8x128xbf16>, vector<128x128xbf16>, vector<8x128xf32> -> vector<8x128xf32>
    %c0_32 = arith.constant 0 : index
    %c0_33 = arith.constant 0 : index
    %c0_34 = arith.constant 0 : index
    %97 = vector.load %arg5[%c0_32, %c0_33, %c0_34] : memref<2x1x128xf32, #tpu.memory_space<vmem>>, vector<1x1x128xf32>
    %98 = vector.shape_cast %97 : vector<1x1x128xf32> to vector<1x128xf32>
    %99 = vector.broadcast %98 : vector<1x128xf32> to vector<8x128xf32>
    %100 = arith.addf %96, %99 : vector<8x128xf32>
    %101 = arith.addf %1, %100 : vector<8x128xf32>
    %c0_35 = arith.constant 0 : index
    %c0_36 = arith.constant 0 : index
    %c0_37 = arith.constant 0 : index
    %102 = vector.load %arg6[%c0_35, %c0_36, %c0_37] : memref<2x1x128xf32, #tpu.memory_space<vmem>>, vector<1x1x128xf32>
    %103 = vector.shape_cast %102 : vector<1x1x128xf32> to vector<1x128xf32>
    %c0_38 = arith.constant 0 : index
    %c0_39 = arith.constant 0 : index
    %c0_40 = arith.constant 0 : index
    %104 = vector.load %arg7[%c0_38, %c0_39, %c0_40] : memref<2x1x128xf32, #tpu.memory_space<vmem>>, vector<1x1x128xf32>
    %105 = vector.shape_cast %104 : vector<1x1x128xf32> to vector<1x128xf32>
    %cst_41 = arith.constant dense<0.000000e+00> : vector<8xf32>
    %106 = vector.multi_reduction <add>, %101, %cst_41 [1] : vector<8x128xf32> to vector<8xf32>
    %107 = vector.shape_cast %106 : vector<8xf32> to vector<8x1xf32>
    %cst_42 = arith.constant 1.280000e+02 : f32
    %108 = vector.broadcast %cst_42 : f32 to vector<8x1xf32>
    %109 = arith.divf %107, %108 : vector<8x1xf32>
    %110 = vector.broadcast %109 : vector<8x1xf32> to vector<8x128xf32>
    %111 = arith.subf %101, %110 : vector<8x128xf32>
    %112 = arith.mulf %111, %111 : vector<8x128xf32>
    %cst_43 = arith.constant dense<0.000000e+00> : vector<8xf32>
    %113 = vector.multi_reduction <add>, %112, %cst_43 [1] : vector<8x128xf32> to vector<8xf32>
    %114 = vector.shape_cast %113 : vector<8xf32> to vector<8x1xf32>
    %cst_44 = arith.constant 1.280000e+02 : f32
    %115 = vector.broadcast %cst_44 : f32 to vector<8x1xf32>
    %116 = arith.divf %114, %115 : vector<8x1xf32>
    %117 = vector.broadcast %109 : vector<8x1xf32> to vector<8x128xf32>
    %118 = arith.subf %101, %117 : vector<8x128xf32>
    %cst_45 = arith.constant 9.99999974E-6 : f32
    %119 = vector.broadcast %cst_45 : f32 to vector<8x1xf32>
    %120 = arith.addf %116, %119 : vector<8x1xf32>
    %121 = math.rsqrt %120 : vector<8x1xf32>
    %122 = vector.broadcast %121 : vector<8x1xf32> to vector<8x128xf32>
    %123 = arith.mulf %118, %122 : vector<8x128xf32>
    %124 = vector.broadcast %103 : vector<1x128xf32> to vector<8x128xf32>
    %125 = arith.mulf %123, %124 : vector<8x128xf32>
    %126 = vector.broadcast %105 : vector<1x128xf32> to vector<8x128xf32>
    %127 = arith.addf %125, %126 : vector<8x128xf32>
    %128 = arith.truncf %127 : vector<8x128xf32> to vector<8x128xbf16>
    %c0_46 = arith.constant 0 : index
    %c0_47 = arith.constant 0 : index
    %c0_48 = arith.constant 0 : index
    %129 = vector.load %arg8[%c0_46, %c0_47, %c0_48] : memref<2x128x512xbf16, #tpu.memory_space<vmem>>, vector<1x128x512xbf16>
    %130 = vector.shape_cast %129 : vector<1x128x512xbf16> to vector<128x512xbf16>
    %cst_49 = arith.constant dense<0.000000e+00> : vector<8x512xf32>
    %131 = tpu.matmul %128, %130, %cst_49 {dimension_numbers = #tpu.dot_dimension_numbers<[1], [0], [0], [1], [0, 0, 1, 1], [], []>} : vector<8x128xbf16>, vector<128x512xbf16>, vector<8x512xf32> -> vector<8x512xf32>
    %c0_50 = arith.constant 0 : index
    %c0_51 = arith.constant 0 : index
    %c0_52 = arith.constant 0 : index
    %132 = vector.load %arg9[%c0_50, %c0_51, %c0_52] : memref<2x1x512xf32, #tpu.memory_space<vmem>>, vector<1x1x512xf32>
    %133 = vector.shape_cast %132 : vector<1x1x512xf32> to vector<1x512xf32>
    %134 = vector.broadcast %133 : vector<1x512xf32> to vector<8x512xf32>
    %135 = arith.addf %131, %134 : vector<8x512xf32>
    %cst_53 = arith.constant 0.000000e+00 : f32
    %136 = vector.broadcast %cst_53 : f32 to vector<8x512xf32>
    %137 = arith.maximumf %135, %136 : vector<8x512xf32>
    %138 = arith.truncf %137 : vector<8x512xf32> to vector<8x512xbf16>
    %c0_54 = arith.constant 0 : index
    %c0_55 = arith.constant 0 : index
    %c0_56 = arith.constant 0 : index
    %139 = vector.load %arg10[%c0_54, %c0_55, %c0_56] : memref<2x512x128xbf16, #tpu.memory_space<vmem>>, vector<1x512x128xbf16>
    %140 = vector.shape_cast %139 : vector<1x512x128xbf16> to vector<512x128xbf16>
    %cst_57 = arith.constant dense<0.000000e+00> : vector<8x128xf32>
    %141 = tpu.matmul %138, %140, %cst_57 {dimension_numbers = #tpu.dot_dimension_numbers<[1], [0], [0], [1], [0, 0, 1, 1], [], []>} : vector<8x512xbf16>, vector<512x128xbf16>, vector<8x128xf32> -> vector<8x128xf32>
    %c0_58 = arith.constant 0 : index
    %c0_59 = arith.constant 0 : index
    %c0_60 = arith.constant 0 : index
    %142 = vector.load %arg11[%c0_58, %c0_59, %c0_60] : memref<2x1x128xf32, #tpu.memory_space<vmem>>, vector<1x1x128xf32>
    %143 = vector.shape_cast %142 : vector<1x1x128xf32> to vector<1x128xf32>
    %144 = vector.broadcast %143 : vector<1x128xf32> to vector<8x128xf32>
    %145 = arith.addf %141, %144 : vector<8x128xf32>
    %146 = arith.addf %127, %145 : vector<8x128xf32>
    %c0_61 = arith.constant 0 : index
    %c0_62 = arith.constant 0 : index
    %c0_63 = arith.constant 0 : index
    %147 = vector.load %arg12[%c0_61, %c0_62, %c0_63] : memref<2x1x128xf32, #tpu.memory_space<vmem>>, vector<1x1x128xf32>
    %148 = vector.shape_cast %147 : vector<1x1x128xf32> to vector<1x128xf32>
    %c0_64 = arith.constant 0 : index
    %c0_65 = arith.constant 0 : index
    %c0_66 = arith.constant 0 : index
    %149 = vector.load %arg13[%c0_64, %c0_65, %c0_66] : memref<2x1x128xf32, #tpu.memory_space<vmem>>, vector<1x1x128xf32>
    %150 = vector.shape_cast %149 : vector<1x1x128xf32> to vector<1x128xf32>
    %cst_67 = arith.constant dense<0.000000e+00> : vector<8xf32>
    %151 = vector.multi_reduction <add>, %146, %cst_67 [1] : vector<8x128xf32> to vector<8xf32>
    %152 = vector.shape_cast %151 : vector<8xf32> to vector<8x1xf32>
    %cst_68 = arith.constant 1.280000e+02 : f32
    %153 = vector.broadcast %cst_68 : f32 to vector<8x1xf32>
    %154 = arith.divf %152, %153 : vector<8x1xf32>
    %155 = vector.broadcast %154 : vector<8x1xf32> to vector<8x128xf32>
    %156 = arith.subf %146, %155 : vector<8x128xf32>
    %157 = arith.mulf %156, %156 : vector<8x128xf32>
    %cst_69 = arith.constant dense<0.000000e+00> : vector<8xf32>
    %158 = vector.multi_reduction <add>, %157, %cst_69 [1] : vector<8x128xf32> to vector<8xf32>
    %159 = vector.shape_cast %158 : vector<8xf32> to vector<8x1xf32>
    %cst_70 = arith.constant 1.280000e+02 : f32
    %160 = vector.broadcast %cst_70 : f32 to vector<8x1xf32>
    %161 = arith.divf %159, %160 : vector<8x1xf32>
    %162 = vector.broadcast %154 : vector<8x1xf32> to vector<8x128xf32>
    %163 = arith.subf %146, %162 : vector<8x128xf32>
    %cst_71 = arith.constant 9.99999974E-6 : f32
    %164 = vector.broadcast %cst_71 : f32 to vector<8x1xf32>
    %165 = arith.addf %161, %164 : vector<8x1xf32>
    %166 = math.rsqrt %165 : vector<8x1xf32>
    %167 = vector.broadcast %166 : vector<8x1xf32> to vector<8x128xf32>
    %168 = arith.mulf %163, %167 : vector<8x128xf32>
    %169 = vector.broadcast %148 : vector<1x128xf32> to vector<8x128xf32>
    %170 = arith.mulf %168, %169 : vector<8x128xf32>
    %171 = vector.broadcast %150 : vector<1x128xf32> to vector<8x128xf32>
    %172 = arith.addf %170, %171 : vector<8x128xf32>
    %173 = arith.truncf %172 : vector<8x128xf32> to vector<8x128xbf16>
    %c1 = arith.constant 1 : index
    %c0_72 = arith.constant 0 : index
    %c0_73 = arith.constant 0 : index
    %174 = vector.load %arg2[%c1, %c0_72, %c0_73] : memref<2x128x384xbf16, #tpu.memory_space<vmem>>, vector<1x128x384xbf16>
    %175 = vector.shape_cast %174 : vector<1x128x384xbf16> to vector<128x384xbf16>
    %cst_74 = arith.constant dense<0.000000e+00> : vector<8x384xf32>
    %176 = tpu.matmul %173, %175, %cst_74 {dimension_numbers = #tpu.dot_dimension_numbers<[1], [0], [0], [1], [0, 0, 1, 1], [], []>} : vector<8x128xbf16>, vector<128x384xbf16>, vector<8x384xf32> -> vector<8x384xf32>
    %c1_75 = arith.constant 1 : index
    %c0_76 = arith.constant 0 : index
    %c0_77 = arith.constant 0 : index
    %177 = vector.load %arg3[%c1_75, %c0_76, %c0_77] : memref<2x1x384xf32, #tpu.memory_space<vmem>>, vector<1x1x384xf32>
    %178 = vector.shape_cast %177 : vector<1x1x384xf32> to vector<1x384xf32>
    %179 = vector.broadcast %178 : vector<1x384xf32> to vector<8x384xf32>
    %180 = arith.addf %176, %179 : vector<8x384xf32>
    %181 = vector.extract_strided_slice %180 {offsets = [0, 0], sizes = [8, 128], strides = [1, 1]} : vector<8x384xf32> to vector<8x128xf32>
    %182 = vector.extract_strided_slice %180 {offsets = [0, 128], sizes = [8, 128], strides = [1, 1]} : vector<8x384xf32> to vector<8x128xf32>
    %183 = vector.extract_strided_slice %180 {offsets = [0, 256], sizes = [8, 128], strides = [1, 1]} : vector<8x384xf32> to vector<8x128xf32>
    %184 = vector.extract_strided_slice %181 {offsets = [0, 0], sizes = [8, 32], strides = [1, 1]} : vector<8x128xf32> to vector<8x32xf32>
    %185 = vector.extract_strided_slice %182 {offsets = [0, 0], sizes = [8, 32], strides = [1, 1]} : vector<8x128xf32> to vector<8x32xf32>
    %cst_78 = arith.constant dense<0.000000e+00> : vector<8x8xf32>
    %186 = tpu.matmul %184, %185, %cst_78 {dimension_numbers = #tpu.dot_dimension_numbers<[1], [1], [0], [0], [0, 0, 1, 0], [], []>} : vector<8x32xf32>, vector<8x32xf32>, vector<8x8xf32> -> vector<8x8xf32>
    %cst_79 = arith.constant -1.000000e+30 : f32
    %187 = vector.broadcast %cst_79 : f32 to vector<8x8xf32>
    %188 = arith.select %4, %186, %187 : vector<8x8xi1>, vector<8x8xf32>
    %cst_80 = arith.constant dense<0xFF800000> : vector<8xf32>
    %189 = vector.multi_reduction <maximumf>, %188, %cst_80 [1] : vector<8x8xf32> to vector<8xf32>
    %190 = vector.shape_cast %189 : vector<8xf32> to vector<8x1xf32>
    %191 = vector.broadcast %190 : vector<8x1xf32> to vector<8x8xf32>
    %192 = arith.subf %188, %191 : vector<8x8xf32>
    %193 = math.exp %192 : vector<8x8xf32>
    %cst_81 = arith.constant dense<0.000000e+00> : vector<8xf32>
    %194 = vector.multi_reduction <add>, %193, %cst_81 [1] : vector<8x8xf32> to vector<8xf32>
    %195 = vector.shape_cast %194 : vector<8xf32> to vector<8x1xf32>
    %196 = tpu.reciprocal %195 {approx = true} : vector<8x1xf32> -> vector<8x1xf32>
    %197 = vector.broadcast %196 : vector<8x1xf32> to vector<8x8xf32>
    %198 = arith.mulf %193, %197 : vector<8x8xf32>
    %199 = arith.truncf %198 : vector<8x8xf32> to vector<8x8xbf16>
    %200 = vector.extract_strided_slice %183 {offsets = [0, 0], sizes = [8, 32], strides = [1, 1]} : vector<8x128xf32> to vector<8x32xf32>
    %201 = arith.truncf %200 : vector<8x32xf32> to vector<8x32xbf16>
    %cst_82 = arith.constant dense<0.000000e+00> : vector<8x32xf32>
    %202 = tpu.matmul %199, %201, %cst_82 {dimension_numbers = #tpu.dot_dimension_numbers<[1], [0], [0], [1], [0, 0, 1, 1], [], []>} : vector<8x8xbf16>, vector<8x32xbf16>, vector<8x32xf32> -> vector<8x32xf32>
    %203 = vector.extract_strided_slice %181 {offsets = [0, 32], sizes = [8, 32], strides = [1, 1]} : vector<8x128xf32> to vector<8x32xf32>
    %204 = vector.extract_strided_slice %182 {offsets = [0, 32], sizes = [8, 32], strides = [1, 1]} : vector<8x128xf32> to vector<8x32xf32>
    %cst_83 = arith.constant dense<0.000000e+00> : vector<8x8xf32>
    %205 = tpu.matmul %203, %204, %cst_83 {dimension_numbers = #tpu.dot_dimension_numbers<[1], [1], [0], [0], [0, 0, 1, 0], [], []>} : vector<8x32xf32>, vector<8x32xf32>, vector<8x8xf32> -> vector<8x8xf32>
    %cst_84 = arith.constant -1.000000e+30 : f32
    %206 = vector.broadcast %cst_84 : f32 to vector<8x8xf32>
    %207 = arith.select %4, %205, %206 : vector<8x8xi1>, vector<8x8xf32>
    %cst_85 = arith.constant dense<0xFF800000> : vector<8xf32>
    %208 = vector.multi_reduction <maximumf>, %207, %cst_85 [1] : vector<8x8xf32> to vector<8xf32>
    %209 = vector.shape_cast %208 : vector<8xf32> to vector<8x1xf32>
    %210 = vector.broadcast %209 : vector<8x1xf32> to vector<8x8xf32>
    %211 = arith.subf %207, %210 : vector<8x8xf32>
    %212 = math.exp %211 : vector<8x8xf32>
    %cst_86 = arith.constant dense<0.000000e+00> : vector<8xf32>
    %213 = vector.multi_reduction <add>, %212, %cst_86 [1] : vector<8x8xf32> to vector<8xf32>
    %214 = vector.shape_cast %213 : vector<8xf32> to vector<8x1xf32>
    %215 = tpu.reciprocal %214 {approx = true} : vector<8x1xf32> -> vector<8x1xf32>
    %216 = vector.broadcast %215 : vector<8x1xf32> to vector<8x8xf32>
    %217 = arith.mulf %212, %216 : vector<8x8xf32>
    %218 = arith.truncf %217 : vector<8x8xf32> to vector<8x8xbf16>
    %219 = vector.extract_strided_slice %183 {offsets = [0, 32], sizes = [8, 32], strides = [1, 1]} : vector<8x128xf32> to vector<8x32xf32>
    %220 = arith.truncf %219 : vector<8x32xf32> to vector<8x32xbf16>
    %cst_87 = arith.constant dense<0.000000e+00> : vector<8x32xf32>
    %221 = tpu.matmul %218, %220, %cst_87 {dimension_numbers = #tpu.dot_dimension_numbers<[1], [0], [0], [1], [0, 0, 1, 1], [], []>} : vector<8x8xbf16>, vector<8x32xbf16>, vector<8x32xf32> -> vector<8x32xf32>
    %222 = vector.extract_strided_slice %181 {offsets = [0, 64], sizes = [8, 32], strides = [1, 1]} : vector<8x128xf32> to vector<8x32xf32>
    %223 = vector.extract_strided_slice %182 {offsets = [0, 64], sizes = [8, 32], strides = [1, 1]} : vector<8x128xf32> to vector<8x32xf32>
    %cst_88 = arith.constant dense<0.000000e+00> : vector<8x8xf32>
    %224 = tpu.matmul %222, %223, %cst_88 {dimension_numbers = #tpu.dot_dimension_numbers<[1], [1], [0], [0], [0, 0, 1, 0], [], []>} : vector<8x32xf32>, vector<8x32xf32>, vector<8x8xf32> -> vector<8x8xf32>
    %cst_89 = arith.constant -1.000000e+30 : f32
    %225 = vector.broadcast %cst_89 : f32 to vector<8x8xf32>
    %226 = arith.select %4, %224, %225 : vector<8x8xi1>, vector<8x8xf32>
    %cst_90 = arith.constant dense<0xFF800000> : vector<8xf32>
    %227 = vector.multi_reduction <maximumf>, %226, %cst_90 [1] : vector<8x8xf32> to vector<8xf32>
    %228 = vector.shape_cast %227 : vector<8xf32> to vector<8x1xf32>
    %229 = vector.broadcast %228 : vector<8x1xf32> to vector<8x8xf32>
    %230 = arith.subf %226, %229 : vector<8x8xf32>
    %231 = math.exp %230 : vector<8x8xf32>
    %cst_91 = arith.constant dense<0.000000e+00> : vector<8xf32>
    %232 = vector.multi_reduction <add>, %231, %cst_91 [1] : vector<8x8xf32> to vector<8xf32>
    %233 = vector.shape_cast %232 : vector<8xf32> to vector<8x1xf32>
    %234 = tpu.reciprocal %233 {approx = true} : vector<8x1xf32> -> vector<8x1xf32>
    %235 = vector.broadcast %234 : vector<8x1xf32> to vector<8x8xf32>
    %236 = arith.mulf %231, %235 : vector<8x8xf32>
    %237 = arith.truncf %236 : vector<8x8xf32> to vector<8x8xbf16>
    %238 = vector.extract_strided_slice %183 {offsets = [0, 64], sizes = [8, 32], strides = [1, 1]} : vector<8x128xf32> to vector<8x32xf32>
    %239 = arith.truncf %238 : vector<8x32xf32> to vector<8x32xbf16>
    %cst_92 = arith.constant dense<0.000000e+00> : vector<8x32xf32>
    %240 = tpu.matmul %237, %239, %cst_92 {dimension_numbers = #tpu.dot_dimension_numbers<[1], [0], [0], [1], [0, 0, 1, 1], [], []>} : vector<8x8xbf16>, vector<8x32xbf16>, vector<8x32xf32> -> vector<8x32xf32>
    %241 = vector.extract_strided_slice %181 {offsets = [0, 96], sizes = [8, 32], strides = [1, 1]} : vector<8x128xf32> to vector<8x32xf32>
    %242 = vector.extract_strided_slice %182 {offsets = [0, 96], sizes = [8, 32], strides = [1, 1]} : vector<8x128xf32> to vector<8x32xf32>
    %cst_93 = arith.constant dense<0.000000e+00> : vector<8x8xf32>
    %243 = tpu.matmul %241, %242, %cst_93 {dimension_numbers = #tpu.dot_dimension_numbers<[1], [1], [0], [0], [0, 0, 1, 0], [], []>} : vector<8x32xf32>, vector<8x32xf32>, vector<8x8xf32> -> vector<8x8xf32>
    %cst_94 = arith.constant -1.000000e+30 : f32
    %244 = vector.broadcast %cst_94 : f32 to vector<8x8xf32>
    %245 = arith.select %4, %243, %244 : vector<8x8xi1>, vector<8x8xf32>
    %cst_95 = arith.constant dense<0xFF800000> : vector<8xf32>
    %246 = vector.multi_reduction <maximumf>, %245, %cst_95 [1] : vector<8x8xf32> to vector<8xf32>
    %247 = vector.shape_cast %246 : vector<8xf32> to vector<8x1xf32>
    %248 = vector.broadcast %247 : vector<8x1xf32> to vector<8x8xf32>
    %249 = arith.subf %245, %248 : vector<8x8xf32>
    %250 = math.exp %249 : vector<8x8xf32>
    %cst_96 = arith.constant dense<0.000000e+00> : vector<8xf32>
    %251 = vector.multi_reduction <add>, %250, %cst_96 [1] : vector<8x8xf32> to vector<8xf32>
    %252 = vector.shape_cast %251 : vector<8xf32> to vector<8x1xf32>
    %253 = tpu.reciprocal %252 {approx = true} : vector<8x1xf32> -> vector<8x1xf32>
    %254 = vector.broadcast %253 : vector<8x1xf32> to vector<8x8xf32>
    %255 = arith.mulf %250, %254 : vector<8x8xf32>
    %256 = arith.truncf %255 : vector<8x8xf32> to vector<8x8xbf16>
    %257 = vector.extract_strided_slice %183 {offsets = [0, 96], sizes = [8, 32], strides = [1, 1]} : vector<8x128xf32> to vector<8x32xf32>
    %258 = arith.truncf %257 : vector<8x32xf32> to vector<8x32xbf16>
    %cst_97 = arith.constant dense<0.000000e+00> : vector<8x32xf32>
    %259 = tpu.matmul %256, %258, %cst_97 {dimension_numbers = #tpu.dot_dimension_numbers<[1], [0], [0], [1], [0, 0, 1, 1], [], []>} : vector<8x8xbf16>, vector<8x32xbf16>, vector<8x32xf32> -> vector<8x32xf32>
    %260 = tpu.concatenate %202, %221, %240, %259 in 1 : vector<8x32xf32>, vector<8x32xf32>, vector<8x32xf32>, vector<8x32xf32> -> vector<8x128xf32>
    %261 = arith.truncf %260 : vector<8x128xf32> to vector<8x128xbf16>
    %c1_98 = arith.constant 1 : index
    %c0_99 = arith.constant 0 : index
    %c0_100 = arith.constant 0 : index
    %262 = vector.load %arg4[%c1_98, %c0_99, %c0_100] : memref<2x128x128xbf16, #tpu.memory_space<vmem>>, vector<1x128x128xbf16>
    %263 = vector.shape_cast %262 : vector<1x128x128xbf16> to vector<128x128xbf16>
    %cst_101 = arith.constant dense<0.000000e+00> : vector<8x128xf32>
    %264 = tpu.matmul %261, %263, %cst_101 {dimension_numbers = #tpu.dot_dimension_numbers<[1], [0], [0], [1], [0, 0, 1, 1], [], []>} : vector<8x128xbf16>, vector<128x128xbf16>, vector<8x128xf32> -> vector<8x128xf32>
    %c1_102 = arith.constant 1 : index
    %c0_103 = arith.constant 0 : index
    %c0_104 = arith.constant 0 : index
    %265 = vector.load %arg5[%c1_102, %c0_103, %c0_104] : memref<2x1x128xf32, #tpu.memory_space<vmem>>, vector<1x1x128xf32>
    %266 = vector.shape_cast %265 : vector<1x1x128xf32> to vector<1x128xf32>
    %267 = vector.broadcast %266 : vector<1x128xf32> to vector<8x128xf32>
    %268 = arith.addf %264, %267 : vector<8x128xf32>
    %269 = arith.addf %172, %268 : vector<8x128xf32>
    %c1_105 = arith.constant 1 : index
    %c0_106 = arith.constant 0 : index
    %c0_107 = arith.constant 0 : index
    %270 = vector.load %arg6[%c1_105, %c0_106, %c0_107] : memref<2x1x128xf32, #tpu.memory_space<vmem>>, vector<1x1x128xf32>
    %271 = vector.shape_cast %270 : vector<1x1x128xf32> to vector<1x128xf32>
    %c1_108 = arith.constant 1 : index
    %c0_109 = arith.constant 0 : index
    %c0_110 = arith.constant 0 : index
    %272 = vector.load %arg7[%c1_108, %c0_109, %c0_110] : memref<2x1x128xf32, #tpu.memory_space<vmem>>, vector<1x1x128xf32>
    %273 = vector.shape_cast %272 : vector<1x1x128xf32> to vector<1x128xf32>
    %cst_111 = arith.constant dense<0.000000e+00> : vector<8xf32>
    %274 = vector.multi_reduction <add>, %269, %cst_111 [1] : vector<8x128xf32> to vector<8xf32>
    %275 = vector.shape_cast %274 : vector<8xf32> to vector<8x1xf32>
    %cst_112 = arith.constant 1.280000e+02 : f32
    %276 = vector.broadcast %cst_112 : f32 to vector<8x1xf32>
    %277 = arith.divf %275, %276 : vector<8x1xf32>
    %278 = vector.broadcast %277 : vector<8x1xf32> to vector<8x128xf32>
    %279 = arith.subf %269, %278 : vector<8x128xf32>
    %280 = arith.mulf %279, %279 : vector<8x128xf32>
    %cst_113 = arith.constant dense<0.000000e+00> : vector<8xf32>
    %281 = vector.multi_reduction <add>, %280, %cst_113 [1] : vector<8x128xf32> to vector<8xf32>
    %282 = vector.shape_cast %281 : vector<8xf32> to vector<8x1xf32>
    %cst_114 = arith.constant 1.280000e+02 : f32
    %283 = vector.broadcast %cst_114 : f32 to vector<8x1xf32>
    %284 = arith.divf %282, %283 : vector<8x1xf32>
    %285 = vector.broadcast %277 : vector<8x1xf32> to vector<8x128xf32>
    %286 = arith.subf %269, %285 : vector<8x128xf32>
    %cst_115 = arith.constant 9.99999974E-6 : f32
    %287 = vector.broadcast %cst_115 : f32 to vector<8x1xf32>
    %288 = arith.addf %284, %287 : vector<8x1xf32>
    %289 = math.rsqrt %288 : vector<8x1xf32>
    %290 = vector.broadcast %289 : vector<8x1xf32> to vector<8x128xf32>
    %291 = arith.mulf %286, %290 : vector<8x128xf32>
    %292 = vector.broadcast %271 : vector<1x128xf32> to vector<8x128xf32>
    %293 = arith.mulf %291, %292 : vector<8x128xf32>
    %294 = vector.broadcast %273 : vector<1x128xf32> to vector<8x128xf32>
    %295 = arith.addf %293, %294 : vector<8x128xf32>
    %296 = arith.truncf %295 : vector<8x128xf32> to vector<8x128xbf16>
    %c1_116 = arith.constant 1 : index
    %c0_117 = arith.constant 0 : index
    %c0_118 = arith.constant 0 : index
    %297 = vector.load %arg8[%c1_116, %c0_117, %c0_118] : memref<2x128x512xbf16, #tpu.memory_space<vmem>>, vector<1x128x512xbf16>
    %298 = vector.shape_cast %297 : vector<1x128x512xbf16> to vector<128x512xbf16>
    %cst_119 = arith.constant dense<0.000000e+00> : vector<8x512xf32>
    %299 = tpu.matmul %296, %298, %cst_119 {dimension_numbers = #tpu.dot_dimension_numbers<[1], [0], [0], [1], [0, 0, 1, 1], [], []>} : vector<8x128xbf16>, vector<128x512xbf16>, vector<8x512xf32> -> vector<8x512xf32>
    %c1_120 = arith.constant 1 : index
    %c0_121 = arith.constant 0 : index
    %c0_122 = arith.constant 0 : index
    %300 = vector.load %arg9[%c1_120, %c0_121, %c0_122] : memref<2x1x512xf32, #tpu.memory_space<vmem>>, vector<1x1x512xf32>
    %301 = vector.shape_cast %300 : vector<1x1x512xf32> to vector<1x512xf32>
    %302 = vector.broadcast %301 : vector<1x512xf32> to vector<8x512xf32>
    %303 = arith.addf %299, %302 : vector<8x512xf32>
    %cst_123 = arith.constant 0.000000e+00 : f32
    %304 = vector.broadcast %cst_123 : f32 to vector<8x512xf32>
    %305 = arith.maximumf %303, %304 : vector<8x512xf32>
    %306 = arith.truncf %305 : vector<8x512xf32> to vector<8x512xbf16>
    %c1_124 = arith.constant 1 : index
    %c0_125 = arith.constant 0 : index
    %c0_126 = arith.constant 0 : index
    %307 = vector.load %arg10[%c1_124, %c0_125, %c0_126] : memref<2x512x128xbf16, #tpu.memory_space<vmem>>, vector<1x512x128xbf16>
    %308 = vector.shape_cast %307 : vector<1x512x128xbf16> to vector<512x128xbf16>
    %cst_127 = arith.constant dense<0.000000e+00> : vector<8x128xf32>
    %309 = tpu.matmul %306, %308, %cst_127 {dimension_numbers = #tpu.dot_dimension_numbers<[1], [0], [0], [1], [0, 0, 1, 1], [], []>} : vector<8x512xbf16>, vector<512x128xbf16>, vector<8x128xf32> -> vector<8x128xf32>
    %c1_128 = arith.constant 1 : index
    %c0_129 = arith.constant 0 : index
    %c0_130 = arith.constant 0 : index
    %310 = vector.load %arg11[%c1_128, %c0_129, %c0_130] : memref<2x1x128xf32, #tpu.memory_space<vmem>>, vector<1x1x128xf32>
    %311 = vector.shape_cast %310 : vector<1x1x128xf32> to vector<1x128xf32>
    %312 = vector.broadcast %311 : vector<1x128xf32> to vector<8x128xf32>
    %313 = arith.addf %309, %312 : vector<8x128xf32>
    %314 = arith.addf %295, %313 : vector<8x128xf32>
    %c1_131 = arith.constant 1 : index
    %c0_132 = arith.constant 0 : index
    %c0_133 = arith.constant 0 : index
    %315 = vector.load %arg12[%c1_131, %c0_132, %c0_133] : memref<2x1x128xf32, #tpu.memory_space<vmem>>, vector<1x1x128xf32>
    %316 = vector.shape_cast %315 : vector<1x1x128xf32> to vector<1x128xf32>
    %c1_134 = arith.constant 1 : index
    %c0_135 = arith.constant 0 : index
    %c0_136 = arith.constant 0 : index
    %317 = vector.load %arg13[%c1_134, %c0_135, %c0_136] : memref<2x1x128xf32, #tpu.memory_space<vmem>>, vector<1x1x128xf32>
    %318 = vector.shape_cast %317 : vector<1x1x128xf32> to vector<1x128xf32>
    %cst_137 = arith.constant dense<0.000000e+00> : vector<8xf32>
    %319 = vector.multi_reduction <add>, %314, %cst_137 [1] : vector<8x128xf32> to vector<8xf32>
    %320 = vector.shape_cast %319 : vector<8xf32> to vector<8x1xf32>
    %cst_138 = arith.constant 1.280000e+02 : f32
    %321 = vector.broadcast %cst_138 : f32 to vector<8x1xf32>
    %322 = arith.divf %320, %321 : vector<8x1xf32>
    %323 = vector.broadcast %322 : vector<8x1xf32> to vector<8x128xf32>
    %324 = arith.subf %314, %323 : vector<8x128xf32>
    %325 = arith.mulf %324, %324 : vector<8x128xf32>
    %cst_139 = arith.constant dense<0.000000e+00> : vector<8xf32>
    %326 = vector.multi_reduction <add>, %325, %cst_139 [1] : vector<8x128xf32> to vector<8xf32>
    %327 = vector.shape_cast %326 : vector<8xf32> to vector<8x1xf32>
    %cst_140 = arith.constant 1.280000e+02 : f32
    %328 = vector.broadcast %cst_140 : f32 to vector<8x1xf32>
    %329 = arith.divf %327, %328 : vector<8x1xf32>
    %330 = vector.broadcast %322 : vector<8x1xf32> to vector<8x128xf32>
    %331 = arith.subf %314, %330 : vector<8x128xf32>
    %cst_141 = arith.constant 9.99999974E-6 : f32
    %332 = vector.broadcast %cst_141 : f32 to vector<8x1xf32>
    %333 = arith.addf %329, %332 : vector<8x1xf32>
    %334 = math.rsqrt %333 : vector<8x1xf32>
    %335 = vector.broadcast %334 : vector<8x1xf32> to vector<8x128xf32>
    %336 = arith.mulf %331, %335 : vector<8x128xf32>
    %337 = vector.broadcast %316 : vector<1x128xf32> to vector<8x128xf32>
    %338 = arith.mulf %336, %337 : vector<8x128xf32>
    %339 = vector.broadcast %318 : vector<1x128xf32> to vector<8x128xf32>
    %340 = arith.addf %338, %339 : vector<8x128xf32>
    %341 = arith.truncf %340 : vector<8x128xf32> to vector<8x128xbf16>
    %c0_142 = arith.constant 0 : index
    %c0_143 = arith.constant 0 : index
    %342 = vector.load %arg14[%c0_142, %c0_143] : memref<128x128xbf16, #tpu.memory_space<vmem>>, vector<128x128xbf16>
    %cst_144 = arith.constant dense<0.000000e+00> : vector<8x128xf32>
    %343 = tpu.matmul %341, %342, %cst_144 {dimension_numbers = #tpu.dot_dimension_numbers<[1], [0], [0], [1], [0, 0, 1, 1], [], []>} : vector<8x128xbf16>, vector<128x128xbf16>, vector<8x128xf32> -> vector<8x128xf32>
    %c0_145 = arith.constant 0 : index
    %c0_146 = arith.constant 0 : index
    %344 = vector.load %arg15[%c0_145, %c0_146] : memref<1x128xf32, #tpu.memory_space<vmem>>, vector<1x128xf32>
    %345 = vector.broadcast %344 : vector<1x128xf32> to vector<8x128xf32>
    %346 = arith.addf %343, %345 : vector<8x128xf32>
    %347 = vector.shape_cast %346 : vector<8x128xf32> to vector<1x8x128xf32>
    %c0_147 = arith.constant 0 : index
    %c0_148 = arith.constant 0 : index
    %c0_149 = arith.constant 0 : index
    %348 = vector.load %arg16[%c0_147, %c0_148, %c0_149] : memref<1x8x128xf32, #tpu.memory_space<vmem>>, vector<1x8x128xf32>
    tpu.vector_store %arg16[%c0_147, %c0_148, %c0_149], %347 {strides = array<i32>} : memref<1x8x128xf32, #tpu.memory_space<vmem>>, vector<1x8x128xf32>,
    return
  }
  func.func @transform_0(%arg0: i32) -> (i32, i32, i32) {
    %c0_i32 = arith.constant 0 : i32
    %c0_i32_0 = arith.constant 0 : i32
    %c0_i32_1 = arith.constant 0 : i32
    return %arg0, %c0_i32, %c0_i32_0 : i32, i32, i32
  }
  func.func @transform_1(%arg0: i32) -> (i32, i32, i32) {
    %c0_i32 = arith.constant 0 : i32
    %c0_i32_0 = arith.constant 0 : i32
    %c0_i32_1 = arith.constant 0 : i32
    %c0_i32_2 = arith.constant 0 : i32
    return %c0_i32, %c0_i32_0, %c0_i32_1 : i32, i32, i32
  }
  func.func @transform_2(%arg0: i32) -> (i32, i32, i32) {
    %c0_i32 = arith.constant 0 : i32
    %c0_i32_0 = arith.constant 0 : i32
    %c0_i32_1 = arith.constant 0 : i32
    %c0_i32_2 = arith.constant 0 : i32
    return %c0_i32, %c0_i32_0, %c0_i32_1 : i32, i32, i32
  }
  func.func @transform_3(%arg0: i32) -> (i32, i32, i32) {
    %c0_i32 = arith.constant 0 : i32
    %c0_i32_0 = arith.constant 0 : i32
    %c0_i32_1 = arith.constant 0 : i32
    %c0_i32_2 = arith.constant 0 : i32
    return %c0_i32, %c0_i32_0, %c0_i32_1 : i32, i32, i32
  }
  func.func @transform_4(%arg0: i32) -> (i32, i32, i32) {
    %c0_i32 = arith.constant 0 : i32
    %c0_i32_0 = arith.constant 0 : i32
    %c0_i32_1 = arith.constant 0 : i32
    %c0_i32_2 = arith.constant 0 : i32
    return %c0_i32, %c0_i32_0, %c0_i32_1 : i32, i32, i32
  }
  func.func @transform_5(%arg0: i32) -> (i32, i32, i32) {
    %c0_i32 = arith.constant 0 : i32
    %c0_i32_0 = arith.constant 0 : i32
    %c0_i32_1 = arith.constant 0 : i32
    %c0_i32_2 = arith.constant 0 : i32
    return %c0_i32, %c0_i32_0, %c0_i32_1 : i32, i32, i32
  }
  func.func @transform_6(%arg0: i32) -> (i32, i32, i32) {
    %c0_i32 = arith.constant 0 : i32
    %c0_i32_0 = arith.constant 0 : i32
    %c0_i32_1 = arith.constant 0 : i32
    %c0_i32_2 = arith.constant 0 : i32
    return %c0_i32, %c0_i32_0, %c0_i32_1 : i32, i32, i32
  }
  func.func @transform_7(%arg0: i32) -> (i32, i32, i32) {
    %c0_i32 = arith.constant 0 : i32
    %c0_i32_0 = arith.constant 0 : i32
    %c0_i32_1 = arith.constant 0 : i32
    %c0_i32_2 = arith.constant 0 : i32
    return %c0_i32, %c0_i32_0, %c0_i32_1 : i32, i32, i32
  }
  func.func @transform_8(%arg0: i32) -> (i32, i32, i32) {
    %c0_i32 = arith.constant 0 : i32
    %c0_i32_0 = arith.constant 0 : i32
    %c0_i32_1 = arith.constant 0 : i32
    %c0_i32_2 = arith.constant 0 : i32
    return %c0_i32, %c0_i32_0, %c0_i32_1 : i32, i32, i32
  }
  func.func @transform_9(%arg0: i32) -> (i32, i32, i32) {
    %c0_i32 = arith.constant 0 : i32
    %c0_i32_0 = arith.constant 0 : i32
    %c0_i32_1 = arith.constant 0 : i32
    %c0_i32_2 = arith.constant 0 : i32
    return %c0_i32, %c0_i32_0, %c0_i32_1 : i32, i32, i32
  }
  func.func @transform_10(%arg0: i32) -> (i32, i32, i32) {
    %c0_i32 = arith.constant 0 : i32
    %c0_i32_0 = arith.constant 0 : i32
    %c0_i32_1 = arith.constant 0 : i32
    %c0_i32_2 = arith.constant 0 : i32
    return %c0_i32, %c0_i32_0, %c0_i32_1 : i32, i32, i32
  }
  func.func @transform_11(%arg0: i32) -> (i32, i32, i32) {
    %c0_i32 = arith.constant 0 : i32
    %c0_i32_0 = arith.constant 0 : i32
    %c0_i32_1 = arith.constant 0 : i32
    %c0_i32_2 = arith.constant 0 : i32
    return %c0_i32, %c0_i32_0, %c0_i32_1 : i32, i32, i32
  }
  func.func @transform_12(%arg0: i32) -> (i32, i32, i32) {
    %c0_i32 = arith.constant 0 : i32
    %c0_i32_0 = arith.constant 0 : i32
    %c0_i32_1 = arith.constant 0 : i32
    %c0_i32_2 = arith.constant 0 : i32
    return %c0_i32, %c0_i32_0, %c0_i32_1 : i32, i32, i32
  }
  func.func @transform_13(%arg0: i32) -> (i32, i32) {
    %c0_i32 = arith.constant 0 : i32
    %c0_i32_0 = arith.constant 0 : i32
    %c0_i32_1 = arith.constant 0 : i32
    return %c0_i32, %c0_i32_0 : i32, i32
  }
  func.func @transform_14(%arg0: i32) -> (i32, i32) {
    %c0_i32 = arith.constant 0 : i32
    %c0_i32_0 = arith.constant 0 : i32
    %c0_i32_1 = arith.constant 0 : i32
    return %c0_i32, %c0_i32_0 : i32, i32
  }
  func.func @transform_15(%arg0: i32) -> (i32, i32, i32) {
    %c0_i32 = arith.constant 0 : i32
    %c0_i32_0 = arith.constant 0 : i32
    %c0_i32_1 = arith.constant 0 : i32
    return %arg0, %c0_i32, %c0_i32_0 : i32, i32, i32
  }
}

</mosaic_0001>

<llo_original>
// kernel: forward.1
$region0: #{forward.1}
  #allocation0 [shape = 'u32[]', space=smem, size = 0x4, offset = 0x4, fixed_abs, tag = 'smem constant byte address 0x4 - core index']
  #allocation1 [shape = 'u32[144,128]{1,0:T(1,128)}', space=vmem, size = 0x12000, scoped, tag = 'internal scratch']
  %s0 = inlined_call_operand.vmem [shape: f32[2,8,128], index: 0, kind: input, shape index: {}]
  %s1 = inlined_call_operand.hbm [shape: bf16[2,128,384], index: 1, kind: input, shape index: {}]
  %s2 = inlined_call_operand.vmem [shape: f32[2,1,384], index: 2, kind: input, shape index: {}]
  %s3 = inlined_call_operand.hbm [shape: bf16[2,128,128], index: 3, kind: input, shape index: {}]
  %s4 = inlined_call_operand.vmem [shape: f32[2,1,128], index: 4, kind: input, shape index: {}]
  %s5 = inlined_call_operand.vmem [shape: f32[2,1,128], index: 5, kind: input, shape index: {}]
  %s6 = inlined_call_operand.vmem [shape: f32[2,1,128], index: 6, kind: input, shape index: {}]
  %s7 = inlined_call_operand.vmem [shape: bf16[2,128,512], index: 7, kind: input, shape index: {}]
  %s8 = inlined_call_operand.vmem [shape: f32[2,1,512], index: 8, kind: input, shape index: {}]
  %s9 = inlined_call_operand.hbm [shape: bf16[2,512,128], index: 9, kind: input, shape index: {}]
  %s10 = inlined_call_operand.vmem [shape: f32[2,1,128], index: 10, kind: input, shape index: {}]
  %s11 = inlined_call_operand.vmem [shape: f32[2,1,128], index: 11, kind: input, shape index: {}]
  %s12 = inlined_call_operand.vmem [shape: f32[2,1,128], index: 12, kind: input, shape index: {}]
  %s13 = inlined_call_operand.vmem [shape: bf16[128,128], index: 13, kind: input, shape index: {}]
  %s14 = inlined_call_operand.vmem [shape: f32[1,128], index: 14, kind: input, shape index: {}]
  %s15 = inlined_call_operand.hbm [shape: f32[2,8,128], index: 15, kind: output, shape index: {}]
  %s16 = sld [smem:[#allocation0]]
  $region105: #{forward.1} parent=0
    _
  %s18 = ssub.s32 1, %s16
  %s19 = scalar_select 0, %s18, %s16
  $region1: #{forward.1} parent=0
    #allocation2 [shape = 'u8[196608]{0}', space=vmem, size = 0x30000, scoped, tag = 'input window, operand 1, single buffered']
    #allocation3 [shape = 's32[2]{0}', space=sflag, size = 0x8, scoped, tag = 'scoped memory for forward.1']
    #allocation4 [shape = 's32[2]{0}', space=sflag, size = 0x8, scoped, tag = 'scoped memory for forward.1']
    #allocation5 [shape = 'u8[65536]{0}', space=vmem, size = 0x10000, scoped, tag = 'input window, operand 3, single buffered']
    #allocation6 [shape = 's32[1]{0}', space=sflag, size = 0x4, scoped, tag = 'scoped memory for forward.1']
    #allocation7 [shape = 'u8[262144]{0}', space=vmem, size = 0x40000, scoped, tag = 'input window, operand 9, single buffered']
    #allocation8 [shape = 'u8[8192]{0}', space=vmem, size = 0x2000, scoped, tag = 'output window, operand 0']
    %20 = vsyncpa [#allocation3], 0
    %21 = vsyncpa [#allocation6], 0
    %22 = vsyncpa [#allocation4], 0
    %s23 = scalar_lea.sflag [#allocation4], 1
    %24 = vsyncpa %s23, 0
    loop: start=0, step=1, limit=4
    $region2: #{forward.1} parent=1 // loop_pre_header
      _
    $region3: #{forward.1} parent=1 // loop_header
      %s26 = sphi 0, %s30
      %p27 = scmp.ge.s32.totalorder %s26, 4
      %s36 = sphi 0, %s38
      %s39 = sphi 0, %s36
      %s40 = sphi 0, %s39
      %s56 = sphi 0, %s40
      %s60 = sphi 0, %s60
      %s62 = sphi 0, %s60
      %s63 = sphi 0, %s62
      %s77 = sphi 0, %s63
      %s81 = sphi 0, %s81
      %s83 = sphi 0, %s81
      %s84 = sphi 0, %s83
      %s98 = sphi 0, %s84
      %s102 = sphi 0, %s102
      %s104 = sphi 0, %s102
      %s105 = sphi 0, %s104
      %s119 = sphi 0, %s105
      %s123 = sphi 0, %s123
      %s125 = sphi 0, %s123
      %s126 = sphi 0, %s125
      %s140 = sphi 0, %s126
      %s144 = sphi 0, %s144
      %s146 = sphi 0, %s144
      %s147 = sphi 0, %s146
      %s161 = sphi 0, %s147
      %s165 = sphi 0, %s165
      %s167 = sphi 0, %s165
      %s168 = sphi 0, %s167
      %s182 = sphi 0, %s168
      %s186 = sphi 0, %s186
      %s188 = sphi 0, %s186
      %s189 = sphi 0, %s188
      %s203 = sphi 0, %s189
      %s207 = sphi 0, %s207
      %s209 = sphi 0, %s207
      %s210 = sphi 0, %s209
      %s224 = sphi 0, %s210
      %s228 = sphi 0, %s228
      %s230 = sphi 0, %s228
      %s231 = sphi 0, %s230
      %s245 = sphi 0, %s231
      %s249 = sphi 0, %s249
      %s251 = sphi 0, %s249
      %s252 = sphi 0, %s251
      %s266 = sphi 0, %s252
      %s270 = sphi 0, %s270
      %s272 = sphi 0, %s270
      %s273 = sphi 0, %s272
      %s287 = sphi 0, %s273
      %s291 = sphi 0, %s291
      %s293 = sphi 0, %s291
      %s294 = sphi 0, %s293
      %s308 = sphi 0, %s294
      %s312 = sphi 0, %s312
      %s314 = sphi 0, %s312
      %s315 = sphi 0, %s314
      %s329 = sphi 0, %s315
      %s333 = sphi 0, %s333
      %s335 = sphi 0, %s333
      %s336 = sphi 0, %s335
      %s350 = sphi 0, %s336
      %s356 = sphi 0, %s358
      %s359 = sphi 0, %s356
      %s360 = sphi 0, %s359
      %s376 = sphi 0, %s360
    $region4: #{forward.1} parent=1 // loop_header_branch
      %29 = sbr.rel (%p27) target = $region8
    $region5: #{forward.1} parent=1 // loop_body
      %s31 = ssub.s32 %s26, 1
      %s32 = ssub.s32 %s26, 2
      %s33 = sadd.s32 %s26, 1
      %s34 = ssub.s32 %s26, %s33
      %p35 = scmp.eq.s32.totalorder %s34, 0
      %s37 = sadd.s32 %s36, 1
      %s38 = scalar_select %p35, %s36, %s37
      %p41 = pneg %p35
      %p42 = scmp.eq.s32.totalorder %s26, 1
      %p43 = por %p41, %p42
      %p44 = scmp.ne.s32.totalorder %s36, %s39
      %p45 = scmp.eq.s32.totalorder %s26, 0
      %p46 = por %p44, %p45
      %p47 = scmp.ne.s32.totalorder %s36, %s39
      %p48 = scmp.eq.s32.totalorder %s31, 1
      %p49 = por %p47, %p48
      %p50 = scmp.ne.s32.totalorder %s39, %s40
      %p51 = scmp.eq.s32.totalorder %s31, 0
      %p52 = por %p50, %p51
      %p53 = scmp.ne.s32.totalorder %s39, %s40
      %p54 = scmp.eq.s32.totalorder %s32, 1
      %p55 = por %p53, %p54
      %p57 = scmp.ne.s32.totalorder %s40, %s56
      %p58 = scmp.eq.s32.totalorder %s32, 0
      %p59 = por %p57, %p58
      %s61 = sadd.s32 %s60, 1
      %p64 = scmp.eq.s32.totalorder %s26, 1
      %p65 = scmp.ne.s32.totalorder %s60, %s62
      %p66 = scmp.eq.s32.totalorder %s26, 0
      %p67 = por %p65, %p66
      %p68 = scmp.ne.s32.totalorder %s60, %s62
      %p69 = scmp.eq.s32.totalorder %s31, 1
      %p70 = por %p68, %p69
      %p71 = scmp.ne.s32.totalorder %s62, %s63
      %p72 = scmp.eq.s32.totalorder %s31, 0
      %p73 = por %p71, %p72
      %p74 = scmp.ne.s32.totalorder %s62, %s63
      %p75 = scmp.eq.s32.totalorder %s32, 1
      %p76 = por %p74, %p75
      %p78 = scmp.ne.s32.totalorder %s63, %s77
      %p79 = scmp.eq.s32.totalorder %s32, 0
      %p80 = por %p78, %p79
      %s82 = sadd.s32 %s81, 1
      %p85 = scmp.eq.s32.totalorder %s26, 1
      %p86 = scmp.ne.s32.totalorder %s81, %s83
      %p87 = scmp.eq.s32.totalorder %s26, 0
      %p88 = por %p86, %p87
      %p89 = scmp.ne.s32.totalorder %s81, %s83
      %p90 = scmp.eq.s32.totalorder %s31, 1
      %p91 = por %p89, %p90
      %p92 = scmp.ne.s32.totalorder %s83, %s84
      %p93 = scmp.eq.s32.totalorder %s31, 0
      %p94 = por %p92, %p93
      %p95 = scmp.ne.s32.totalorder %s83, %s84
      %p96 = scmp.eq.s32.totalorder %s32, 1
      %p97 = por %p95, %p96
      %p99 = scmp.ne.s32.totalorder %s84, %s98
      %p100 = scmp.eq.s32.totalorder %s32, 0
      %p101 = por %p99, %p100
      %s103 = sadd.s32 %s102, 1
      %p106 = scmp.eq.s32.totalorder %s26, 1
      %p107 = scmp.ne.s32.totalorder %s102, %s104
      %p108 = scmp.eq.s32.totalorder %s26, 0
      %p109 = por %p107, %p108
      %p110 = scmp.ne.s32.totalorder %s102, %s104
      %p111 = scmp.eq.s32.totalorder %s31, 1
      %p112 = por %p110, %p111
      %p113 = scmp.ne.s32.totalorder %s104, %s105
      %p114 = scmp.eq.s32.totalorder %s31, 0
      %p115 = por %p113, %p114
      %p116 = scmp.ne.s32.totalorder %s104, %s105
      %p117 = scmp.eq.s32.totalorder %s32, 1
      %p118 = por %p116, %p117
      %p120 = scmp.ne.s32.totalorder %s105, %s119
      %p121 = scmp.eq.s32.totalorder %s32, 0
      %p122 = por %p120, %p121
      %s124 = sadd.s32 %s123, 1
      %p127 = scmp.eq.s32.totalorder %s26, 1
      %p128 = scmp.ne.s32.totalorder %s123, %s125
      %p129 = scmp.eq.s32.totalorder %s26, 0
      %p130 = por %p128, %p129
      %p131 = scmp.ne.s32.totalorder %s123, %s125
      %p132 = scmp.eq.s32.totalorder %s31, 1
      %p133 = por %p131, %p132
      %p134 = scmp.ne.s32.totalorder %s125, %s126
      %p135 = scmp.eq.s32.totalorder %s31, 0
      %p136 = por %p134, %p135
      %p137 = scmp.ne.s32.totalorder %s125, %s126
      %p138 = scmp.eq.s32.totalorder %s32, 1
      %p139 = por %p137, %p138
      %p141 = scmp.ne.s32.totalorder %s126, %s140
      %p142 = scmp.eq.s32.totalorder %s32, 0
      %p143 = por %p141, %p142
      %s145 = sadd.s32 %s144, 1
      %p148 = scmp.eq.s32.totalorder %s26, 1
      %p149 = scmp.ne.s32.totalorder %s144, %s146
      %p150 = scmp.eq.s32.totalorder %s26, 0
      %p151 = por %p149, %p150
      %p152 = scmp.ne.s32.totalorder %s144, %s146
      %p153 = scmp.eq.s32.totalorder %s31, 1
      %p154 = por %p152, %p153
      %p155 = scmp.ne.s32.totalorder %s146, %s147
      %p156 = scmp.eq.s32.totalorder %s31, 0
      %p157 = por %p155, %p156
      %p158 = scmp.ne.s32.totalorder %s146, %s147
      %p159 = scmp.eq.s32.totalorder %s32, 1
      %p160 = por %p158, %p159
      %p162 = scmp.ne.s32.totalorder %s147, %s161
      %p163 = scmp.eq.s32.totalorder %s32, 0
      %p164 = por %p162, %p163
      %s166 = sadd.s32 %s165, 1
      %p169 = scmp.eq.s32.totalorder %s26, 1
      %p170 = scmp.ne.s32.totalorder %s165, %s167
      %p171 = scmp.eq.s32.totalorder %s26, 0
      %p172 = por %p170, %p171
      %p173 = scmp.ne.s32.totalorder %s165, %s167
      %p174 = scmp.eq.s32.totalorder %s31, 1
      %p175 = por %p173, %p174
      %p176 = scmp.ne.s32.totalorder %s167, %s168
      %p177 = scmp.eq.s32.totalorder %s31, 0
      %p178 = por %p176, %p177
      %p179 = scmp.ne.s32.totalorder %s167, %s168
      %p180 = scmp.eq.s32.totalorder %s32, 1
      %p181 = por %p179, %p180
      %p183 = scmp.ne.s32.totalorder %s168, %s182
      %p184 = scmp.eq.s32.totalorder %s32, 0
      %p185 = por %p183, %p184
      %s187 = sadd.s32 %s186, 1
      %p190 = scmp.eq.s32.totalorder %s26, 1
      %p191 = scmp.ne.s32.totalorder %s186, %s188
      %p192 = scmp.eq.s32.totalorder %s26, 0
      %p193 = por %p191, %p192
      %p194 = scmp.ne.s32.totalorder %s186, %s188
      %p195 = scmp.eq.s32.totalorder %s31, 1
      %p196 = por %p194, %p195
      %p197 = scmp.ne.s32.totalorder %s188, %s189
      %p198 = scmp.eq.s32.totalorder %s31, 0
      %p199 = por %p197, %p198
      %p200 = scmp.ne.s32.totalorder %s188, %s189
      %p201 = scmp.eq.s32.totalorder %s32, 1
      %p202 = por %p200, %p201
      %p204 = scmp.ne.s32.totalorder %s189, %s203
      %p205 = scmp.eq.s32.totalorder %s32, 0
      %p206 = por %p204, %p205
      %s208 = sadd.s32 %s207, 1
      %p211 = scmp.eq.s32.totalorder %s26, 1
      %p212 = scmp.ne.s32.totalorder %s207, %s209
      %p213 = scmp.eq.s32.totalorder %s26, 0
      %p214 = por %p212, %p213
      %p215 = scmp.ne.s32.totalorder %s207, %s209
      %p216 = scmp.eq.s32.totalorder %s31, 1
      %p217 = por %p215, %p216
      %p218 = scmp.ne.s32.totalorder %s209, %s210
      %p219 = scmp.eq.s32.totalorder %s31, 0
      %p220 = por %p218, %p219
      %p221 = scmp.ne.s32.totalorder %s209, %s210
      %p222 = scmp.eq.s32.totalorder %s32, 1
      %p223 = por %p221, %p222
      %p225 = scmp.ne.s32.totalorder %s210, %s224
      %p226 = scmp.eq.s32.totalorder %s32, 0
      %p227 = por %p225, %p226
      %s229 = sadd.s32 %s228, 1
      %p232 = scmp.eq.s32.totalorder %s26, 1
      %p233 = scmp.ne.s32.totalorder %s228, %s230
      %p234 = scmp.eq.s32.totalorder %s26, 0
      %p235 = por %p233, %p234
      %p236 = scmp.ne.s32.totalorder %s228, %s230
      %p237 = scmp.eq.s32.totalorder %s31, 1
      %p238 = por %p236, %p237
      %p239 = scmp.ne.s32.totalorder %s230, %s231
      %p240 = scmp.eq.s32.totalorder %s31, 0
      %p241 = por %p239, %p240
      %p242 = scmp.ne.s32.totalorder %s230, %s231
      %p243 = scmp.eq.s32.totalorder %s32, 1
      %p244 = por %p242, %p243
      %p246 = scmp.ne.s32.totalorder %s231, %s245
      %p247 = scmp.eq.s32.totalorder %s32, 0
      %p248 = por %p246, %p247
      %s250 = sadd.s32 %s249, 1
      %p253 = scmp.eq.s32.totalorder %s26, 1
      %p254 = scmp.ne.s32.totalorder %s249, %s251
      %p255 = scmp.eq.s32.totalorder %s26, 0
      %p256 = por %p254, %p255
      %p257 = scmp.ne.s32.totalorder %s249, %s251
      %p258 = scmp.eq.s32.totalorder %s31, 1
      %p259 = por %p257, %p258
      %p260 = scmp.ne.s32.totalorder %s251, %s252
      %p261 = scmp.eq.s32.totalorder %s31, 0
      %p262 = por %p260, %p261
      %p263 = scmp.ne.s32.totalorder %s251, %s252
      %p264 = scmp.eq.s32.totalorder %s32, 1
      %p265 = por %p263, %p264
      %p267 = scmp.ne.s32.totalorder %s252, %s266
      %p268 = scmp.eq.s32.totalorder %s32, 0
      %p269 = por %p267, %p268
      %s271 = sadd.s32 %s270, 1
      %p274 = scmp.eq.s32.totalorder %s26, 1
      %p275 = scmp.ne.s32.totalorder %s270, %s272
      %p276 = scmp.eq.s32.totalorder %s26, 0
      %p277 = por %p275, %p276
      %p278 = scmp.ne.s32.totalorder %s270, %s272
      %p279 = scmp.eq.s32.totalorder %s31, 1
      %p280 = por %p278, %p279
      %p281 = scmp.ne.s32.totalorder %s272, %s273
      %p282 = scmp.eq.s32.totalorder %s31, 0
      %p283 = por %p281, %p282
      %p284 = scmp.ne.s32.totalorder %s272, %s273
      %p285 = scmp.eq.s32.totalorder %s32, 1
      %p286 = por %p284, %p285
      %p288 = scmp.ne.s32.totalorder %s273, %s287
      %p289 = scmp.eq.s32.totalorder %s32, 0
      %p290 = por %p288, %p289
      %s292 = sadd.s32 %s291, 1
      %p295 = scmp.eq.s32.totalorder %s26, 1
      %p296 = scmp.ne.s32.totalorder %s291, %s293
      %p297 = scmp.eq.s32.totalorder %s26, 0
      %p298 = por %p296, %p297
      %p299 = scmp.ne.s32.totalorder %s291, %s293
      %p300 = scmp.eq.s32.totalorder %s31, 1
      %p301 = por %p299, %p300
      %p302 = scmp.ne.s32.totalorder %s293, %s294
      %p303 = scmp.eq.s32.totalorder %s31, 0
      %p304 = por %p302, %p303
      %p305 = scmp.ne.s32.totalorder %s293, %s294
      %p306 = scmp.eq.s32.totalorder %s32, 1
      %p307 = por %p305, %p306
      %p309 = scmp.ne.s32.totalorder %s294, %s308
      %p310 = scmp.eq.s32.totalorder %s32, 0
      %p311 = por %p309, %p310
      %s313 = sadd.s32 %s312, 1
      %p316 = scmp.eq.s32.totalorder %s26, 1
      %p317 = scmp.ne.s32.totalorder %s312, %s314
      %p318 = scmp.eq.s32.totalorder %s26, 0
      %p319 = por %p317, %p318
      %p320 = scmp.ne.s32.totalorder %s312, %s314
      %p321 = scmp.eq.s32.totalorder %s31, 1
      %p322 = por %p320, %p321
      %p323 = scmp.ne.s32.totalorder %s314, %s315
      %p324 = scmp.eq.s32.totalorder %s31, 0
      %p325 = por %p323, %p324
      %p326 = scmp.ne.s32.totalorder %s314, %s315
      %p327 = scmp.eq.s32.totalorder %s32, 1
      %p328 = por %p326, %p327
      %p330 = scmp.ne.s32.totalorder %s315, %s329
      %p331 = scmp.eq.s32.totalorder %s32, 0
      %p332 = por %p330, %p331
      %s334 = sadd.s32 %s333, 1
      %p337 = scmp.eq.s32.totalorder %s26, 1
      %p338 = scmp.ne.s32.totalorder %s333, %s335
      %p339 = scmp.eq.s32.totalorder %s26, 0
      %p340 = por %p338, %p339
      %p341 = scmp.ne.s32.totalorder %s333, %s335
      %p342 = scmp.eq.s32.totalorder %s31, 1
      %p343 = por %p341, %p342
      %p344 = scmp.ne.s32.totalorder %s335, %s336
      %p345 = scmp.eq.s32.totalorder %s31, 0
      %p346 = por %p344, %p345
      %p347 = scmp.ne.s32.totalorder %s335, %s336
      %p348 = scmp.eq.s32.totalorder %s32, 1
      %p349 = por %p347, %p348
      %p351 = scmp.ne.s32.totalorder %s336, %s350
      %p352 = scmp.eq.s32.totalorder %s32, 0
      %p353 = por %p351, %p352
      %s354 = ssub.s32 %s26, %s33
      %p355 = scmp.eq.s32.totalorder %s354, 0
      %s357 = sadd.s32 %s356, 1
      %s358 = scalar_select %p355, %s356, %s357
      %p361 = pneg %p355
      %p362 = scmp.eq.s32.totalorder %s26, 1
      %p363 = por %p361, %p362
      %p364 = scmp.ne.s32.totalorder %s356, %s359
      %p365 = scmp.eq.s32.totalorder %s26, 0
      %p366 = por %p364, %p365
      %p367 = scmp.ne.s32.totalorder %s356, %s359
      %p368 = scmp.eq.s32.totalorder %s31, 1
      %p369 = por %p367, %p368
      %p370 = scmp.ne.s32.totalorder %s359, %s360
      %p371 = scmp.eq.s32.totalorder %s31, 0
      %p372 = por %p370, %p371
      %p373 = scmp.ne.s32.totalorder %s359, %s360
      %p374 = scmp.eq.s32.totalorder %s32, 1
      %p375 = por %p373, %p374
      %p377 = scmp.ne.s32.totalorder %s360, %s376
      %p378 = scmp.eq.s32.totalorder %s32, 0
      %p379 = por %p377, %p378
      %p380 = scmp.le.s32.totalorder 1, %s26
      %p381 = scmp.lt.s32.totalorder %s26, 3
      %p382 = pnand %p380, %p381
      %p383 = pneg %p382
      // Predicated region
      $region9: #{forward.1} parent=5 // pred_check
        _
      $region10: #{forward.1} parent=5 // pred_check_branch
        %385 = sbr.rel (%p382) target = $region12
      $region11: #{forward.1} parent=5 // pred_region
        %s386 = ssub.s32 %s26, 1
        // Predicated region
        $region13: #{forward.1} parent=11 // pred_check
          %p387 = pneg %p73
        $region14: #{forward.1} parent=11 // pred_check_branch
          %389 = sbr.rel (%p387) target = $region16
        $region15: #{forward.1} parent=11 // pred_region
          %s391 = ssub.s32 6144, 6144
          %392 = vsyncadd [#allocation3], %s391
          %s393 = sshll.u32 [#allocation2], 4
          %s394 = int_to_ptr.vmem [resolvable:$true] %s393
          %399 = dma.hbm_to_vmem [thread:$0]  %s1, 6144, %s394, [#allocation3], 192, 192, 12
        $region16: #{forward.1} parent=11 // pred_fallthru
          _
        // Predicated region
        $region17: #{forward.1} parent=11 // pred_check
          %p400 = pneg %p94
        $region18: #{forward.1} parent=11 // pred_check_branch
          %402 = sbr.rel (%p400) target = $region20
        $region19: #{forward.1} parent=11 // pred_region
          _
        $region20: #{forward.1} parent=11 // pred_fallthru
          _
        // Predicated region
        $region21: #{forward.1} parent=11 // pred_check
          %p403 = pneg %p115
        $region22: #{forward.1} parent=11 // pred_check_branch
          %405 = sbr.rel (%p403) target = $region24
        $region23: #{forward.1} parent=11 // pred_region
          %s407 = ssub.s32 2048, 2048
          %408 = vsyncadd [#allocation6], %s407
          %s409 = sshll.u32 [#allocation5], 4
          %s410 = int_to_ptr.vmem [resolvable:$true] %s409
          %415 = dma.hbm_to_vmem [thread:$0]  %s3, 2048, %s410, [#allocation6], 64, 64, 4
        $region24: #{forward.1} parent=11 // pred_fallthru
          _
        // Predicated region
        $region25: #{forward.1} parent=11 // pred_check
          %p416 = pneg %p136
        $region26: #{forward.1} parent=11 // pred_check_branch
          %418 = sbr.rel (%p416) target = $region28
        $region27: #{forward.1} parent=11 // pred_region
          _
        $region28: #{forward.1} parent=11 // pred_fallthru
          _
        // Predicated region
        $region29: #{forward.1} parent=11 // pred_check
          %p419 = pneg %p157
        $region30: #{forward.1} parent=11 // pred_check_branch
          %421 = sbr.rel (%p419) target = $region32
        $region31: #{forward.1} parent=11 // pred_region
          _
        $region32: #{forward.1} parent=11 // pred_fallthru
          _
        // Predicated region
        $region33: #{forward.1} parent=11 // pred_check
          %p422 = pneg %p178
        $region34: #{forward.1} parent=11 // pred_check_branch
          %424 = sbr.rel (%p422) target = $region36
        $region35: #{forward.1} parent=11 // pred_region
          _
        $region36: #{forward.1} parent=11 // pred_fallthru
          _
        // Predicated region
        $region37: #{forward.1} parent=11 // pred_check
          %p425 = pneg %p199
        $region38: #{forward.1} parent=11 // pred_check_branch
          %427 = sbr.rel (%p425) target = $region40
        $region39: #{forward.1} parent=11 // pred_region
          _
        $region40: #{forward.1} parent=11 // pred_fallthru
          _
        // Predicated region
        $region41: #{forward.1} parent=11 // pred_check
          %p428 = pneg %p220
        $region42: #{forward.1} parent=11 // pred_check_branch
          %430 = sbr.rel (%p428) target = $region44
        $region43: #{forward.1} parent=11 // pred_region
          _
        $region44: #{forward.1} parent=11 // pred_fallthru
          _
        // Predicated region
        $region45: #{forward.1} parent=11 // pred_check
          %p431 = pneg %p241
        $region46: #{forward.1} parent=11 // pred_check_branch
          %433 = sbr.rel (%p431) target = $region48
        $region47: #{forward.1} parent=11 // pred_region
          %s435 = ssub.s32 8192, 8192
          %436 = vsyncadd [#allocation6], %s435
          %s437 = sshll.u32 [#allocation7], 4
          %s438 = int_to_ptr.vmem [resolvable:$true] %s437
          %443 = dma.hbm_to_vmem [thread:$0]  %s9, 8192, %s438, [#allocation6], 64, 64, 4
        $region48: #{forward.1} parent=11 // pred_fallthru
          _
        // Predicated region
        $region49: #{forward.1} parent=11 // pred_check
          %p444 = pneg %p262
        $region50: #{forward.1} parent=11 // pred_check_branch
          %446 = sbr.rel (%p444) target = $region52
        $region51: #{forward.1} parent=11 // pred_region
          _
        $region52: #{forward.1} parent=11 // pred_fallthru
          _
        // Predicated region
        $region53: #{forward.1} parent=11 // pred_check
          %p447 = pneg %p283
        $region54: #{forward.1} parent=11 // pred_check_branch
          %449 = sbr.rel (%p447) target = $region56
        $region55: #{forward.1} parent=11 // pred_region
          _
        $region56: #{forward.1} parent=11 // pred_fallthru
          _
        // Predicated region
        $region57: #{forward.1} parent=11 // pred_check
          %p450 = pneg %p304
        $region58: #{forward.1} parent=11 // pred_check_branch
          %452 = sbr.rel (%p450) target = $region60
        $region59: #{forward.1} parent=11 // pred_region
          _
        $region60: #{forward.1} parent=11 // pred_fallthru
          _
        // Predicated region
        $region61: #{forward.1} parent=11 // pred_check
          %p453 = pneg %p325
        $region62: #{forward.1} parent=11 // pred_check_branch
          %455 = sbr.rel (%p453) target = $region64
        $region63: #{forward.1} parent=11 // pred_region
          _
        $region64: #{forward.1} parent=11 // pred_fallthru
          _
        // Predicated region
        $region65: #{forward.1} parent=11 // pred_check
          %p456 = pneg %p346
        $region66: #{forward.1} parent=11 // pred_check_branch
          %458 = sbr.rel (%p456) target = $region68
        $region67: #{forward.1} parent=11 // pred_region
          _
        $region68: #{forward.1} parent=11 // pred_fallthru
          _
      $region12: #{forward.1} parent=5 // pred_fallthru
        _
      %p459 = scmp.lt.s32.totalorder %s26, 2
      // Predicated region
      $region69: #{forward.1} parent=5 // pred_check
        %p460 = pneg %p459
      $region70: #{forward.1} parent=5 // pred_check_branch
        %462 = sbr.rel (%p460) target = $region72
      $region71: #{forward.1} parent=5 // pred_region
        // Predicated region
        $region73: #{forward.1} parent=71 // pred_check
          %p463 = pneg %p46
        $region74: #{forward.1} parent=71 // pred_check_branch
          %465 = sbr.rel (%p463) target = $region76
        $region75: #{forward.1} parent=71 // pred_region
          %p466 = scmp.lt.s32.totalorder %s26, 1
          %s467 = scalar_select %p466, %s26, 1
          %s468 = smul.addr %s467, 8
          %s469 = scalar_lea.vmem %s0, %s468
        $region76: #{forward.1} parent=71 // pred_fallthru
          _
      $region72: #{forward.1} parent=5 // pred_fallthru
        _
      %p470 = scmp.le.s32.totalorder 1, %s26
      %p471 = scmp.lt.s32.totalorder %s26, 3
      %p472 = pnand %p470, %p471
      %p473 = pneg %p472
      // Predicated region
      $region77: #{forward.1} parent=5 // pred_check
        _
      $region78: #{forward.1} parent=5 // pred_check_branch
        %475 = sbr.rel (%p472) target = $region80
      $region79: #{forward.1} parent=5 // pred_region
        %s476 = ssub.s32 %s26, 1
        // Predicated region
        $region81: #{forward.1} parent=79 // pred_check
          %p477 = pneg %p73
        $region82: #{forward.1} parent=79 // pred_check_branch
          %479 = sbr.rel (%p477) target = $region84
        $region83: #{forward.1} parent=79 // pred_region
          %480 = dma.done [#allocation3], 6144
        $region84: #{forward.1} parent=79 // pred_fallthru
          _
        // Predicated region
        $region85: #{forward.1} parent=79 // pred_check
          %p481 = pneg %p115
        $region86: #{forward.1} parent=79 // pred_check_branch
          %483 = sbr.rel (%p481) target = $region88
        $region87: #{forward.1} parent=79 // pred_region
          %484 = dma.done [#allocation6], 2048
        $region88: #{forward.1} parent=79 // pred_fallthru
          _
        // Predicated region
        $region89: #{forward.1} parent=79 // pred_check
          %p485 = pneg %p241
        $region90: #{forward.1} parent=79 // pred_check_branch
          %487 = sbr.rel (%p485) target = $region92
        $region91: #{forward.1} parent=79 // pred_region
          %488 = dma.done [#allocation6], 8192
        $region92: #{forward.1} parent=79 // pred_fallthru
          _
        %p489 = scmp.lt.s32.totalorder %s31, 1
        %s490 = scalar_select %p489, %s31, 1
        %s491 = smul.addr %s490, 8
        %s492 = scalar_lea.vmem %s0, %s491
        %p493 = pneg %p52
        %p494 = pneg %p49
        %p495 = pneg %p73
        %p496 = pneg %p70
        %p497 = pneg %p94
        %p498 = pneg %p91
        %p499 = pneg %p115
        %p500 = pneg %p112
        %p501 = pneg %p136
        %p502 = pneg %p133
        %p503 = pneg %p157
        %p504 = pneg %p154
        %p505 = pneg %p178
        %p506 = pneg %p175
        %p507 = pneg %p199
        %p508 = pneg %p196
        %p509 = pneg %p220
        %p510 = pneg %p217
        %p511 = pneg %p241
        %p512 = pneg %p238
        %p513 = pneg %p262
        %p514 = pneg %p259
        %p515 = pneg %p283
        %p516 = pneg %p280
        %p517 = pneg %p304
        %p518 = pneg %p301
        %p519 = pneg %p325
        %p520 = pneg %p322
        %p521 = pneg %p346
        %p522 = pneg %p343
        %p523 = pneg %p372
        %p524 = pneg %p369
        %s525 = sand.u32 %s359, 1
        %s526 = scalar_lea.sflag [#allocation4], %s525
        %s527 = sand.u32 %s359, 1
        %s528 = smul.addr %s527, 8
        %s529 = scalar_lea.vmem [#allocation8], %s528
        %p530 = scmp.lt.s32.totalorder %s31, 1
        %s531 = scalar_select %p530, %s31, 1
        %s532 = smul.addr %s531, 8
        %s533 = scalar_lea.vmem %s0, %s532
        %v535 = vld [vmem:[%s533] sm:$0xff]
        %v536 = vlaneseq
        %v537 = vshrl.u32 %v536, 7
        %v538 = vlaneseq
        %v539 = vand.u32 %v538, 127
        %vm540 = vcmp.ge.s32.totalorder %v537, %v539
        %v541 = vpack.c.bf16 %v535, %v535
        %v542 = vld [vmem:[#allocation2] sm:$0xff]
        %v543 = vld [vmem:[#allocation2 + $0x8] sm:$0xf]
        %v544 = vld [vmem:[#allocation2 + $0xc] sm:$0xff]
        %v545 = vld [vmem:[#allocation2 + $0x14] sm:$0xf]
        %v546 = vld [vmem:[#allocation2 + $0x18] sm:$0xff]
        %v547 = vld [vmem:[#allocation2 + $0x20] sm:$0xf]
        %v548 = vld [vmem:[#allocation2 + $0x24] sm:$0xff]
        %v549 = vld [vmem:[#allocation2 + $0x2c] sm:$0xf]
        %v550 = vld [vmem:[#allocation2 + $0x30] sm:$0xff]
        %v551 = vld [vmem:[#allocation2 + $0x38] sm:$0xf]
        %v552 = vld [vmem:[#allocation2 + $0x3c] sm:$0xff]
        %v553 = vld [vmem:[#allocation2 + $0x44] sm:$0xf]
        %v554 = vld [vmem:[#allocation2 + $0x48] sm:$0xff]
        %v555 = vld [vmem:[#allocation2 + $0x50] sm:$0xf]
        %v556 = vld [vmem:[#allocation2 + $0x54] sm:$0xff]
        %v557 = vld [vmem:[#allocation2 + $0x5c] sm:$0xf]
        %v558 = vld [vmem:[#allocation2 + $0x60] sm:$0xff]
        %v559 = vld [vmem:[#allocation2 + $0x68] sm:$0xf]
        %v560 = vld [vmem:[#allocation2 + $0x6c] sm:$0xff]
        %v561 = vld [vmem:[#allocation2 + $0x74] sm:$0xf]
        %v562 = vld [vmem:[#allocation2 + $0x78] sm:$0xff]
        %v563 = vld [vmem:[#allocation2 + $0x80] sm:$0xf]
        %v564 = vld [vmem:[#allocation2 + $0x84] sm:$0xff]
        %v565 = vld [vmem:[#allocation2 + $0x8c] sm:$0xf]
        %v566 = vld [vmem:[#allocation2 + $0x90] sm:$0xff]
        %v567 = vld [vmem:[#allocation2 + $0x98] sm:$0xf]
        %v568 = vld [vmem:[#allocation2 + $0x9c] sm:$0xff]
        %v569 = vld [vmem:[#allocation2 + $0xa4] sm:$0xf]
        %v570 = vld [vmem:[#allocation2 + $0xa8] sm:$0xff]
        %v571 = vld [vmem:[#allocation2 + $0xb0] sm:$0xf]
        %v572 = vld [vmem:[#allocation2 + $0xb4] sm:$0xff]
        %v573 = vld [vmem:[#allocation2 + $0xbc] sm:$0xf]
        %v574 = vld [vmem:[%s2] sm:$0x7]
        %v576 = vlaneseq
        %v577 = vshrl.u32 %v576, 7
        %v578 = vsub.s32 0, %v577
        %v579 = vrot.slane %v574, %v578
        %v580 = vlaneseq
        %v581 = vshrl.u32 %v580, 7
        %v582 = vsub.s32 1, %v581
        %v583 = vrot.slane %v574, %v582
        %v584 = vlaneseq
        %v585 = vshrl.u32 %v584, 7
        %v586 = vsub.s32 2, %v585
        %v587 = vrot.slane %v574, %v586
        %v623 = vunpack.c.l.b16 %v542
        %v624 = vunpack.c.h.b16 %v542
        %v625 = vunpack.c.l.b16 %v543
        %v626 = vunpack.c.l.b16 %v544
        %v627 = vunpack.c.h.b16 %v544
        %v628 = vunpack.c.l.b16 %v545
        %v629 = vunpack.c.l.b16 %v546
        %v630 = vunpack.c.h.b16 %v546
        %v631 = vunpack.c.l.b16 %v547
        %v632 = vunpack.c.l.b16 %v548
        %v633 = vunpack.c.h.b16 %v548
        %v634 = vunpack.c.l.b16 %v549
        %v635 = vunpack.c.l.b16 %v550
        %v636 = vunpack.c.h.b16 %v550
        %v637 = vunpack.c.l.b16 %v551
        %v638 = vunpack.c.l.b16 %v552
        %v639 = vunpack.c.h.b16 %v552
        %v640 = vunpack.c.l.b16 %v553
        %v641 = vunpack.c.l.b16 %v554
        %v642 = vunpack.c.h.b16 %v554
        %v643 = vunpack.c.l.b16 %v555
        %v644 = vunpack.c.l.b16 %v556
        %v645 = vunpack.c.h.b16 %v556
        %v646 = vunpack.c.l.b16 %v557
        %v647 = vunpack.c.l.b16 %v558
        %v648 = vunpack.c.h.b16 %v558
        %v649 = vunpack.c.l.b16 %v559
        %v650 = vunpack.c.l.b16 %v560
        %v651 = vunpack.c.h.b16 %v560
        %v652 = vunpack.c.l.b16 %v561
        %v653 = vunpack.c.l.b16 %v562
        %v654 = vunpack.c.h.b16 %v562
        %v655 = vunpack.c.l.b16 %v563
        %v656 = vunpack.c.l.b16 %v564
        %v657 = vunpack.c.h.b16 %v564
        %v658 = vunpack.c.l.b16 %v565
        %v659 = vunpack.c.l.b16 %v566
        %v660 = vunpack.c.h.b16 %v566
        %v661 = vunpack.c.l.b16 %v567
        %v662 = vunpack.c.l.b16 %v568
        %v663 = vunpack.c.h.b16 %v568
        %v664 = vunpack.c.l.b16 %v569
        %v665 = vunpack.c.l.b16 %v570
        %v666 = vunpack.c.h.b16 %v570
        %v667 = vunpack.c.l.b16 %v571
        %v668 = vunpack.c.l.b16 %v572
        %v669 = vunpack.c.h.b16 %v572
        %v670 = vunpack.c.l.b16 %v573
        %v671 = vpack.c.b16 %v626, %v623
        %v672 = vpack.c.b16 %v627, %v624
        %v673 = vpack.c.b16 %v628, %v625
        %v674 = vpack.c.b16 %v632, %v629
        %v675 = vpack.c.b16 %v633, %v630
        %v676 = vpack.c.b16 %v634, %v631
        %v677 = vpack.c.b16 %v638, %v635
        %v678 = vpack.c.b16 %v639, %v636
        %v679 = vpack.c.b16 %v640, %v637
        %v680 = vpack.c.b16 %v644, %v641
        %v681 = vpack.c.b16 %v645, %v642
        %v682 = vpack.c.b16 %v646, %v643
        %v683 = vpack.c.b16 %v650, %v647
        %v684 = vpack.c.b16 %v651, %v648
        %v685 = vpack.c.b16 %v652, %v649
        %v686 = vpack.c.b16 %v656, %v653
        %v687 = vpack.c.b16 %v657, %v654
        %v688 = vpack.c.b16 %v658, %v655
        %v689 = vpack.c.b16 %v662, %v659
        %v690 = vpack.c.b16 %v663, %v660
        %v691 = vpack.c.b16 %v664, %v661
        %v692 = vpack.c.b16 %v668, %v665
        %v693 = vpack.c.b16 %v669, %v666
        %v694 = vpack.c.b16 %v670, %v667
        %719 = vmatprep.subr.bf16.mxu0 %v672
        %720 = vmatpush1.bf16.msra.mxu0 %v671
        %721 = vmatprep.subr.bf16.mxu0 %v675
        %722 = vmatpush1.bf16.msra.mxu0 %v674
        %723 = vmatprep.subr.bf16.mxu0 %v678
        %724 = vmatpush1.bf16.msra.mxu0 %v677
        %725 = vmatprep.subr.bf16.mxu0 %v681
        %726 = vmatpush1.bf16.msra.mxu0 %v680
        %727 = vmatprep.subr.bf16.mxu0 %v684
        %728 = vmatpush1.bf16.msra.mxu0 %v683
        %729 = vmatprep.subr.bf16.mxu0 %v687
        %730 = vmatpush1.bf16.msra.mxu0 %v686
        %731 = vmatprep.subr.bf16.mxu0 %v690
        %732 = vmatpush1.bf16.msra.mxu0 %v689
        %733 = vmatprep.subr.bf16.mxu0 %v693
        %734 = vmatpush1.bf16.msra.mxu0 %v692
        %735 = vmatprep.subr.bf16.mxu0 0
        %736 = vmatpush1.bf16.msra.mxu0 0
        %737 = vmatprep.subr.bf16.mxu0 0
        %738 = vmatpush1.bf16.msra.mxu0 0
        %739 = vmatprep.subr.bf16.mxu0 0
        %740 = vmatpush1.bf16.msra.mxu0 0
        %741 = vmatprep.subr.bf16.mxu0 0
        %742 = vmatpush1.bf16.msra.mxu0 0
        %743 = vmatprep.subr.bf16.mxu0 0
        %744 = vmatpush1.bf16.msra.mxu0 0
        %745 = vmatprep.subr.bf16.mxu0 0
        %746 = vmatpush1.bf16.msra.mxu0 0
        %747 = vmatprep.subr.bf16.mxu0 0
        %748 = vmatpush1.bf16.msra.mxu0 0
        %749 = vmatprep.subr.bf16.mxu0 0
        %750 = vmatpush1.bf16.msra.mxu0 0
        %751 = vmatprep.mubr.bf16.mxu0 0
        %752 = vmatmul.mubr.bf16.gmra.mrb[0].mxu0 %v541
        %v753 = vpop.f32.mrb[0].mxu0
        %v754 = vadd.f32 %v579, %v753
        %v755 = vpop.f32.mrb[0].mxu0
        %v756 = vadd.f32 %v583, %v755
        %v757 = vpop.f32.mrb[0].mxu0
        %v758 = vpop.f32.mrb[0].mxu0
        %759 = vdwg.mxu0
        %760 = vmatprep.subr.bf16.mxu0 0
        %761 = vmatpush1.bf16.msra.mxu0 %v673
        %762 = vmatprep.subr.bf16.mxu0 0
        %763 = vmatpush1.bf16.msra.mxu0 %v676
        %764 = vmatprep.subr.bf16.mxu0 0
        %765 = vmatpush1.bf16.msra.mxu0 %v679
        %766 = vmatprep.subr.bf16.mxu0 0
        %767 = vmatpush1.bf16.msra.mxu0 %v682
        %768 = vmatprep.subr.bf16.mxu0 0
        %769 = vmatpush1.bf16.msra.mxu0 %v685
        %770 = vmatprep.subr.bf16.mxu0 0
        %771 = vmatpush1.bf16.msra.mxu0 %v688
        %772 = vmatprep.subr.bf16.mxu0 0
        %773 = vmatpush1.bf16.msra.mxu0 %v691
        %774 = vmatprep.subr.bf16.mxu0 0
        %775 = vmatpush1.bf16.msra.mxu0 %v694
        %776 = vmatprep.subr.bf16.mxu0 0
        %777 = vmatpush1.bf16.msra.mxu0 0
        %778 = vmatprep.subr.bf16.mxu0 0
        %779 = vmatpush1.bf16.msra.mxu0 0
        %780 = vmatprep.subr.bf16.mxu0 0
        %781 = vmatpush1.bf16.msra.mxu0 0
        %782 = vmatprep.subr.bf16.mxu0 0
        %783 = vmatpush1.bf16.msra.mxu0 0
        %784 = vmatprep.subr.bf16.mxu0 0
        %785 = vmatpush1.bf16.msra.mxu0 0
        %786 = vmatprep.subr.bf16.mxu0 0
        %787 = vmatpush1.bf16.msra.mxu0 0
        %788 = vmatprep.subr.bf16.mxu0 0
        %789 = vmatpush1.bf16.msra.mxu0 0
        %790 = vmatprep.subr.bf16.mxu0 0
        %791 = vmatpush1.bf16.msra.mxu0 0
        %792 = vmatprep.mubr.bf16.mxu0 0
        %793 = vmatmul.mubr.bf16.gmra.mrb[0].mxu0 %v541
        %v794 = vpop.f32.mrb[0].mxu0
        %v795 = vadd.f32 %v587, %v794
        %v796 = vpop.f32.mrb[0].mxu0
        %v797 = vpop.f32.mrb[0].mxu0
        %v798 = vpop.f32.mrb[0].mxu0
        %799 = vdwg.mxu0
        %vm800 = vcmask 261120
        %v802 = vsel %vm800, %v754, 0
        %v805 = vsel %vm800, %v756, 0
        %807 = vmatprep.subr.mxu0 0.0
        %808 = vmatpush1.xpose.msra.mxu0 %v805
        %809 = vmatprep.subr.mxu0 0.0
        %810 = vmatpush1.xpose.msra.mxu0 0.0
        %811 = vmatprep.subr.mxu0 0.0
        %812 = vmatpush1.xpose.msra.mxu0 0.0
        %813 = vmatprep.subr.mxu0 0.0
        %814 = vmatpush1.xpose.msra.mxu0 0.0
        %815 = vmatprep.subr.mxu0 0.0
        %816 = vmatpush1.xpose.msra.mxu0 0.0
        %817 = vmatprep.subr.mxu0 0.0
        %818 = vmatpush1.xpose.msra.mxu0 0.0
        %819 = vmatprep.subr.mxu0 0.0
        %820 = vmatpush1.xpose.msra.mxu0 0.0
        %821 = vmatprep.subr.mxu0 0.0
        %822 = vmatpush1.xpose.msra.mxu0 0.0
        %823 = vmatprep.subr.mxu0 0.0
        %824 = vmatpush1.xpose.msra.mxu0 0.0
        %825 = vmatprep.subr.mxu0 0.0
        %826 = vmatpush1.xpose.msra.mxu0 0.0
        %827 = vmatprep.subr.mxu0 0.0
        %828 = vmatpush1.xpose.msra.mxu0 0.0
        %829 = vmatprep.subr.mxu0 0.0
        %830 = vmatpush1.xpose.msra.mxu0 0.0
        %831 = vmatprep.subr.mxu0 0.0
        %832 = vmatpush1.xpose.msra.mxu0 0.0
        %833 = vmatprep.subr.mxu0 0.0
        %834 = vmatpush1.xpose.msra.mxu0 0.0
        %835 = vmatprep.subr.mxu0 0.0
        %836 = vmatpush1.xpose.msra.mxu0 0.0
        %837 = vmatprep.subr.mxu0 0.0
        %838 = vmatpush1.xpose.msra.mxu0 0.0
        %839 = vmatprep.subr.mxu0 0.0
        %840 = vmatpush1.xpose.msra.mxu0 0.0
        %841 = vmatprep.subr.mxu0 0.0
        %842 = vmatpush1.xpose.msra.mxu0 0.0
        %843 = vmatprep.subr.mxu0 0.0
        %844 = vmatpush1.xpose.msra.mxu0 0.0
        %845 = vmatprep.subr.mxu0 0.0
        %846 = vmatpush1.xpose.msra.mxu0 0.0
        %847 = vmatprep.subr.mxu0 0.0
        %848 = vmatpush1.xpose.msra.mxu0 0.0
        %849 = vmatprep.subr.mxu0 0.0
        %850 = vmatpush1.xpose.msra.mxu0 0.0
        %851 = vmatprep.subr.mxu0 0.0
        %852 = vmatpush1.xpose.msra.mxu0 0.0
        %853 = vmatprep.subr.mxu0 0.0
        %854 = vmatpush1.xpose.msra.mxu0 0.0
        %855 = vmatprep.subr.mxu0 0.0
        %856 = vmatpush1.xpose.msra.mxu0 0.0
        %857 = vmatprep.subr.mxu0 0.0
        %858 = vmatpush1.xpose.msra.mxu0 0.0
        %859 = vmatprep.subr.mxu0 0.0
        %860 = vmatpush1.xpose.msra.mxu0 0.0
        %861 = vmatprep.subr.mxu0 0.0
        %862 = vmatpush1.xpose.msra.mxu0 0.0
        %863 = vmatprep.subr.mxu0 0.0
        %864 = vmatpush1.xpose.msra.mxu0 0.0
        %865 = vmatprep.subr.mxu0 0.0
        %866 = vmatpush1.xpose.msra.mxu0 0.0
        %867 = vmatprep.subr.mxu0 0.0
        %868 = vmatpush1.xpose.msra.mxu0 0.0
        %869 = vmatprep.subr.mxu0 0.0
        %870 = vmatpush1.xpose.msra.mxu0 0.0
        %871 = vmatprep.mubr.f32.mxu0 0.0
        %872 = vmatmul.mubr.f32.gmra.mrb[0].mxu0 %v802
        %v873 = vpop.f32.mrb[0].mxu0
        %v874 = vadd.f32 0.0, %v873
        %v875 = vpop.f32.mrb[0].mxu0
        %876 = vdwg.mxu0
        %v877 = vsel %vm540, %v874, -1e+30
        %vm878 = vcmask 64512
        %v879 = vsel %vm878, %v877, -inf
        %880 = vmax.xlane.f32.xlu0 %v879
        %v881 = vpop.xlane.xlu0 %880
        %v882 = vsub.f32 %v877, %v881
        %v883 = vmul.f32 %v882, 1.442695
        %v884 = vpow.pop %v883
        %v885 = vsel %vm878, %v884, 0.0
        %886 = vadd.xlane.f32.xlu0 %v885
        %v887 = vpop.xlane.xlu0 %886
        %v888 = vrcp.pop %v887
        %v889 = vmul.f32 %v884, %v888
        %v890 = vpack.c.bf16 %v889, %v889
        %v891 = vpack.c.bf16 %v795, %v795
        %v893 = vsel %vm878, %v890, 0
        %vm895 = vcmask 1043456
        %v897 = vsel %vm895, %v891, 0
        %899 = vmatprep.subr.bf16.mxu0 0
        %900 = vmatpush1.bf16.msra.mxu0 %v897
        %901 = vmatprep.subr.bf16.mxu0 0
        %902 = vmatpush1.bf16.msra.mxu0 0
        %903 = vmatprep.subr.bf16.mxu0 0
        %904 = vmatpush1.bf16.msra.mxu0 0
        %905 = vmatprep.subr.bf16.mxu0 0
        %906 = vmatpush1.bf16.msra.mxu0 0
        %907 = vmatprep.subr.bf16.mxu0 0
        %908 = vmatpush1.bf16.msra.mxu0 0
        %909 = vmatprep.subr.bf16.mxu0 0
        %910 = vmatpush1.bf16.msra.mxu0 0
        %911 = vmatprep.subr.bf16.mxu0 0
        %912 = vmatpush1.bf16.msra.mxu0 0
        %913 = vmatprep.subr.bf16.mxu0 0
        %914 = vmatpush1.bf16.msra.mxu0 0
        %915 = vmatprep.subr.bf16.mxu0 0
        %916 = vmatpush1.bf16.msra.mxu0 0
        %917 = vmatprep.subr.bf16.mxu0 0
        %918 = vmatpush1.bf16.msra.mxu0 0
        %919 = vmatprep.subr.bf16.mxu0 0
        %920 = vmatpush1.bf16.msra.mxu0 0
        %921 = vmatprep.subr.bf16.mxu0 0
        %922 = vmatpush1.bf16.msra.mxu0 0
        %923 = vmatprep.subr.bf16.mxu0 0
        %924 = vmatpush1.bf16.msra.mxu0 0
        %925 = vmatprep.subr.bf16.mxu0 0
        %926 = vmatpush1.bf16.msra.mxu0 0
        %927 = vmatprep.subr.bf16.mxu0 0
        %928 = vmatpush1.bf16.msra.mxu0 0
        %929 = vmatprep.subr.bf16.mxu0 0
        %930 = vmatpush1.bf16.msra.mxu0 0
        %931 = vmatprep.mubr.bf16.mxu0 0
        %932 = vmatmul.mubr.bf16.gmra.mrb[0].mxu0 %v893
        %v933 = vpop.f32.mrb[0].mxu0
        %v934 = vadd.f32 0.0, %v933
        %v935 = vpop.f32.mrb[0].mxu0
        %v936 = vpop.f32.mrb[0].mxu0
        %v937 = vpop.f32.mrb[0].mxu0
        %938 = vdwg.mxu0
        %939 = vrot.lane.b32.xlu0 %v754, 96
        %v940 = vpop.permute.xlu0 %939
        %941 = vrot.lane.b32.xlu0 %v756, 96
        %v942 = vpop.permute.xlu0 %941
        %v943 = vsel %vm800, %v940, 0
        %v945 = vsel %vm800, %v942, 0
        %947 = vmatprep.subr.mxu0 0.0
        %948 = vmatpush1.xpose.msra.mxu0 %v945
        %949 = vmatprep.subr.mxu0 0.0
        %950 = vmatpush1.xpose.msra.mxu0 0.0
        %951 = vmatprep.subr.mxu0 0.0
        %952 = vmatpush1.xpose.msra.mxu0 0.0
        %953 = vmatprep.subr.mxu0 0.0
        %954 = vmatpush1.xpose.msra.mxu0 0.0
        %955 = vmatprep.subr.mxu0 0.0
        %956 = vmatpush1.xpose.msra.mxu0 0.0
        %957 = vmatprep.subr.mxu0 0.0
        %958 = vmatpush1.xpose.msra.mxu0 0.0
        %959 = vmatprep.subr.mxu0 0.0
        %960 = vmatpush1.xpose.msra.mxu0 0.0
        %961 = vmatprep.subr.mxu0 0.0
        %962 = vmatpush1.xpose.msra.mxu0 0.0
        %963 = vmatprep.subr.mxu0 0.0
        %964 = vmatpush1.xpose.msra.mxu0 0.0
        %965 = vmatprep.subr.mxu0 0.0
        %966 = vmatpush1.xpose.msra.mxu0 0.0
        %967 = vmatprep.subr.mxu0 0.0
        %968 = vmatpush1.xpose.msra.mxu0 0.0
        %969 = vmatprep.subr.mxu0 0.0
        %970 = vmatpush1.xpose.msra.mxu0 0.0
        %971 = vmatprep.subr.mxu0 0.0
        %972 = vmatpush1.xpose.msra.mxu0 0.0
        %973 = vmatprep.subr.mxu0 0.0
        %974 = vmatpush1.xpose.msra.mxu0 0.0
        %975 = vmatprep.subr.mxu0 0.0
        %976 = vmatpush1.xpose.msra.mxu0 0.0
        %977 = vmatprep.subr.mxu0 0.0
        %978 = vmatpush1.xpose.msra.mxu0 0.0
        %979 = vmatprep.subr.mxu0 0.0
        %980 = vmatpush1.xpose.msra.mxu0 0.0
        %981 = vmatprep.subr.mxu0 0.0
        %982 = vmatpush1.xpose.msra.mxu0 0.0
        %983 = vmatprep.subr.mxu0 0.0
        %984 = vmatpush1.xpose.msra.mxu0 0.0
        %985 = vmatprep.subr.mxu0 0.0
        %986 = vmatpush1.xpose.msra.mxu0 0.0
        %987 = vmatprep.subr.mxu0 0.0
        %988 = vmatpush1.xpose.msra.mxu0 0.0
        %989 = vmatprep.subr.mxu0 0.0
        %990 = vmatpush1.xpose.msra.mxu0 0.0
        %991 = vmatprep.subr.mxu0 0.0
        %992 = vmatpush1.xpose.msra.mxu0 0.0
        %993 = vmatprep.subr.mxu0 0.0
        %994 = vmatpush1.xpose.msra.mxu0 0.0
        %995 = vmatprep.subr.mxu0 0.0
        %996 = vmatpush1.xpose.msra.mxu0 0.0
        %997 = vmatprep.subr.mxu0 0.0
        %998 = vmatpush1.xpose.msra.mxu0 0.0
        %999 = vmatprep.subr.mxu0 0.0
        %1000 = vmatpush1.xpose.msra.mxu0 0.0
        %1001 = vmatprep.subr.mxu0 0.0
        %1002 = vmatpush1.xpose.msra.mxu0 0.0
        %1003 = vmatprep.subr.mxu0 0.0
        %1004 = vmatpush1.xpose.msra.mxu0 0.0
        %1005 = vmatprep.subr.mxu0 0.0
        %1006 = vmatpush1.xpose.msra.mxu0 0.0
        %1007 = vmatprep.subr.mxu0 0.0
        %1008 = vmatpush1.xpose.msra.mxu0 0.0
        %1009 = vmatprep.subr.mxu0 0.0
        %1010 = vmatpush1.xpose.msra.mxu0 0.0
        %1011 = vmatprep.mubr.f32.mxu0 0.0
        %1012 = vmatmul.mubr.f32.gmra.mrb[0].mxu0 %v943
        %v1013 = vpop.f32.mrb[0].mxu0
        %v1014 = vadd.f32 0.0, %v1013
        %v1015 = vpop.f32.mrb[0].mxu0
        %1016 = vdwg.mxu0
        %v1017 = vsel %vm540, %v1014, -1e+30
        %v1018 = vsel %vm878, %v1017, -inf
        %1019 = vmax.xlane.f32.xlu0 %v1018
        %v1020 = vpop.xlane.xlu0 %1019
        %v1021 = vsub.f32 %v1017, %v1020
        %v1022 = vmul.f32 %v1021, 1.442695
        %v1023 = vpow.pop %v1022
        %v1024 = vsel %vm878, %v1023, 0.0
        %1025 = vadd.xlane.f32.xlu0 %v1024
        %v1026 = vpop.xlane.xlu0 %1025
        %v1027 = vrcp.pop %v1026
        %v1028 = vmul.f32 %v1023, %v1027
        %v1029 = vpack.c.bf16 %v1028, %v1028
        %1031 = vrot.lane.b32.xlu0 %v891, 96
        %v1032 = vpop.permute.xlu0 %1031
        %v1034 = vsel %vm878, %v1029, 0
        %v1037 = vsel %vm895, %v1032, 0
        %1039 = vmatprep.subr.bf16.mxu0 0
        %1040 = vmatpush1.bf16.msra.mxu0 %v1037
        %1041 = vmatprep.subr.bf16.mxu0 0
        %1042 = vmatpush1.bf16.msra.mxu0 0
        %1043 = vmatprep.subr.bf16.mxu0 0
        %1044 = vmatpush1.bf16.msra.mxu0 0
        %1045 = vmatprep.subr.bf16.mxu0 0
        %1046 = vmatpush1.bf16.msra.mxu0 0
        %1047 = vmatprep.subr.bf16.mxu0 0
        %1048 = vmatpush1.bf16.msra.mxu0 0
        %1049 = vmatprep.subr.bf16.mxu0 0
        %1050 = vmatpush1.bf16.msra.mxu0 0
        %1051 = vmatprep.subr.bf16.mxu0 0
        %1052 = vmatpush1.bf16.msra.mxu0 0
        %1053 = vmatprep.subr.bf16.mxu0 0
        %1054 = vmatpush1.bf16.msra.mxu0 0
        %1055 = vmatprep.subr.bf16.mxu0 0
        %1056 = vmatpush1.bf16.msra.mxu0 0
        %1057 = vmatprep.subr.bf16.mxu0 0
        %1058 = vmatpush1.bf16.msra.mxu0 0
        %1059 = vmatprep.subr.bf16.mxu0 0
        %1060 = vmatpush1.bf16.msra.mxu0 0
        %1061 = vmatprep.subr.bf16.mxu0 0
        %1062 = vmatpush1.bf16.msra.mxu0 0
        %1063 = vmatprep.subr.bf16.mxu0 0
        %1064 = vmatpush1.bf16.msra.mxu0 0
        %1065 = vmatprep.subr.bf16.mxu0 0
        %1066 = vmatpush1.bf16.msra.mxu0 0
        %1067 = vmatprep.subr.bf16.mxu0 0
        %1068 = vmatpush1.bf16.msra.mxu0 0
        %1069 = vmatprep.subr.bf16.mxu0 0
        %1070 = vmatpush1.bf16.msra.mxu0 0
        %1071 = vmatprep.mubr.bf16.mxu0 0
        %1072 = vmatmul.mubr.bf16.gmra.mrb[0].mxu0 %v1034
        %v1073 = vpop.f32.mrb[0].mxu0
        %v1074 = vadd.f32 0.0, %v1073
        %v1075 = vpop.f32.mrb[0].mxu0
        %v1076 = vpop.f32.mrb[0].mxu0
        %v1077 = vpop.f32.mrb[0].mxu0
        %1078 = vdwg.mxu0
        %1079 = vrot.lane.b32.xlu0 %v754, 64
        %v1080 = vpop.permute.xlu0 %1079
        %1081 = vrot.lane.b32.xlu0 %v756, 64
        %v1082 = vpop.permute.xlu0 %1081
        %v1083 = vsel %vm800, %v1080, 0
        %v1085 = vsel %vm800, %v1082, 0
        %1087 = vmatprep.subr.mxu0 0.0
        %1088 = vmatpush1.xpose.msra.mxu0 %v1085
        %1089 = vmatprep.subr.mxu0 0.0
        %1090 = vmatpush1.xpose.msra.mxu0 0.0
        %1091 = vmatprep.subr.mxu0 0.0
        %1092 = vmatpush1.xpose.msra.mxu0 0.0
        %1093 = vmatprep.subr.mxu0 0.0
        %1094 = vmatpush1.xpose.msra.mxu0 0.0
        %1095 = vmatprep.subr.mxu0 0.0
        %1096 = vmatpush1.xpose.msra.mxu0 0.0
        %1097 = vmatprep.subr.mxu0 0.0
        %1098 = vmatpush1.xpose.msra.mxu0 0.0
        %1099 = vmatprep.subr.mxu0 0.0
        %1100 = vmatpush1.xpose.msra.mxu0 0.0
        %1101 = vmatprep.subr.mxu0 0.0
        %1102 = vmatpush1.xpose.msra.mxu0 0.0
        %1103 = vmatprep.subr.mxu0 0.0
        %1104 = vmatpush1.xpose.msra.mxu0 0.0
        %1105 = vmatprep.subr.mxu0 0.0
        %1106 = vmatpush1.xpose.msra.mxu0 0.0
        %1107 = vmatprep.subr.mxu0 0.0
        %1108 = vmatpush1.xpose.msra.mxu0 0.0
        %1109 = vmatprep.subr.mxu0 0.0
        %1110 = vmatpush1.xpose.msra.mxu0 0.0
        %1111 = vmatprep.subr.mxu0 0.0
        %1112 = vmatpush1.xpose.msra.mxu0 0.0
        %1113 = vmatprep.subr.mxu0 0.0
        %1114 = vmatpush1.xpose.msra.mxu0 0.0
        %1115 = vmatprep.subr.mxu0 0.0
        %1116 = vmatpush1.xpose.msra.mxu0 0.0
        %1117 = vmatprep.subr.mxu0 0.0
        %1118 = vmatpush1.xpose.msra.mxu0 0.0
        %1119 = vmatprep.subr.mxu0 0.0
        %1120 = vmatpush1.xpose.msra.mxu0 0.0
        %1121 = vmatprep.subr.mxu0 0.0
        %1122 = vmatpush1.xpose.msra.mxu0 0.0
        %1123 = vmatprep.subr.mxu0 0.0
        %1124 = vmatpush1.xpose.msra.mxu0 0.0
        %1125 = vmatprep.subr.mxu0 0.0
        %1126 = vmatpush1.xpose.msra.mxu0 0.0
        %1127 = vmatprep.subr.mxu0 0.0
        %1128 = vmatpush1.xpose.msra.mxu0 0.0
        %1129 = vmatprep.subr.mxu0 0.0
        %1130 = vmatpush1.xpose.msra.mxu0 0.0
        %1131 = vmatprep.subr.mxu0 0.0
        %1132 = vmatpush1.xpose.msra.mxu0 0.0
        %1133 = vmatprep.subr.mxu0 0.0
        %1134 = vmatpush1.xpose.msra.mxu0 0.0
        %1135 = vmatprep.subr.mxu0 0.0
        %1136 = vmatpush1.xpose.msra.mxu0 0.0
        %1137 = vmatprep.subr.mxu0 0.0
        %1138 = vmatpush1.xpose.msra.mxu0 0.0
        %1139 = vmatprep.subr.mxu0 0.0
        %1140 = vmatpush1.xpose.msra.mxu0 0.0
        %1141 = vmatprep.subr.mxu0 0.0
        %1142 = vmatpush1.xpose.msra.mxu0 0.0
        %1143 = vmatprep.subr.mxu0 0.0
        %1144 = vmatpush1.xpose.msra.mxu0 0.0
        %1145 = vmatprep.subr.mxu0 0.0
        %1146 = vmatpush1.xpose.msra.mxu0 0.0
        %1147 = vmatprep.subr.mxu0 0.0
        %1148 = vmatpush1.xpose.msra.mxu0 0.0
        %1149 = vmatprep.subr.mxu0 0.0
        %1150 = vmatpush1.xpose.msra.mxu0 0.0
        %1151 = vmatprep.mubr.f32.mxu0 0.0
        %1152 = vmatmul.mubr.f32.gmra.mrb[0].mxu0 %v1083
        %v1153 = vpop.f32.mrb[0].mxu0
        %v1154 = vadd.f32 0.0, %v1153
        %v1155 = vpop.f32.mrb[0].mxu0
        %1156 = vdwg.mxu0
        %v1157 = vsel %vm540, %v1154, -1e+30
        %v1158 = vsel %vm878, %v1157, -inf
        %1159 = vmax.xlane.f32.xlu0 %v1158
        %v1160 = vpop.xlane.xlu0 %1159
        %v1161 = vsub.f32 %v1157, %v1160
        %v1162 = vmul.f32 %v1161, 1.442695
        %v1163 = vpow.pop %v1162
        %v1164 = vsel %vm878, %v1163, 0.0
        %1165 = vadd.xlane.f32.xlu0 %v1164
        %v1166 = vpop.xlane.xlu0 %1165
        %v1167 = vrcp.pop %v1166
        %v1168 = vmul.f32 %v1163, %v1167
        %v1169 = vpack.c.bf16 %v1168, %v1168
        %1170 = vrot.lane.b32.xlu0 %v891, 64
        %v1171 = vpop.permute.xlu0 %1170
        %v1173 = vsel %vm878, %v1169, 0
        %v1176 = vsel %vm895, %v1171, 0
        %1178 = vmatprep.subr.bf16.mxu0 0
        %1179 = vmatpush1.bf16.msra.mxu0 %v1176
        %1180 = vmatprep.subr.bf16.mxu0 0
        %1181 = vmatpush1.bf16.msra.mxu0 0
        %1182 = vmatprep.subr.bf16.mxu0 0
        %1183 = vmatpush1.bf16.msra.mxu0 0
        %1184 = vmatprep.subr.bf16.mxu0 0
        %1185 = vmatpush1.bf16.msra.mxu0 0
        %1186 = vmatprep.subr.bf16.mxu0 0
        %1187 = vmatpush1.bf16.msra.mxu0 0
        %1188 = vmatprep.subr.bf16.mxu0 0
        %1189 = vmatpush1.bf16.msra.mxu0 0
        %1190 = vmatprep.subr.bf16.mxu0 0
        %1191 = vmatpush1.bf16.msra.mxu0 0
        %1192 = vmatprep.subr.bf16.mxu0 0
        %1193 = vmatpush1.bf16.msra.mxu0 0
        %1194 = vmatprep.subr.bf16.mxu0 0
        %1195 = vmatpush1.bf16.msra.mxu0 0
        %1196 = vmatprep.subr.bf16.mxu0 0
        %1197 = vmatpush1.bf16.msra.mxu0 0
        %1198 = vmatprep.subr.bf16.mxu0 0
        %1199 = vmatpush1.bf16.msra.mxu0 0
        %1200 = vmatprep.subr.bf16.mxu0 0
        %1201 = vmatpush1.bf16.msra.mxu0 0
        %1202 = vmatprep.subr.bf16.mxu0 0
        %1203 = vmatpush1.bf16.msra.mxu0 0
        %1204 = vmatprep.subr.bf16.mxu0 0
        %1205 = vmatpush1.bf16.msra.mxu0 0
        %1206 = vmatprep.subr.bf16.mxu0 0
        %1207 = vmatpush1.bf16.msra.mxu0 0
        %1208 = vmatprep.subr.bf16.mxu0 0
        %1209 = vmatpush1.bf16.msra.mxu0 0
        %1210 = vmatprep.mubr.bf16.mxu0 0
        %1211 = vmatmul.mubr.bf16.gmra.mrb[0].mxu0 %v1173
        %v1212 = vpop.f32.mrb[0].mxu0
        %v1213 = vadd.f32 0.0, %v1212
        %v1214 = vpop.f32.mrb[0].mxu0
        %v1215 = vpop.f32.mrb[0].mxu0
        %v1216 = vpop.f32.mrb[0].mxu0
        %1217 = vdwg.mxu0
        %1218 = vrot.lane.b32.xlu0 %v754, 32
        %v1219 = vpop.permute.xlu0 %1218
        %1220 = vrot.lane.b32.xlu0 %v756, 32
        %v1221 = vpop.permute.xlu0 %1220
        %v1222 = vsel %vm800, %v1219, 0
        %v1224 = vsel %vm800, %v1221, 0
        %1226 = vmatprep.subr.mxu0 0.0
        %1227 = vmatpush1.xpose.msra.mxu0 %v1224
        %1228 = vmatprep.subr.mxu0 0.0
        %1229 = vmatpush1.xpose.msra.mxu0 0.0
        %1230 = vmatprep.subr.mxu0 0.0
        %1231 = vmatpush1.xpose.msra.mxu0 0.0
        %1232 = vmatprep.subr.mxu0 0.0
        %1233 = vmatpush1.xpose.msra.mxu0 0.0
        %1234 = vmatprep.subr.mxu0 0.0
        %1235 = vmatpush1.xpose.msra.mxu0 0.0
        %1236 = vmatprep.subr.mxu0 0.0
        %1237 = vmatpush1.xpose.msra.mxu0 0.0
        %1238 = vmatprep.subr.mxu0 0.0
        %1239 = vmatpush1.xpose.msra.mxu0 0.0
        %1240 = vmatprep.subr.mxu0 0.0
        %1241 = vmatpush1.xpose.msra.mxu0 0.0
        %1242 = vmatprep.subr.mxu0 0.0
        %1243 = vmatpush1.xpose.msra.mxu0 0.0
        %1244 = vmatprep.subr.mxu0 0.0
        %1245 = vmatpush1.xpose.msra.mxu0 0.0
        %1246 = vmatprep.subr.mxu0 0.0
        %1247 = vmatpush1.xpose.msra.mxu0 0.0
        %1248 = vmatprep.subr.mxu0 0.0
        %1249 = vmatpush1.xpose.msra.mxu0 0.0
        %1250 = vmatprep.subr.mxu0 0.0
        %1251 = vmatpush1.xpose.msra.mxu0 0.0
        %1252 = vmatprep.subr.mxu0 0.0
        %1253 = vmatpush1.xpose.msra.mxu0 0.0
        %1254 = vmatprep.subr.mxu0 0.0
        %1255 = vmatpush1.xpose.msra.mxu0 0.0
        %1256 = vmatprep.subr.mxu0 0.0
        %1257 = vmatpush1.xpose.msra.mxu0 0.0
        %1258 = vmatprep.subr.mxu0 0.0
        %1259 = vmatpush1.xpose.msra.mxu0 0.0
        %1260 = vmatprep.subr.mxu0 0.0
        %1261 = vmatpush1.xpose.msra.mxu0 0.0
        %1262 = vmatprep.subr.mxu0 0.0
        %1263 = vmatpush1.xpose.msra.mxu0 0.0
        %1264 = vmatprep.subr.mxu0 0.0
        %1265 = vmatpush1.xpose.msra.mxu0 0.0
        %1266 = vmatprep.subr.mxu0 0.0
        %1267 = vmatpush1.xpose.msra.mxu0 0.0
        %1268 = vmatprep.subr.mxu0 0.0
        %1269 = vmatpush1.xpose.msra.mxu0 0.0
        %1270 = vmatprep.subr.mxu0 0.0
        %1271 = vmatpush1.xpose.msra.mxu0 0.0
        %1272 = vmatprep.subr.mxu0 0.0
        %1273 = vmatpush1.xpose.msra.mxu0 0.0
        %1274 = vmatprep.subr.mxu0 0.0
        %1275 = vmatpush1.xpose.msra.mxu0 0.0
        %1276 = vmatprep.subr.mxu0 0.0
        %1277 = vmatpush1.xpose.msra.mxu0 0.0
        %1278 = vmatprep.subr.mxu0 0.0
        %1279 = vmatpush1.xpose.msra.mxu0 0.0
        %1280 = vmatprep.subr.mxu0 0.0
        %1281 = vmatpush1.xpose.msra.mxu0 0.0
        %1282 = vmatprep.subr.mxu0 0.0
        %1283 = vmatpush1.xpose.msra.mxu0 0.0
        %1284 = vmatprep.subr.mxu0 0.0
        %1285 = vmatpush1.xpose.msra.mxu0 0.0
        %1286 = vmatprep.subr.mxu0 0.0
        %1287 = vmatpush1.xpose.msra.mxu0 0.0
        %1288 = vmatprep.subr.mxu0 0.0
        %1289 = vmatpush1.xpose.msra.mxu0 0.0
        %1290 = vmatprep.mubr.f32.mxu0 0.0
        %1291 = vmatmul.mubr.f32.gmra.mrb[0].mxu0 %v1222
        %v1292 = vpop.f32.mrb[0].mxu0
        %v1293 = vadd.f32 0.0, %v1292
        %v1294 = vpop.f32.mrb[0].mxu0
        %1295 = vdwg.mxu0
        %v1296 = vsel %vm540, %v1293, -1e+30
        %v1297 = vsel %vm878, %v1296, -inf
        %1298 = vmax.xlane.f32.xlu0 %v1297
        %v1299 = vpop.xlane.xlu0 %1298
        %v1300 = vsub.f32 %v1296, %v1299
        %v1301 = vmul.f32 %v1300, 1.442695
        %v1302 = vpow.pop %v1301
        %v1303 = vsel %vm878, %v1302, 0.0
        %1304 = vadd.xlane.f32.xlu0 %v1303
        %v1305 = vpop.xlane.xlu0 %1304
        %v1306 = vrcp.pop %v1305
        %v1307 = vmul.f32 %v1302, %v1306
        %v1308 = vpack.c.bf16 %v1307, %v1307
        %1309 = vrot.lane.b32.xlu0 %v891, 32
        %v1310 = vpop.permute.xlu0 %1309
        %v1312 = vsel %vm878, %v1308, 0
        %v1315 = vsel %vm895, %v1310, 0
        %1317 = vmatprep.subr.bf16.mxu0 0
        %1318 = vmatpush1.bf16.msra.mxu0 %v1315
        %1319 = vmatprep.subr.bf16.mxu0 0
        %1320 = vmatpush1.bf16.msra.mxu0 0
        %1321 = vmatprep.subr.bf16.mxu0 0
        %1322 = vmatpush1.bf16.msra.mxu0 0
        %1323 = vmatprep.subr.bf16.mxu0 0
        %1324 = vmatpush1.bf16.msra.mxu0 0
        %1325 = vmatprep.subr.bf16.mxu0 0
        %1326 = vmatpush1.bf16.msra.mxu0 0
        %1327 = vmatprep.subr.bf16.mxu0 0
        %1328 = vmatpush1.bf16.msra.mxu0 0
        %1329 = vmatprep.subr.bf16.mxu0 0
        %1330 = vmatpush1.bf16.msra.mxu0 0
        %1331 = vmatprep.subr.bf16.mxu0 0
        %1332 = vmatpush1.bf16.msra.mxu0 0
        %1333 = vmatprep.subr.bf16.mxu0 0
        %1334 = vmatpush1.bf16.msra.mxu0 0
        %1335 = vmatprep.subr.bf16.mxu0 0
        %1336 = vmatpush1.bf16.msra.mxu0 0
        %1337 = vmatprep.subr.bf16.mxu0 0
        %1338 = vmatpush1.bf16.msra.mxu0 0
        %1339 = vmatprep.subr.bf16.mxu0 0
        %1340 = vmatpush1.bf16.msra.mxu0 0
        %1341 = vmatprep.subr.bf16.mxu0 0
        %1342 = vmatpush1.bf16.msra.mxu0 0
        %1343 = vmatprep.subr.bf16.mxu0 0
        %1344 = vmatpush1.bf16.msra.mxu0 0
        %1345 = vmatprep.subr.bf16.mxu0 0
        %1346 = vmatpush1.bf16.msra.mxu0 0
        %1347 = vmatprep.subr.bf16.mxu0 0
        %1348 = vmatpush1.bf16.msra.mxu0 0
        %1349 = vmatprep.mubr.bf16.mxu0 0
        %1350 = vmatmul.mubr.bf16.gmra.mrb[0].mxu0 %v1312
        %v1351 = vpop.f32.mrb[0].mxu0
        %v1352 = vadd.f32 0.0, %v1351
        %v1353 = vpop.f32.mrb[0].mxu0
        %v1354 = vpop.f32.mrb[0].mxu0
        %v1355 = vpop.f32.mrb[0].mxu0
        %1356 = vdwg.mxu0
        %1358 = vrot.lane.b32.xlu0 %v1074, 32
        %v1359 = vpop.permute.xlu0 %1358
        %1362 = vrot.lane.b32.xlu0 %v1213, 64
        %v1363 = vpop.permute.xlu0 %1362
        %1366 = vrot.lane.b32.xlu0 %v1352, 96
        %v1367 = vpop.permute.xlu0 %1366
        %v1369 = vsel %vm800, %v934, %v1359
        %vm1370 = vcmask 523264
        %v1371 = vsel %vm1370, %v1369, %v1363
        %vm1372 = vcmask 785408
        %v1373 = vsel %vm1372, %v1371, %v1367
        %v1374 = vpack.c.bf16 %v1373, %v1373
        %v1375 = vld [vmem:[#allocation5] sm:$0xf]
        %v1376 = vld [vmem:[#allocation5 + $0x4] sm:$0xf]
        %v1377 = vld [vmem:[#allocation5 + $0x8] sm:$0xf]
        %v1378 = vld [vmem:[#allocation5 + $0xc] sm:$0xf]
        %v1379 = vld [vmem:[#allocation5 + $0x10] sm:$0xf]
        %v1380 = vld [vmem:[#allocation5 + $0x14] sm:$0xf]
        %v1381 = vld [vmem:[#allocation5 + $0x18] sm:$0xf]
        %v1382 = vld [vmem:[#allocation5 + $0x1c] sm:$0xf]
        %v1383 = vld [vmem:[#allocation5 + $0x20] sm:$0xf]
        %v1384 = vld [vmem:[#allocation5 + $0x24] sm:$0xf]
        %v1385 = vld [vmem:[#allocation5 + $0x28] sm:$0xf]
        %v1386 = vld [vmem:[#allocation5 + $0x2c] sm:$0xf]
        %v1387 = vld [vmem:[#allocation5 + $0x30] sm:$0xf]
        %v1388 = vld [vmem:[#allocation5 + $0x34] sm:$0xf]
        %v1389 = vld [vmem:[#allocation5 + $0x38] sm:$0xf]
        %v1390 = vld [vmem:[#allocation5 + $0x3c] sm:$0xf]
        %v1391 = vld [vmem:[%s4] sm:$0x1]
        %v1393 = vlaneseq
        %v1394 = vshrl.u32 %v1393, 7
        %v1395 = vsub.s32 0, %v1394
        %v1396 = vrot.slane %v1391, %v1395
        %v1414 = vunpack.c.l.b16 %v1375
        %v1415 = vunpack.c.l.b16 %v1376
        %v1416 = vunpack.c.l.b16 %v1377
        %v1417 = vunpack.c.l.b16 %v1378
        %v1418 = vunpack.c.l.b16 %v1379
        %v1419 = vunpack.c.l.b16 %v1380
        %v1420 = vunpack.c.l.b16 %v1381
        %v1421 = vunpack.c.l.b16 %v1382
        %v1422 = vunpack.c.l.b16 %v1383
        %v1423 = vunpack.c.l.b16 %v1384
        %v1424 = vunpack.c.l.b16 %v1385
        %v1425 = vunpack.c.l.b16 %v1386
        %v1426 = vunpack.c.l.b16 %v1387
        %v1427 = vunpack.c.l.b16 %v1388
        %v1428 = vunpack.c.l.b16 %v1389
        %v1429 = vunpack.c.l.b16 %v1390
        %v1430 = vpack.c.b16 %v1415, %v1414
        %v1431 = vpack.c.b16 %v1417, %v1416
        %v1432 = vpack.c.b16 %v1419, %v1418
        %v1433 = vpack.c.b16 %v1421, %v1420
        %v1434 = vpack.c.b16 %v1423, %v1422
        %v1435 = vpack.c.b16 %v1425, %v1424
        %v1436 = vpack.c.b16 %v1427, %v1426
        %v1437 = vpack.c.b16 %v1429, %v1428
        %1446 = vmatprep.subr.bf16.mxu0 0
        %1447 = vmatpush1.bf16.msra.mxu0 %v1430
        %1448 = vmatprep.subr.bf16.mxu0 0
        %1449 = vmatpush1.bf16.msra.mxu0 %v1431
        %1450 = vmatprep.subr.bf16.mxu0 0
        %1451 = vmatpush1.bf16.msra.mxu0 %v1432
        %1452 = vmatprep.subr.bf16.mxu0 0
        %1453 = vmatpush1.bf16.msra.mxu0 %v1433
        %1454 = vmatprep.subr.bf16.mxu0 0
        %1455 = vmatpush1.bf16.msra.mxu0 %v1434
        %1456 = vmatprep.subr.bf16.mxu0 0
        %1457 = vmatpush1.bf16.msra.mxu0 %v1435
        %1458 = vmatprep.subr.bf16.mxu0 0
        %1459 = vmatpush1.bf16.msra.mxu0 %v1436
        %1460 = vmatprep.subr.bf16.mxu0 0
        %1461 = vmatpush1.bf16.msra.mxu0 %v1437
        %1462 = vmatprep.subr.bf16.mxu0 0
        %1463 = vmatpush1.bf16.msra.mxu0 0
        %1464 = vmatprep.subr.bf16.mxu0 0
        %1465 = vmatpush1.bf16.msra.mxu0 0
        %1466 = vmatprep.subr.bf16.mxu0 0
        %1467 = vmatpush1.bf16.msra.mxu0 0
        %1468 = vmatprep.subr.bf16.mxu0 0
        %1469 = vmatpush1.bf16.msra.mxu0 0
        %1470 = vmatprep.subr.bf16.mxu0 0
        %1471 = vmatpush1.bf16.msra.mxu0 0
        %1472 = vmatprep.subr.bf16.mxu0 0
        %1473 = vmatpush1.bf16.msra.mxu0 0
        %1474 = vmatprep.subr.bf16.mxu0 0
        %1475 = vmatpush1.bf16.msra.mxu0 0
        %1476 = vmatprep.subr.bf16.mxu0 0
        %1477 = vmatpush1.bf16.msra.mxu0 0
        %1478 = vmatprep.mubr.bf16.mxu0 0
        %1479 = vmatmul.mubr.bf16.gmra.mrb[0].mxu0 %v1374
        %v1480 = vpop.f32.mrb[0].mxu0
        %v1481 = vadd.f32 %v1396, %v1480
        %v1482 = vpop.f32.mrb[0].mxu0
        %v1483 = vpop.f32.mrb[0].mxu0
        %v1484 = vpop.f32.mrb[0].mxu0
        %1485 = vdwg.mxu0
        %v1486 = vadd.f32 %v535, %v1481
        %v1487 = vld [vmem:[%s5] sm:$0x1]
        %v1488 = vld [vmem:[%s6] sm:$0x1]
        %1489 = vadd.xlane.f32.xlu0 %v1486
        %v1490 = vpop.xlane.xlu0 %1489
        %v1491 = vrcp.pop 128.0
        %v1492 = vmul.f32 %v1490, %v1491
        %v1493 = vsub.f32 %v1486, %v1492
        %v1494 = vmul.f32 %v1493, %v1493
        %1495 = vadd.xlane.f32.xlu0 %v1494
        %v1496 = vpop.xlane.xlu0 %1495
        %v1497 = vmul.f32 %v1496, %v1491
        %v1498 = vadd.f32 %v1497, 1e-05
        %v1499 = vrsqrt.pop %v1498
        %v1500 = vmul.f32 %v1493, %v1499
        %v1502 = vlaneseq
        %v1503 = vshrl.u32 %v1502, 7
        %v1504 = vsub.s32 0, %v1503
        %v1505 = vrot.slane %v1487, %v1504
        %v1507 = vmul.f32 %v1500, %v1505
        %v1509 = vlaneseq
        %v1510 = vshrl.u32 %v1509, 7
        %v1511 = vsub.s32 0, %v1510
        %v1512 = vrot.slane %v1488, %v1511
        %v1514 = vadd.f32 %v1507, %v1512
        %v1515 = vpack.c.bf16 %v1514, %v1514
        %v1516 = vld [vmem:[%s7] sm:$0xff]
        %v1517 = vld [vmem:[%s7 + $0x8] sm:$0xff]
        %v1518 = vld [vmem:[%s7 + $0x10] sm:$0xff]
        %v1519 = vld [vmem:[%s7 + $0x18] sm:$0xff]
        %v1520 = vld [vmem:[%s7 + $0x20] sm:$0xff]
        %v1521 = vld [vmem:[%s7 + $0x28] sm:$0xff]
        %v1522 = vld [vmem:[%s7 + $0x30] sm:$0xff]
        %v1523 = vld [vmem:[%s7 + $0x38] sm:$0xff]
        %v1524 = vld [vmem:[%s7 + $0x40] sm:$0xff]
        %v1525 = vld [vmem:[%s7 + $0x48] sm:$0xff]
        %v1526 = vld [vmem:[%s7 + $0x50] sm:$0xff]
        %v1527 = vld [vmem:[%s7 + $0x58] sm:$0xff]
        %v1528 = vld [vmem:[%s7 + $0x60] sm:$0xff]
        %v1529 = vld [vmem:[%s7 + $0x68] sm:$0xff]
        %v1530 = vld [vmem:[%s7 + $0x70] sm:$0xff]
        %v1531 = vld [vmem:[%s7 + $0x78] sm:$0xff]
        %v1532 = vld [vmem:[%s7 + $0x80] sm:$0xff]
        %v1533 = vld [vmem:[%s7 + $0x88] sm:$0xff]
        %v1534 = vld [vmem:[%s7 + $0x90] sm:$0xff]
        %v1535 = vld [vmem:[%s7 + $0x98] sm:$0xff]
        %v1536 = vld [vmem:[%s7 + $0xa0] sm:$0xff]
        %v1537 = vld [vmem:[%s7 + $0xa8] sm:$0xff]
        %v1538 = vld [vmem:[%s7 + $0xb0] sm:$0xff]
        %v1539 = vld [vmem:[%s7 + $0xb8] sm:$0xff]
        %v1540 = vld [vmem:[%s7 + $0xc0] sm:$0xff]
        %v1541 = vld [vmem:[%s7 + $0xc8] sm:$0xff]
        %v1542 = vld [vmem:[%s7 + $0xd0] sm:$0xff]
        %v1543 = vld [vmem:[%s7 + $0xd8] sm:$0xff]
        %v1544 = vld [vmem:[%s7 + $0xe0] sm:$0xff]
        %v1545 = vld [vmem:[%s7 + $0xe8] sm:$0xff]
        %v1546 = vld [vmem:[%s7 + $0xf0] sm:$0xff]
        %v1547 = vld [vmem:[%s7 + $0xf8] sm:$0xff]
        %v1548 = vld [vmem:[%s8] sm:$0xf]
        %v1550 = vlaneseq
        %v1551 = vshrl.u32 %v1550, 7
        %v1552 = vsub.s32 0, %v1551
        %v1553 = vrot.slane %v1548, %v1552
        %v1554 = vlaneseq
        %v1555 = vshrl.u32 %v1554, 7
        %v1556 = vsub.s32 1, %v1555
        %v1557 = vrot.slane %v1548, %v1556
        %v1558 = vlaneseq
        %v1559 = vshrl.u32 %v1558, 7
        %v1560 = vsub.s32 2, %v1559
        %v1561 = vrot.slane %v1548, %v1560
        %v1562 = vlaneseq
        %v1563 = vshrl.u32 %v1562, 7
        %v1564 = vsub.s32 3, %v1563
        %v1565 = vrot.slane %v1548, %v1564
        %v1602 = vunpack.c.l.b16 %v1516
        %v1603 = vunpack.c.h.b16 %v1516
        %v1604 = vunpack.c.l.b16 %v1517
        %v1605 = vunpack.c.h.b16 %v1517
        %v1606 = vunpack.c.l.b16 %v1518
        %v1607 = vunpack.c.h.b16 %v1518
        %v1608 = vunpack.c.l.b16 %v1519
        %v1609 = vunpack.c.h.b16 %v1519
        %v1610 = vunpack.c.l.b16 %v1520
        %v1611 = vunpack.c.h.b16 %v1520
        %v1612 = vunpack.c.l.b16 %v1521
        %v1613 = vunpack.c.h.b16 %v1521
        %v1614 = vunpack.c.l.b16 %v1522
        %v1615 = vunpack.c.h.b16 %v1522
        %v1616 = vunpack.c.l.b16 %v1523
        %v1617 = vunpack.c.h.b16 %v1523
        %v1618 = vunpack.c.l.b16 %v1524
        %v1619 = vunpack.c.h.b16 %v1524
        %v1620 = vunpack.c.l.b16 %v1525
        %v1621 = vunpack.c.h.b16 %v1525
        %v1622 = vunpack.c.l.b16 %v1526
        %v1623 = vunpack.c.h.b16 %v1526
        %v1624 = vunpack.c.l.b16 %v1527
        %v1625 = vunpack.c.h.b16 %v1527
        %v1626 = vunpack.c.l.b16 %v1528
        %v1627 = vunpack.c.h.b16 %v1528
        %v1628 = vunpack.c.l.b16 %v1529
        %v1629 = vunpack.c.h.b16 %v1529
        %v1630 = vunpack.c.l.b16 %v1530
        %v1631 = vunpack.c.h.b16 %v1530
        %v1632 = vunpack.c.l.b16 %v1531
        %v1633 = vunpack.c.h.b16 %v1531
        %v1634 = vunpack.c.l.b16 %v1532
        %v1635 = vunpack.c.h.b16 %v1532
        %v1636 = vunpack.c.l.b16 %v1533
        %v1637 = vunpack.c.h.b16 %v1533
        %v1638 = vunpack.c.l.b16 %v1534
        %v1639 = vunpack.c.h.b16 %v1534
        %v1640 = vunpack.c.l.b16 %v1535
        %v1641 = vunpack.c.h.b16 %v1535
        %v1642 = vunpack.c.l.b16 %v1536
        %v1643 = vunpack.c.h.b16 %v1536
        %v1644 = vunpack.c.l.b16 %v1537
        %v1645 = vunpack.c.h.b16 %v1537
        %v1646 = vunpack.c.l.b16 %v1538
        %v1647 = vunpack.c.h.b16 %v1538
        %v1648 = vunpack.c.l.b16 %v1539
        %v1649 = vunpack.c.h.b16 %v1539
        %v1650 = vunpack.c.l.b16 %v1540
        %v1651 = vunpack.c.h.b16 %v1540
        %v1652 = vunpack.c.l.b16 %v1541
        %v1653 = vunpack.c.h.b16 %v1541
        %v1654 = vunpack.c.l.b16 %v1542
        %v1655 = vunpack.c.h.b16 %v1542
        %v1656 = vunpack.c.l.b16 %v1543
        %v1657 = vunpack.c.h.b16 %v1543
        %v1658 = vunpack.c.l.b16 %v1544
        %v1659 = vunpack.c.h.b16 %v1544
        %v1660 = vunpack.c.l.b16 %v1545
        %v1661 = vunpack.c.h.b16 %v1545
        %v1662 = vunpack.c.l.b16 %v1546
        %v1663 = vunpack.c.h.b16 %v1546
        %v1664 = vunpack.c.l.b16 %v1547
        %v1665 = vunpack.c.h.b16 %v1547
        %v1666 = vpack.c.b16 %v1606, %v1602
        %v1667 = vpack.c.b16 %v1607, %v1603
        %v1668 = vpack.c.b16 %v1608, %v1604
        %v1669 = vpack.c.b16 %v1609, %v1605
        %v1670 = vpack.c.b16 %v1614, %v1610
        %v1671 = vpack.c.b16 %v1615, %v1611
        %v1672 = vpack.c.b16 %v1616, %v1612
        %v1673 = vpack.c.b16 %v1617, %v1613
        %v1674 = vpack.c.b16 %v1622, %v1618
        %v1675 = vpack.c.b16 %v1623, %v1619
        %v1676 = vpack.c.b16 %v1624, %v1620
        %v1677 = vpack.c.b16 %v1625, %v1621
        %v1678 = vpack.c.b16 %v1630, %v1626
        %v1679 = vpack.c.b16 %v1631, %v1627
        %v1680 = vpack.c.b16 %v1632, %v1628
        %v1681 = vpack.c.b16 %v1633, %v1629
        %v1682 = vpack.c.b16 %v1638, %v1634
        %v1683 = vpack.c.b16 %v1639, %v1635
        %v1684 = vpack.c.b16 %v1640, %v1636
        %v1685 = vpack.c.b16 %v1641, %v1637
        %v1686 = vpack.c.b16 %v1646, %v1642
        %v1687 = vpack.c.b16 %v1647, %v1643
        %v1688 = vpack.c.b16 %v1648, %v1644
        %v1689 = vpack.c.b16 %v1649, %v1645
        %v1690 = vpack.c.b16 %v1654, %v1650
        %v1691 = vpack.c.b16 %v1655, %v1651
        %v1692 = vpack.c.b16 %v1656, %v1652
        %v1693 = vpack.c.b16 %v1657, %v1653
        %v1694 = vpack.c.b16 %v1662, %v1658
        %v1695 = vpack.c.b16 %v1663, %v1659
        %v1696 = vpack.c.b16 %v1664, %v1660
        %v1697 = vpack.c.b16 %v1665, %v1661
        %1730 = vmatprep.subr.bf16.mxu0 %v1667
        %1731 = vmatpush1.bf16.msra.mxu0 %v1666
        %1732 = vmatprep.subr.bf16.mxu0 %v1671
        %1733 = vmatpush1.bf16.msra.mxu0 %v1670
        %1734 = vmatprep.subr.bf16.mxu0 %v1675
        %1735 = vmatpush1.bf16.msra.mxu0 %v1674
        %1736 = vmatprep.subr.bf16.mxu0 %v1679
        %1737 = vmatpush1.bf16.msra.mxu0 %v1678
        %1738 = vmatprep.subr.bf16.mxu0 %v1683
        %1739 = vmatpush1.bf16.msra.mxu0 %v1682
        %1740 = vmatprep.subr.bf16.mxu0 %v1687
        %1741 = vmatpush1.bf16.msra.mxu0 %v1686
        %1742 = vmatprep.subr.bf16.mxu0 %v1691
        %1743 = vmatpush1.bf16.msra.mxu0 %v1690
        %1744 = vmatprep.subr.bf16.mxu0 %v1695
        %1745 = vmatpush1.bf16.msra.mxu0 %v1694
        %1746 = vmatprep.subr.bf16.mxu0 0
        %1747 = vmatpush1.bf16.msra.mxu0 0
        %1748 = vmatprep.subr.bf16.mxu0 0
        %1749 = vmatpush1.bf16.msra.mxu0 0
        %1750 = vmatprep.subr.bf16.mxu0 0
        %1751 = vmatpush1.bf16.msra.mxu0 0
        %1752 = vmatprep.subr.bf16.mxu0 0
        %1753 = vmatpush1.bf16.msra.mxu0 0
        %1754 = vmatprep.subr.bf16.mxu0 0
        %1755 = vmatpush1.bf16.msra.mxu0 0
        %1756 = vmatprep.subr.bf16.mxu0 0
        %1757 = vmatpush1.bf16.msra.mxu0 0
        %1758 = vmatprep.subr.bf16.mxu0 0
        %1759 = vmatpush1.bf16.msra.mxu0 0
        %1760 = vmatprep.subr.bf16.mxu0 0
        %1761 = vmatpush1.bf16.msra.mxu0 0
        %1762 = vmatprep.mubr.bf16.mxu0 0
        %1763 = vmatmul.mubr.bf16.gmra.mrb[0].mxu0 %v1515
        %v1764 = vpop.f32.mrb[0].mxu0
        %v1765 = vadd.f32 %v1553, %v1764
        %v1766 = vpop.f32.mrb[0].mxu0
        %v1767 = vadd.f32 %v1557, %v1766
        %v1768 = vpop.f32.mrb[0].mxu0
        %v1769 = vpop.f32.mrb[0].mxu0
        %1770 = vdwg.mxu0
        %1771 = vmatprep.subr.bf16.mxu0 %v1669
        %1772 = vmatpush1.bf16.msra.mxu0 %v1668
        %1773 = vmatprep.subr.bf16.mxu0 %v1673
        %1774 = vmatpush1.bf16.msra.mxu0 %v1672
        %1775 = vmatprep.subr.bf16.mxu0 %v1677
        %1776 = vmatpush1.bf16.msra.mxu0 %v1676
        %1777 = vmatprep.subr.bf16.mxu0 %v1681
        %1778 = vmatpush1.bf16.msra.mxu0 %v1680
        %1779 = vmatprep.subr.bf16.mxu0 %v1685
        %1780 = vmatpush1.bf16.msra.mxu0 %v1684
        %1781 = vmatprep.subr.bf16.mxu0 %v1689
        %1782 = vmatpush1.bf16.msra.mxu0 %v1688
        %1783 = vmatprep.subr.bf16.mxu0 %v1693
        %1784 = vmatpush1.bf16.msra.mxu0 %v1692
        %1785 = vmatprep.subr.bf16.mxu0 %v1697
        %1786 = vmatpush1.bf16.msra.mxu0 %v1696
        %1787 = vmatprep.subr.bf16.mxu0 0
        %1788 = vmatpush1.bf16.msra.mxu0 0
        %1789 = vmatprep.subr.bf16.mxu0 0
        %1790 = vmatpush1.bf16.msra.mxu0 0
        %1791 = vmatprep.subr.bf16.mxu0 0
        %1792 = vmatpush1.bf16.msra.mxu0 0
        %1793 = vmatprep.subr.bf16.mxu0 0
        %1794 = vmatpush1.bf16.msra.mxu0 0
        %1795 = vmatprep.subr.bf16.mxu0 0
        %1796 = vmatpush1.bf16.msra.mxu0 0
        %1797 = vmatprep.subr.bf16.mxu0 0
        %1798 = vmatpush1.bf16.msra.mxu0 0
        %1799 = vmatprep.subr.bf16.mxu0 0
        %1800 = vmatpush1.bf16.msra.mxu0 0
        %1801 = vmatprep.subr.bf16.mxu0 0
        %1802 = vmatpush1.bf16.msra.mxu0 0
        %1803 = vmatprep.mubr.bf16.mxu0 0
        %1804 = vmatmul.mubr.bf16.gmra.mrb[0].mxu0 %v1515
        %v1805 = vpop.f32.mrb[0].mxu0
        %v1806 = vadd.f32 %v1561, %v1805
        %v1807 = vpop.f32.mrb[0].mxu0
        %v1808 = vadd.f32 %v1565, %v1807
        %v1809 = vpop.f32.mrb[0].mxu0
        %v1810 = vpop.f32.mrb[0].mxu0
        %1811 = vdwg.mxu0
        %v1812 = vmax.f32 %v1765, 0.0
        %v1813 = vmax.f32 %v1767, 0.0
        %v1814 = vmax.f32 %v1806, 0.0
        %v1815 = vmax.f32 %v1808, 0.0
        %v1816 = vpack.c.bf16 %v1812, %v1812
        %v1817 = vpack.c.bf16 %v1813, %v1813
        %v1818 = vpack.c.bf16 %v1814, %v1814
        %v1819 = vpack.c.bf16 %v1815, %v1815
        %v1820 = vld [vmem:[#allocation7] sm:$0xf]
        %v1821 = vld [vmem:[#allocation7 + $0x4] sm:$0xf]
        %v1822 = vld [vmem:[#allocation7 + $0x8] sm:$0xf]
        %v1823 = vld [vmem:[#allocation7 + $0xc] sm:$0xf]
        %v1824 = vld [vmem:[#allocation7 + $0x10] sm:$0xf]
        %v1825 = vld [vmem:[#allocation7 + $0x14] sm:$0xf]
        %v1826 = vld [vmem:[#allocation7 + $0x18] sm:$0xf]
        %v1827 = vld [vmem:[#allocation7 + $0x1c] sm:$0xf]
        %v1828 = vld [vmem:[#allocation7 + $0x20] sm:$0xf]
        %v1829 = vld [vmem:[#allocation7 + $0x24] sm:$0xf]
        %v1830 = vld [vmem:[#allocation7 + $0x28] sm:$0xf]
        %v1831 = vld [vmem:[#allocation7 + $0x2c] sm:$0xf]
        %v1832 = vld [vmem:[#allocation7 + $0x30] sm:$0xf]
        %v1833 = vld [vmem:[#allocation7 + $0x34] sm:$0xf]
        %v1834 = vld [vmem:[#allocation7 + $0x38] sm:$0xf]
        %v1835 = vld [vmem:[#allocation7 + $0x3c] sm:$0xf]
        %v1836 = vld [vmem:[#allocation7 + $0x40] sm:$0xf]
        %v1837 = vld [vmem:[#allocation7 + $0x44] sm:$0xf]
        %v1838 = vld [vmem:[#allocation7 + $0x48] sm:$0xf]
        %v1839 = vld [vmem:[#allocation7 + $0x4c] sm:$0xf]
        %v1840 = vld [vmem:[#allocation7 + $0x50] sm:$0xf]
        %v1841 = vld [vmem:[#allocation7 + $0x54] sm:$0xf]
        %v1842 = vld [vmem:[#allocation7 + $0x58] sm:$0xf]
        %v1843 = vld [vmem:[#allocation7 + $0x5c] sm:$0xf]
        %v1844 = vld [vmem:[#allocation7 + $0x60] sm:$0xf]
        %v1845 = vld [vmem:[#allocation7 + $0x64] sm:$0xf]
        %v1846 = vld [vmem:[#allocation7 + $0x68] sm:$0xf]
        %v1847 = vld [vmem:[#allocation7 + $0x6c] sm:$0xf]
        %v1848 = vld [vmem:[#allocation7 + $0x70] sm:$0xf]
        %v1849 = vld [vmem:[#allocation7 + $0x74] sm:$0xf]
        %v1850 = vld [vmem:[#allocation7 + $0x78] sm:$0xf]
        %v1851 = vld [vmem:[#allocation7 + $0x7c] sm:$0xf]
        %v1852 = vld [vmem:[#allocation7 + $0x80] sm:$0xf]
        %v1853 = vld [vmem:[#allocation7 + $0x84] sm:$0xf]
        %v1854 = vld [vmem:[#allocation7 + $0x88] sm:$0xf]
        %v1855 = vld [vmem:[#allocation7 + $0x8c] sm:$0xf]
        %v1856 = vld [vmem:[#allocation7 + $0x90] sm:$0xf]
        %v1857 = vld [vmem:[#allocation7 + $0x94] sm:$0xf]
        %v1858 = vld [vmem:[#allocation7 + $0x98] sm:$0xf]
        %v1859 = vld [vmem:[#allocation7 + $0x9c] sm:$0xf]
        %v1860 = vld [vmem:[#allocation7 + $0xa0] sm:$0xf]
        %v1861 = vld [vmem:[#allocation7 + $0xa4] sm:$0xf]
        %v1862 = vld [vmem:[#allocation7 + $0xa8] sm:$0xf]
        %v1863 = vld [vmem:[#allocation7 + $0xac] sm:$0xf]
        %v1864 = vld [vmem:[#allocation7 + $0xb0] sm:$0xf]
        %v1865 = vld [vmem:[#allocation7 + $0xb4] sm:$0xf]
        %v1866 = vld [vmem:[#allocation7 + $0xb8] sm:$0xf]
        %v1867 = vld [vmem:[#allocation7 + $0xbc] sm:$0xf]
        %v1868 = vld [vmem:[#allocation7 + $0xc0] sm:$0xf]
        %v1869 = vld [vmem:[#allocation7 + $0xc4] sm:$0xf]
        %v1870 = vld [vmem:[#allocation7 + $0xc8] sm:$0xf]
        %v1871 = vld [vmem:[#allocation7 + $0xcc] sm:$0xf]
        %v1872 = vld [vmem:[#allocation7 + $0xd0] sm:$0xf]
        %v1873 = vld [vmem:[#allocation7 + $0xd4] sm:$0xf]
        %v1874 = vld [vmem:[#allocation7 + $0xd8] sm:$0xf]
        %v1875 = vld [vmem:[#allocation7 + $0xdc] sm:$0xf]
        %v1876 = vld [vmem:[#allocation7 + $0xe0] sm:$0xf]
        %v1877 = vld [vmem:[#allocation7 + $0xe4] sm:$0xf]
        %v1878 = vld [vmem:[#allocation7 + $0xe8] sm:$0xf]
        %v1879 = vld [vmem:[#allocation7 + $0xec] sm:$0xf]
        %v1880 = vld [vmem:[#allocation7 + $0xf0] sm:$0xf]
        %v1881 = vld [vmem:[#allocation7 + $0xf4] sm:$0xf]
        %v1882 = vld [vmem:[#allocation7 + $0xf8] sm:$0xf]
        %v1883 = vld [vmem:[#allocation7 + $0xfc] sm:$0xf]
        %v1884 = vld [vmem:[%s10] sm:$0x1]
        %v1886 = vlaneseq
        %v1887 = vshrl.u32 %v1886, 7
        %v1888 = vsub.s32 0, %v1887
        %v1889 = vrot.slane %v1884, %v1888
        %v1955 = vunpack.c.l.b16 %v1820
        %v1956 = vunpack.c.l.b16 %v1821
        %v1957 = vunpack.c.l.b16 %v1822
        %v1958 = vunpack.c.l.b16 %v1823
        %v1959 = vunpack.c.l.b16 %v1824
        %v1960 = vunpack.c.l.b16 %v1825
        %v1961 = vunpack.c.l.b16 %v1826
        %v1962 = vunpack.c.l.b16 %v1827
        %v1963 = vunpack.c.l.b16 %v1828
        %v1964 = vunpack.c.l.b16 %v1829
        %v1965 = vunpack.c.l.b16 %v1830
        %v1966 = vunpack.c.l.b16 %v1831
        %v1967 = vunpack.c.l.b16 %v1832
        %v1968 = vunpack.c.l.b16 %v1833
        %v1969 = vunpack.c.l.b16 %v1834
        %v1970 = vunpack.c.l.b16 %v1835
        %v1971 = vunpack.c.l.b16 %v1836
        %v1972 = vunpack.c.l.b16 %v1837
        %v1973 = vunpack.c.l.b16 %v1838
        %v1974 = vunpack.c.l.b16 %v1839
        %v1975 = vunpack.c.l.b16 %v1840
        %v1976 = vunpack.c.l.b16 %v1841
        %v1977 = vunpack.c.l.b16 %v1842
        %v1978 = vunpack.c.l.b16 %v1843
        %v1979 = vunpack.c.l.b16 %v1844
        %v1980 = vunpack.c.l.b16 %v1845
        %v1981 = vunpack.c.l.b16 %v1846
        %v1982 = vunpack.c.l.b16 %v1847
        %v1983 = vunpack.c.l.b16 %v1848
        %v1984 = vunpack.c.l.b16 %v1849
        %v1985 = vunpack.c.l.b16 %v1850
        %v1986 = vunpack.c.l.b16 %v1851
        %v1987 = vunpack.c.l.b16 %v1852
        %v1988 = vunpack.c.l.b16 %v1853
        %v1989 = vunpack.c.l.b16 %v1854
        %v1990 = vunpack.c.l.b16 %v1855
        %v1991 = vunpack.c.l.b16 %v1856
        %v1992 = vunpack.c.l.b16 %v1857
        %v1993 = vunpack.c.l.b16 %v1858
        %v1994 = vunpack.c.l.b16 %v1859
        %v1995 = vunpack.c.l.b16 %v1860
        %v1996 = vunpack.c.l.b16 %v1861
        %v1997 = vunpack.c.l.b16 %v1862
        %v1998 = vunpack.c.l.b16 %v1863
        %v1999 = vunpack.c.l.b16 %v1864
        %v2000 = vunpack.c.l.b16 %v1865
        %v2001 = vunpack.c.l.b16 %v1866
        %v2002 = vunpack.c.l.b16 %v1867
        %v2003 = vunpack.c.l.b16 %v1868
        %v2004 = vunpack.c.l.b16 %v1869
        %v2005 = vunpack.c.l.b16 %v1870
        %v2006 = vunpack.c.l.b16 %v1871
        %v2007 = vunpack.c.l.b16 %v1872
        %v2008 = vunpack.c.l.b16 %v1873
        %v2009 = vunpack.c.l.b16 %v1874
        %v2010 = vunpack.c.l.b16 %v1875
        %v2011 = vunpack.c.l.b16 %v1876
        %v2012 = vunpack.c.l.b16 %v1877
        %v2013 = vunpack.c.l.b16 %v1878
        %v2014 = vunpack.c.l.b16 %v1879
        %v2015 = vunpack.c.l.b16 %v1880
        %v2016 = vunpack.c.l.b16 %v1881
        %v2017 = vunpack.c.l.b16 %v1882
        %v2018 = vunpack.c.l.b16 %v1883
        %v2019 = vpack.c.b16 %v1956, %v1955
        %v2020 = vpack.c.b16 %v1958, %v1957
        %v2021 = vpack.c.b16 %v1960, %v1959
        %v2022 = vpack.c.b16 %v1962, %v1961
        %v2023 = vpack.c.b16 %v1964, %v1963
        %v2024 = vpack.c.b16 %v1966, %v1965
        %v2025 = vpack.c.b16 %v1968, %v1967
        %v2026 = vpack.c.b16 %v1970, %v1969
        %v2027 = vpack.c.b16 %v1972, %v1971
        %v2028 = vpack.c.b16 %v1974, %v1973
        %v2029 = vpack.c.b16 %v1976, %v1975
        %v2030 = vpack.c.b16 %v1978, %v1977
        %v2031 = vpack.c.b16 %v1980, %v1979
        %v2032 = vpack.c.b16 %v1982, %v1981
        %v2033 = vpack.c.b16 %v1984, %v1983
        %v2034 = vpack.c.b16 %v1986, %v1985
        %v2035 = vpack.c.b16 %v1988, %v1987
        %v2036 = vpack.c.b16 %v1990, %v1989
        %v2037 = vpack.c.b16 %v1992, %v1991
        %v2038 = vpack.c.b16 %v1994, %v1993
        %v2039 = vpack.c.b16 %v1996, %v1995
        %v2040 = vpack.c.b16 %v1998, %v1997
        %v2041 = vpack.c.b16 %v2000, %v1999
        %v2042 = vpack.c.b16 %v2002, %v2001
        %v2043 = vpack.c.b16 %v2004, %v2003
        %v2044 = vpack.c.b16 %v2006, %v2005
        %v2045 = vpack.c.b16 %v2008, %v2007
        %v2046 = vpack.c.b16 %v2010, %v2009
        %v2047 = vpack.c.b16 %v2012, %v2011
        %v2048 = vpack.c.b16 %v2014, %v2013
        %v2049 = vpack.c.b16 %v2016, %v2015
        %v2050 = vpack.c.b16 %v2018, %v2017
        %2083 = vmatprep.subr.bf16.mxu0 0
        %2084 = vmatpush1.bf16.msra.mxu0 %v2019
        %2085 = vmatprep.subr.bf16.mxu0 0
        %2086 = vmatpush1.bf16.msra.mxu0 %v2020
        %2087 = vmatprep.subr.bf16.mxu0 0
        %2088 = vmatpush1.bf16.msra.mxu0 %v2021
        %2089 = vmatprep.subr.bf16.mxu0 0
        %2090 = vmatpush1.bf16.msra.mxu0 %v2022
        %2091 = vmatprep.subr.bf16.mxu0 0
        %2092 = vmatpush1.bf16.msra.mxu0 %v2023
        %2093 = vmatprep.subr.bf16.mxu0 0
        %2094 = vmatpush1.bf16.msra.mxu0 %v2024
        %2095 = vmatprep.subr.bf16.mxu0 0
        %2096 = vmatpush1.bf16.msra.mxu0 %v2025
        %2097 = vmatprep.subr.bf16.mxu0 0
        %2098 = vmatpush1.bf16.msra.mxu0 %v2026
        %2099 = vmatprep.subr.bf16.mxu0 0
        %2100 = vmatpush1.bf16.msra.mxu0 %v2027
        %2101 = vmatprep.subr.bf16.mxu0 0
        %2102 = vmatpush1.bf16.msra.mxu0 %v2028
        %2103 = vmatprep.subr.bf16.mxu0 0
        %2104 = vmatpush1.bf16.msra.mxu0 %v2029
        %2105 = vmatprep.subr.bf16.mxu0 0
        %2106 = vmatpush1.bf16.msra.mxu0 %v2030
        %2107 = vmatprep.subr.bf16.mxu0 0
        %2108 = vmatpush1.bf16.msra.mxu0 %v2031
        %2109 = vmatprep.subr.bf16.mxu0 0
        %2110 = vmatpush1.bf16.msra.mxu0 %v2032
        %2111 = vmatprep.subr.bf16.mxu0 0
        %2112 = vmatpush1.bf16.msra.mxu0 %v2033
        %2113 = vmatprep.subr.bf16.mxu0 0
        %2114 = vmatpush1.bf16.msra.mxu0 %v2034
        %2115 = vmatprep.mubr.bf16.mxu0 %v1817
        %2116 = vmatmul.mubr.bf16.gmra.mrb[0].mxu0 %v1816
        %v2117 = vpop.f32.mrb[0].mxu0
        %v2118 = vadd.f32 %v1889, %v2117
        %v2119 = vpop.f32.mrb[0].mxu0
        %v2120 = vpop.f32.mrb[0].mxu0
        %v2121 = vpop.f32.mrb[0].mxu0
        %2122 = vdwg.mxu0
        %2123 = vmatprep.subr.bf16.mxu0 0
        %2124 = vmatpush1.bf16.msra.mxu0 %v2035
        %2125 = vmatprep.subr.bf16.mxu0 0
        %2126 = vmatpush1.bf16.msra.mxu0 %v2036
        %2127 = vmatprep.subr.bf16.mxu0 0
        %2128 = vmatpush1.bf16.msra.mxu0 %v2037
        %2129 = vmatprep.subr.bf16.mxu0 0
        %2130 = vmatpush1.bf16.msra.mxu0 %v2038
        %2131 = vmatprep.subr.bf16.mxu0 0
        %2132 = vmatpush1.bf16.msra.mxu0 %v2039
        %2133 = vmatprep.subr.bf16.mxu0 0
        %2134 = vmatpush1.bf16.msra.mxu0 %v2040
        %2135 = vmatprep.subr.bf16.mxu0 0
        %2136 = vmatpush1.bf16.msra.mxu0 %v2041
        %2137 = vmatprep.subr.bf16.mxu0 0
        %2138 = vmatpush1.bf16.msra.mxu0 %v2042
        %2139 = vmatprep.subr.bf16.mxu0 0
        %2140 = vmatpush1.bf16.msra.mxu0 %v2043
        %2141 = vmatprep.subr.bf16.mxu0 0
        %2142 = vmatpush1.bf16.msra.mxu0 %v2044
        %2143 = vmatprep.subr.bf16.mxu0 0
        %2144 = vmatpush1.bf16.msra.mxu0 %v2045
        %2145 = vmatprep.subr.bf16.mxu0 0
        %2146 = vmatpush1.bf16.msra.mxu0 %v2046
        %2147 = vmatprep.subr.bf16.mxu0 0
        %2148 = vmatpush1.bf16.msra.mxu0 %v2047
        %2149 = vmatprep.subr.bf16.mxu0 0
        %2150 = vmatpush1.bf16.msra.mxu0 %v2048
        %2151 = vmatprep.subr.bf16.mxu0 0
        %2152 = vmatpush1.bf16.msra.mxu0 %v2049
        %2153 = vmatprep.subr.bf16.mxu0 0
        %2154 = vmatpush1.bf16.msra.mxu0 %v2050
        %2155 = vmatprep.mubr.bf16.mxu0 %v1819
        %2156 = vmatmul.mubr.bf16.gmra.mrb[0].mxu0 %v1818
        %v2157 = vpop.f32.mrb[0].mxu0
        %v2158 = vadd.f32 %v2118, %v2157
        %v2159 = vpop.f32.mrb[0].mxu0
        %v2160 = vpop.f32.mrb[0].mxu0
        %v2161 = vpop.f32.mrb[0].mxu0
        %2162 = vdwg.mxu0
        %v2163 = vadd.f32 %v1514, %v2158
        %v2164 = vld [vmem:[%s11] sm:$0x1]
        %v2165 = vld [vmem:[%s12] sm:$0x1]
        %2166 = vadd.xlane.f32.xlu0 %v2163
        %v2167 = vpop.xlane.xlu0 %2166
        %v2168 = vmul.f32 %v2167, %v1491
        %v2169 = vsub.f32 %v2163, %v2168
        %v2170 = vmul.f32 %v2169, %v2169
        %2171 = vadd.xlane.f32.xlu0 %v2170
        %v2172 = vpop.xlane.xlu0 %2171
        %v2173 = vmul.f32 %v2172, %v1491
        %v2174 = vadd.f32 %v2173, 1e-05
        %v2175 = vrsqrt.pop %v2174
        %v2176 = vmul.f32 %v2169, %v2175
        %v2178 = vlaneseq
        %v2179 = vshrl.u32 %v2178, 7
        %v2180 = vsub.s32 0, %v2179
        %v2181 = vrot.slane %v2164, %v2180
        %v2183 = vmul.f32 %v2176, %v2181
        %v2185 = vlaneseq
        %v2186 = vshrl.u32 %v2185, 7
        %v2187 = vsub.s32 0, %v2186
        %v2188 = vrot.slane %v2165, %v2187
        %v2190 = vadd.f32 %v2183, %v2188
        %v2191 = vpack.c.bf16 %v2190, %v2190
        %s2192 = scalar_lea.vmem [#allocation2], 192
        %v2193 = vld [vmem:[%s2192] sm:$0xff]
        %v2194 = vld [vmem:[%s2192 + $0x8] sm:$0xf]
        %v2195 = vld [vmem:[%s2192 + $0xc] sm:$0xff]
        %v2196 = vld [vmem:[%s2192 + $0x14] sm:$0xf]
        %v2197 = vld [vmem:[%s2192 + $0x18] sm:$0xff]
        %v2198 = vld [vmem:[%s2192 + $0x20] sm:$0xf]
        %v2199 = vld [vmem:[%s2192 + $0x24] sm:$0xff]
        %v2200 = vld [vmem:[%s2192 + $0x2c] sm:$0xf]
        %v2201 = vld [vmem:[%s2192 + $0x30] sm:$0xff]
        %v2202 = vld [vmem:[%s2192 + $0x38] sm:$0xf]
        %v2203 = vld [vmem:[%s2192 + $0x3c] sm:$0xff]
        %v2204 = vld [vmem:[%s2192 + $0x44] sm:$0xf]
        %v2205 = vld [vmem:[%s2192 + $0x48] sm:$0xff]
        %v2206 = vld [vmem:[%s2192 + $0x50] sm:$0xf]
        %v2207 = vld [vmem:[%s2192 + $0x54] sm:$0xff]
        %v2208 = vld [vmem:[%s2192 + $0x5c] sm:$0xf]
        %v2209 = vld [vmem:[%s2192 + $0x60] sm:$0xff]
        %v2210 = vld [vmem:[%s2192 + $0x68] sm:$0xf]
        %v2211 = vld [vmem:[%s2192 + $0x6c] sm:$0xff]
        %v2212 = vld [vmem:[%s2192 + $0x74] sm:$0xf]
        %v2213 = vld [vmem:[%s2192 + $0x78] sm:$0xff]
        %v2214 = vld [vmem:[%s2192 + $0x80] sm:$0xf]
        %v2215 = vld [vmem:[%s2192 + $0x84] sm:$0xff]
        %v2216 = vld [vmem:[%s2192 + $0x8c] sm:$0xf]
        %v2217 = vld [vmem:[%s2192 + $0x90] sm:$0xff]
        %v2218 = vld [vmem:[%s2192 + $0x98] sm:$0xf]
        %v2219 = vld [vmem:[%s2192 + $0x9c] sm:$0xff]
        %v2220 = vld [vmem:[%s2192 + $0xa4] sm:$0xf]
        %v2221 = vld [vmem:[%s2192 + $0xa8] sm:$0xff]
        %v2222 = vld [vmem:[%s2192 + $0xb0] sm:$0xf]
        %v2223 = vld [vmem:[%s2192 + $0xb4] sm:$0xff]
        %v2224 = vld [vmem:[%s2192 + $0xbc] sm:$0xf]
        %s2225 = scalar_lea.vmem %s2, 3
        %v2226 = vld [vmem:[%s2225] sm:$0x7]
        %v2228 = vlaneseq
        %v2229 = vshrl.u32 %v2228, 7
        %v2230 = vsub.s32 0, %v2229
        %v2231 = vrot.slane %v2226, %v2230
        %v2232 = vlaneseq
        %v2233 = vshrl.u32 %v2232, 7
        %v2234 = vsub.s32 1, %v2233
        %v2235 = vrot.slane %v2226, %v2234
        %v2236 = vlaneseq
        %v2237 = vshrl.u32 %v2236, 7
        %v2238 = vsub.s32 2, %v2237
        %v2239 = vrot.slane %v2226, %v2238
        %v2275 = vunpack.c.l.b16 %v2193
        %v2276 = vunpack.c.h.b16 %v2193
        %v2277 = vunpack.c.l.b16 %v2194
        %v2278 = vunpack.c.l.b16 %v2195
        %v2279 = vunpack.c.h.b16 %v2195
        %v2280 = vunpack.c.l.b16 %v2196
        %v2281 = vunpack.c.l.b16 %v2197
        %v2282 = vunpack.c.h.b16 %v2197
        %v2283 = vunpack.c.l.b16 %v2198
        %v2284 = vunpack.c.l.b16 %v2199
        %v2285 = vunpack.c.h.b16 %v2199
        %v2286 = vunpack.c.l.b16 %v2200
        %v2287 = vunpack.c.l.b16 %v2201
        %v2288 = vunpack.c.h.b16 %v2201
        %v2289 = vunpack.c.l.b16 %v2202
        %v2290 = vunpack.c.l.b16 %v2203
        %v2291 = vunpack.c.h.b16 %v2203
        %v2292 = vunpack.c.l.b16 %v2204
        %v2293 = vunpack.c.l.b16 %v2205
        %v2294 = vunpack.c.h.b16 %v2205
        %v2295 = vunpack.c.l.b16 %v2206
        %v2296 = vunpack.c.l.b16 %v2207
        %v2297 = vunpack.c.h.b16 %v2207
        %v2298 = vunpack.c.l.b16 %v2208
        %v2299 = vunpack.c.l.b16 %v2209
        %v2300 = vunpack.c.h.b16 %v2209
        %v2301 = vunpack.c.l.b16 %v2210
        %v2302 = vunpack.c.l.b16 %v2211
        %v2303 = vunpack.c.h.b16 %v2211
        %v2304 = vunpack.c.l.b16 %v2212
        %v2305 = vunpack.c.l.b16 %v2213
        %v2306 = vunpack.c.h.b16 %v2213
        %v2307 = vunpack.c.l.b16 %v2214
        %v2308 = vunpack.c.l.b16 %v2215
        %v2309 = vunpack.c.h.b16 %v2215
        %v2310 = vunpack.c.l.b16 %v2216
        %v2311 = vunpack.c.l.b16 %v2217
        %v2312 = vunpack.c.h.b16 %v2217
        %v2313 = vunpack.c.l.b16 %v2218
        %v2314 = vunpack.c.l.b16 %v2219
        %v2315 = vunpack.c.h.b16 %v2219
        %v2316 = vunpack.c.l.b16 %v2220
        %v2317 = vunpack.c.l.b16 %v2221
        %v2318 = vunpack.c.h.b16 %v2221
        %v2319 = vunpack.c.l.b16 %v2222
        %v2320 = vunpack.c.l.b16 %v2223
        %v2321 = vunpack.c.h.b16 %v2223
        %v2322 = vunpack.c.l.b16 %v2224
        %v2323 = vpack.c.b16 %v2278, %v2275
        %v2324 = vpack.c.b16 %v2279, %v2276
        %v2325 = vpack.c.b16 %v2280, %v2277
        %v2326 = vpack.c.b16 %v2284, %v2281
        %v2327 = vpack.c.b16 %v2285, %v2282
        %v2328 = vpack.c.b16 %v2286, %v2283
        %v2329 = vpack.c.b16 %v2290, %v2287
        %v2330 = vpack.c.b16 %v2291, %v2288
        %v2331 = vpack.c.b16 %v2292, %v2289
        %v2332 = vpack.c.b16 %v2296, %v2293
        %v2333 = vpack.c.b16 %v2297, %v2294
        %v2334 = vpack.c.b16 %v2298, %v2295
        %v2335 = vpack.c.b16 %v2302, %v2299
        %v2336 = vpack.c.b16 %v2303, %v2300
        %v2337 = vpack.c.b16 %v2304, %v2301
        %v2338 = vpack.c.b16 %v2308, %v2305
        %v2339 = vpack.c.b16 %v2309, %v2306
        %v2340 = vpack.c.b16 %v2310, %v2307
        %v2341 = vpack.c.b16 %v2314, %v2311
        %v2342 = vpack.c.b16 %v2315, %v2312
        %v2343 = vpack.c.b16 %v2316, %v2313
        %v2344 = vpack.c.b16 %v2320, %v2317
        %v2345 = vpack.c.b16 %v2321, %v2318
        %v2346 = vpack.c.b16 %v2322, %v2319
        %2371 = vmatprep.subr.bf16.mxu0 %v2324
        %2372 = vmatpush1.bf16.msra.mxu0 %v2323
        %2373 = vmatprep.subr.bf16.mxu0 %v2327
        %2374 = vmatpush1.bf16.msra.mxu0 %v2326
        %2375 = vmatprep.subr.bf16.mxu0 %v2330
        %2376 = vmatpush1.bf16.msra.mxu0 %v2329
        %2377 = vmatprep.subr.bf16.mxu0 %v2333
        %2378 = vmatpush1.bf16.msra.mxu0 %v2332
        %2379 = vmatprep.subr.bf16.mxu0 %v2336
        %2380 = vmatpush1.bf16.msra.mxu0 %v2335
        %2381 = vmatprep.subr.bf16.mxu0 %v2339
        %2382 = vmatpush1.bf16.msra.mxu0 %v2338
        %2383 = vmatprep.subr.bf16.mxu0 %v2342
        %2384 = vmatpush1.bf16.msra.mxu0 %v2341
        %2385 = vmatprep.subr.bf16.mxu0 %v2345
        %2386 = vmatpush1.bf16.msra.mxu0 %v2344
        %2387 = vmatprep.subr.bf16.mxu0 0
        %2388 = vmatpush1.bf16.msra.mxu0 0
        %2389 = vmatprep.subr.bf16.mxu0 0
        %2390 = vmatpush1.bf16.msra.mxu0 0
        %2391 = vmatprep.subr.bf16.mxu0 0
        %2392 = vmatpush1.bf16.msra.mxu0 0
        %2393 = vmatprep.subr.bf16.mxu0 0
        %2394 = vmatpush1.bf16.msra.mxu0 0
        %2395 = vmatprep.subr.bf16.mxu0 0
        %2396 = vmatpush1.bf16.msra.mxu0 0
        %2397 = vmatprep.subr.bf16.mxu0 0
        %2398 = vmatpush1.bf16.msra.mxu0 0
        %2399 = vmatprep.subr.bf16.mxu0 0
        %2400 = vmatpush1.bf16.msra.mxu0 0
        %2401 = vmatprep.subr.bf16.mxu0 0
        %2402 = vmatpush1.bf16.msra.mxu0 0
        %2403 = vmatprep.mubr.bf16.mxu0 0
        %2404 = vmatmul.mubr.bf16.gmra.mrb[0].mxu0 %v2191
        %v2405 = vpop.f32.mrb[0].mxu0
        %v2406 = vadd.f32 %v2231, %v2405
        %v2407 = vpop.f32.mrb[0].mxu0
        %v2408 = vadd.f32 %v2235, %v2407
        %v2409 = vpop.f32.mrb[0].mxu0
        %v2410 = vpop.f32.mrb[0].mxu0
        %2411 = vdwg.mxu0
        %2412 = vmatprep.subr.bf16.mxu0 0
        %2413 = vmatpush1.bf16.msra.mxu0 %v2325
        %2414 = vmatprep.subr.bf16.mxu0 0
        %2415 = vmatpush1.bf16.msra.mxu0 %v2328
        %2416 = vmatprep.subr.bf16.mxu0 0
        %2417 = vmatpush1.bf16.msra.mxu0 %v2331
        %2418 = vmatprep.subr.bf16.mxu0 0
        %2419 = vmatpush1.bf16.msra.mxu0 %v2334
        %2420 = vmatprep.subr.bf16.mxu0 0
        %2421 = vmatpush1.bf16.msra.mxu0 %v2337
        %2422 = vmatprep.subr.bf16.mxu0 0
        %2423 = vmatpush1.bf16.msra.mxu0 %v2340
        %2424 = vmatprep.subr.bf16.mxu0 0
        %2425 = vmatpush1.bf16.msra.mxu0 %v2343
        %2426 = vmatprep.subr.bf16.mxu0 0
        %2427 = vmatpush1.bf16.msra.mxu0 %v2346
        %2428 = vmatprep.subr.bf16.mxu0 0
        %2429 = vmatpush1.bf16.msra.mxu0 0
        %2430 = vmatprep.subr.bf16.mxu0 0
        %2431 = vmatpush1.bf16.msra.mxu0 0
        %2432 = vmatprep.subr.bf16.mxu0 0
        %2433 = vmatpush1.bf16.msra.mxu0 0
        %2434 = vmatprep.subr.bf16.mxu0 0
        %2435 = vmatpush1.bf16.msra.mxu0 0
        %2436 = vmatprep.subr.bf16.mxu0 0
        %2437 = vmatpush1.bf16.msra.mxu0 0
        %2438 = vmatprep.subr.bf16.mxu0 0
        %2439 = vmatpush1.bf16.msra.mxu0 0
        %2440 = vmatprep.subr.bf16.mxu0 0
        %2441 = vmatpush1.bf16.msra.mxu0 0
        %2442 = vmatprep.subr.bf16.mxu0 0
        %2443 = vmatpush1.bf16.msra.mxu0 0
        %2444 = vmatprep.mubr.bf16.mxu0 0
        %2445 = vmatmul.mubr.bf16.gmra.mrb[0].mxu0 %v2191
        %v2446 = vpop.f32.mrb[0].mxu0
        %v2447 = vadd.f32 %v2239, %v2446
        %v2448 = vpop.f32.mrb[0].mxu0
        %v2449 = vpop.f32.mrb[0].mxu0
        %v2450 = vpop.f32.mrb[0].mxu0
        %2451 = vdwg.mxu0
        %v2453 = vsel %vm800, %v2406, 0
        %v2456 = vsel %vm800, %v2408, 0
        %2458 = vmatprep.subr.mxu0 0.0
        %2459 = vmatpush1.xpose.msra.mxu0 %v2456
        %2460 = vmatprep.subr.mxu0 0.0
        %2461 = vmatpush1.xpose.msra.mxu0 0.0
        %2462 = vmatprep.subr.mxu0 0.0
        %2463 = vmatpush1.xpose.msra.mxu0 0.0
        %2464 = vmatprep.subr.mxu0 0.0
        %2465 = vmatpush1.xpose.msra.mxu0 0.0
        %2466 = vmatprep.subr.mxu0 0.0
        %2467 = vmatpush1.xpose.msra.mxu0 0.0
        %2468 = vmatprep.subr.mxu0 0.0
        %2469 = vmatpush1.xpose.msra.mxu0 0.0
        %2470 = vmatprep.subr.mxu0 0.0
        %2471 = vmatpush1.xpose.msra.mxu0 0.0
        %2472 = vmatprep.subr.mxu0 0.0
        %2473 = vmatpush1.xpose.msra.mxu0 0.0
        %2474 = vmatprep.subr.mxu0 0.0
        %2475 = vmatpush1.xpose.msra.mxu0 0.0
        %2476 = vmatprep.subr.mxu0 0.0
        %2477 = vmatpush1.xpose.msra.mxu0 0.0
        %2478 = vmatprep.subr.mxu0 0.0
        %2479 = vmatpush1.xpose.msra.mxu0 0.0
        %2480 = vmatprep.subr.mxu0 0.0
        %2481 = vmatpush1.xpose.msra.mxu0 0.0
        %2482 = vmatprep.subr.mxu0 0.0
        %2483 = vmatpush1.xpose.msra.mxu0 0.0
        %2484 = vmatprep.subr.mxu0 0.0
        %2485 = vmatpush1.xpose.msra.mxu0 0.0
        %2486 = vmatprep.subr.mxu0 0.0
        %2487 = vmatpush1.xpose.msra.mxu0 0.0
        %2488 = vmatprep.subr.mxu0 0.0
        %2489 = vmatpush1.xpose.msra.mxu0 0.0
        %2490 = vmatprep.subr.mxu0 0.0
        %2491 = vmatpush1.xpose.msra.mxu0 0.0
        %2492 = vmatprep.subr.mxu0 0.0
        %2493 = vmatpush1.xpose.msra.mxu0 0.0
        %2494 = vmatprep.subr.mxu0 0.0
        %2495 = vmatpush1.xpose.msra.mxu0 0.0
        %2496 = vmatprep.subr.mxu0 0.0
        %2497 = vmatpush1.xpose.msra.mxu0 0.0
        %2498 = vmatprep.subr.mxu0 0.0
        %2499 = vmatpush1.xpose.msra.mxu0 0.0
        %2500 = vmatprep.subr.mxu0 0.0
        %2501 = vmatpush1.xpose.msra.mxu0 0.0
        %2502 = vmatprep.subr.mxu0 0.0
        %2503 = vmatpush1.xpose.msra.mxu0 0.0
        %2504 = vmatprep.subr.mxu0 0.0
        %2505 = vmatpush1.xpose.msra.mxu0 0.0
        %2506 = vmatprep.subr.mxu0 0.0
        %2507 = vmatpush1.xpose.msra.mxu0 0.0
        %2508 = vmatprep.subr.mxu0 0.0
        %2509 = vmatpush1.xpose.msra.mxu0 0.0
        %2510 = vmatprep.subr.mxu0 0.0
        %2511 = vmatpush1.xpose.msra.mxu0 0.0
        %2512 = vmatprep.subr.mxu0 0.0
        %2513 = vmatpush1.xpose.msra.mxu0 0.0
        %2514 = vmatprep.subr.mxu0 0.0
        %2515 = vmatpush1.xpose.msra.mxu0 0.0
        %2516 = vmatprep.subr.mxu0 0.0
        %2517 = vmatpush1.xpose.msra.mxu0 0.0
        %2518 = vmatprep.subr.mxu0 0.0
        %2519 = vmatpush1.xpose.msra.mxu0 0.0
        %2520 = vmatprep.subr.mxu0 0.0
        %2521 = vmatpush1.xpose.msra.mxu0 0.0
        %2522 = vmatprep.mubr.f32.mxu0 0.0
        %2523 = vmatmul.mubr.f32.gmra.mrb[0].mxu0 %v2453
        %v2524 = vpop.f32.mrb[0].mxu0
        %v2525 = vadd.f32 0.0, %v2524
        %v2526 = vpop.f32.mrb[0].mxu0
        %2527 = vdwg.mxu0
        %v2528 = vsel %vm540, %v2525, -1e+30
        %v2529 = vsel %vm878, %v2528, -inf
        %2530 = vmax.xlane.f32.xlu0 %v2529
        %v2531 = vpop.xlane.xlu0 %2530
        %v2532 = vsub.f32 %v2528, %v2531
        %v2533 = vmul.f32 %v2532, 1.442695
        %v2534 = vpow.pop %v2533
        %v2535 = vsel %vm878, %v2534, 0.0
        %2536 = vadd.xlane.f32.xlu0 %v2535
        %v2537 = vpop.xlane.xlu0 %2536
        %v2538 = vrcp.pop %v2537
        %v2539 = vmul.f32 %v2534, %v2538
        %v2540 = vpack.c.bf16 %v2539, %v2539
        %v2541 = vpack.c.bf16 %v2447, %v2447
        %v2543 = vsel %vm878, %v2540, 0
        %v2546 = vsel %vm895, %v2541, 0
        %2548 = vmatprep.subr.bf16.mxu0 0
        %2549 = vmatpush1.bf16.msra.mxu0 %v2546
        %2550 = vmatprep.subr.bf16.mxu0 0
        %2551 = vmatpush1.bf16.msra.mxu0 0
        %2552 = vmatprep.subr.bf16.mxu0 0
        %2553 = vmatpush1.bf16.msra.mxu0 0
        %2554 = vmatprep.subr.bf16.mxu0 0
        %2555 = vmatpush1.bf16.msra.mxu0 0
        %2556 = vmatprep.subr.bf16.mxu0 0
        %2557 = vmatpush1.bf16.msra.mxu0 0
        %2558 = vmatprep.subr.bf16.mxu0 0
        %2559 = vmatpush1.bf16.msra.mxu0 0
        %2560 = vmatprep.subr.bf16.mxu0 0
        %2561 = vmatpush1.bf16.msra.mxu0 0
        %2562 = vmatprep.subr.bf16.mxu0 0
        %2563 = vmatpush1.bf16.msra.mxu0 0
        %2564 = vmatprep.subr.bf16.mxu0 0
        %2565 = vmatpush1.bf16.msra.mxu0 0
        %2566 = vmatprep.subr.bf16.mxu0 0
        %2567 = vmatpush1.bf16.msra.mxu0 0
        %2568 = vmatprep.subr.bf16.mxu0 0
        %2569 = vmatpush1.bf16.msra.mxu0 0
        %2570 = vmatprep.subr.bf16.mxu0 0
        %2571 = vmatpush1.bf16.msra.mxu0 0
        %2572 = vmatprep.subr.bf16.mxu0 0
        %2573 = vmatpush1.bf16.msra.mxu0 0
        %2574 = vmatprep.subr.bf16.mxu0 0
        %2575 = vmatpush1.bf16.msra.mxu0 0
        %2576 = vmatprep.subr.bf16.mxu0 0
        %2577 = vmatpush1.bf16.msra.mxu0 0
        %2578 = vmatprep.subr.bf16.mxu0 0
        %2579 = vmatpush1.bf16.msra.mxu0 0
        %2580 = vmatprep.mubr.bf16.mxu0 0
        %2581 = vmatmul.mubr.bf16.gmra.mrb[0].mxu0 %v2543
        %v2582 = vpop.f32.mrb[0].mxu0
        %v2583 = vadd.f32 0.0, %v2582
        %v2584 = vpop.f32.mrb[0].mxu0
        %v2585 = vpop.f32.mrb[0].mxu0
        %v2586 = vpop.f32.mrb[0].mxu0
        %2587 = vdwg.mxu0
        %2588 = vrot.lane.b32.xlu0 %v2406, 96
        %v2589 = vpop.permute.xlu0 %2588
        %2590 = vrot.lane.b32.xlu0 %v2408, 96
        %v2591 = vpop.permute.xlu0 %2590
        %v2592 = vsel %vm800, %v2589, 0
        %v2594 = vsel %vm800, %v2591, 0
        %2596 = vmatprep.subr.mxu0 0.0
        %2597 = vmatpush1.xpose.msra.mxu0 %v2594
        %2598 = vmatprep.subr.mxu0 0.0
        %2599 = vmatpush1.xpose.msra.mxu0 0.0
        %2600 = vmatprep.subr.mxu0 0.0
        %2601 = vmatpush1.xpose.msra.mxu0 0.0
        %2602 = vmatprep.subr.mxu0 0.0
        %2603 = vmatpush1.xpose.msra.mxu0 0.0
        %2604 = vmatprep.subr.mxu0 0.0
        %2605 = vmatpush1.xpose.msra.mxu0 0.0
        %2606 = vmatprep.subr.mxu0 0.0
        %2607 = vmatpush1.xpose.msra.mxu0 0.0
        %2608 = vmatprep.subr.mxu0 0.0
        %2609 = vmatpush1.xpose.msra.mxu0 0.0
        %2610 = vmatprep.subr.mxu0 0.0
        %2611 = vmatpush1.xpose.msra.mxu0 0.0
        %2612 = vmatprep.subr.mxu0 0.0
        %2613 = vmatpush1.xpose.msra.mxu0 0.0
        %2614 = vmatprep.subr.mxu0 0.0
        %2615 = vmatpush1.xpose.msra.mxu0 0.0
        %2616 = vmatprep.subr.mxu0 0.0
        %2617 = vmatpush1.xpose.msra.mxu0 0.0
        %2618 = vmatprep.subr.mxu0 0.0
        %2619 = vmatpush1.xpose.msra.mxu0 0.0
        %2620 = vmatprep.subr.mxu0 0.0
        %2621 = vmatpush1.xpose.msra.mxu0 0.0
        %2622 = vmatprep.subr.mxu0 0.0
        %2623 = vmatpush1.xpose.msra.mxu0 0.0
        %2624 = vmatprep.subr.mxu0 0.0
        %2625 = vmatpush1.xpose.msra.mxu0 0.0
        %2626 = vmatprep.subr.mxu0 0.0
        %2627 = vmatpush1.xpose.msra.mxu0 0.0
        %2628 = vmatprep.subr.mxu0 0.0
        %2629 = vmatpush1.xpose.msra.mxu0 0.0
        %2630 = vmatprep.subr.mxu0 0.0
        %2631 = vmatpush1.xpose.msra.mxu0 0.0
        %2632 = vmatprep.subr.mxu0 0.0
        %2633 = vmatpush1.xpose.msra.mxu0 0.0
        %2634 = vmatprep.subr.mxu0 0.0
        %2635 = vmatpush1.xpose.msra.mxu0 0.0
        %2636 = vmatprep.subr.mxu0 0.0
        %2637 = vmatpush1.xpose.msra.mxu0 0.0
        %2638 = vmatprep.subr.mxu0 0.0
        %2639 = vmatpush1.xpose.msra.mxu0 0.0
        %2640 = vmatprep.subr.mxu0 0.0
        %2641 = vmatpush1.xpose.msra.mxu0 0.0
        %2642 = vmatprep.subr.mxu0 0.0
        %2643 = vmatpush1.xpose.msra.mxu0 0.0
        %2644 = vmatprep.subr.mxu0 0.0
        %2645 = vmatpush1.xpose.msra.mxu0 0.0
        %2646 = vmatprep.subr.mxu0 0.0
        %2647 = vmatpush1.xpose.msra.mxu0 0.0
        %2648 = vmatprep.subr.mxu0 0.0
        %2649 = vmatpush1.xpose.msra.mxu0 0.0
        %2650 = vmatprep.subr.mxu0 0.0
        %2651 = vmatpush1.xpose.msra.mxu0 0.0
        %2652 = vmatprep.subr.mxu0 0.0
        %2653 = vmatpush1.xpose.msra.mxu0 0.0
        %2654 = vmatprep.subr.mxu0 0.0
        %2655 = vmatpush1.xpose.msra.mxu0 0.0
        %2656 = vmatprep.subr.mxu0 0.0
        %2657 = vmatpush1.xpose.msra.mxu0 0.0
        %2658 = vmatprep.subr.mxu0 0.0
        %2659 = vmatpush1.xpose.msra.mxu0 0.0
        %2660 = vmatprep.mubr.f32.mxu0 0.0
        %2661 = vmatmul.mubr.f32.gmra.mrb[0].mxu0 %v2592
        %v2662 = vpop.f32.mrb[0].mxu0
        %v2663 = vadd.f32 0.0, %v2662
        %v2664 = vpop.f32.mrb[0].mxu0
        %2665 = vdwg.mxu0
        %v2666 = vsel %vm540, %v2663, -1e+30
        %v2667 = vsel %vm878, %v2666, -inf
        %2668 = vmax.xlane.f32.xlu0 %v2667
        %v2669 = vpop.xlane.xlu0 %2668
        %v2670 = vsub.f32 %v2666, %v2669
        %v2671 = vmul.f32 %v2670, 1.442695
        %v2672 = vpow.pop %v2671
        %v2673 = vsel %vm878, %v2672, 0.0
        %2674 = vadd.xlane.f32.xlu0 %v2673
        %v2675 = vpop.xlane.xlu0 %2674
        %v2676 = vrcp.pop %v2675
        %v2677 = vmul.f32 %v2672, %v2676
        %v2678 = vpack.c.bf16 %v2677, %v2677
        %2680 = vrot.lane.b32.xlu0 %v2541, 96
        %v2681 = vpop.permute.xlu0 %2680
        %v2683 = vsel %vm878, %v2678, 0
        %v2686 = vsel %vm895, %v2681, 0
        %2688 = vmatprep.subr.bf16.mxu0 0
        %2689 = vmatpush1.bf16.msra.mxu0 %v2686
        %2690 = vmatprep.subr.bf16.mxu0 0
        %2691 = vmatpush1.bf16.msra.mxu0 0
        %2692 = vmatprep.subr.bf16.mxu0 0
        %2693 = vmatpush1.bf16.msra.mxu0 0
        %2694 = vmatprep.subr.bf16.mxu0 0
        %2695 = vmatpush1.bf16.msra.mxu0 0
        %2696 = vmatprep.subr.bf16.mxu0 0
        %2697 = vmatpush1.bf16.msra.mxu0 0
        %2698 = vmatprep.subr.bf16.mxu0 0
        %2699 = vmatpush1.bf16.msra.mxu0 0
        %2700 = vmatprep.subr.bf16.mxu0 0
        %2701 = vmatpush1.bf16.msra.mxu0 0
        %2702 = vmatprep.subr.bf16.mxu0 0
        %2703 = vmatpush1.bf16.msra.mxu0 0
        %2704 = vmatprep.subr.bf16.mxu0 0
        %2705 = vmatpush1.bf16.msra.mxu0 0
        %2706 = vmatprep.subr.bf16.mxu0 0
        %2707 = vmatpush1.bf16.msra.mxu0 0
        %2708 = vmatprep.subr.bf16.mxu0 0
        %2709 = vmatpush1.bf16.msra.mxu0 0
        %2710 = vmatprep.subr.bf16.mxu0 0
        %2711 = vmatpush1.bf16.msra.mxu0 0
        %2712 = vmatprep.subr.bf16.mxu0 0
        %2713 = vmatpush1.bf16.msra.mxu0 0
        %2714 = vmatprep.subr.bf16.mxu0 0
        %2715 = vmatpush1.bf16.msra.mxu0 0
        %2716 = vmatprep.subr.bf16.mxu0 0
        %2717 = vmatpush1.bf16.msra.mxu0 0
        %2718 = vmatprep.subr.bf16.mxu0 0
        %2719 = vmatpush1.bf16.msra.mxu0 0
        %2720 = vmatprep.mubr.bf16.mxu0 0
        %2721 = vmatmul.mubr.bf16.gmra.mrb[0].mxu0 %v2683
        %v2722 = vpop.f32.mrb[0].mxu0
        %v2723 = vadd.f32 0.0, %v2722
        %v2724 = vpop.f32.mrb[0].mxu0
        %v2725 = vpop.f32.mrb[0].mxu0
        %v2726 = vpop.f32.mrb[0].mxu0
        %2727 = vdwg.mxu0
        %2728 = vrot.lane.b32.xlu0 %v2406, 64
        %v2729 = vpop.permute.xlu0 %2728
        %2730 = vrot.lane.b32.xlu0 %v2408, 64
        %v2731 = vpop.permute.xlu0 %2730
        %v2732 = vsel %vm800, %v2729, 0
        %v2734 = vsel %vm800, %v2731, 0
        %2736 = vmatprep.subr.mxu0 0.0
        %2737 = vmatpush1.xpose.msra.mxu0 %v2734
        %2738 = vmatprep.subr.mxu0 0.0
        %2739 = vmatpush1.xpose.msra.mxu0 0.0
        %2740 = vmatprep.subr.mxu0 0.0
        %2741 = vmatpush1.xpose.msra.mxu0 0.0
        %2742 = vmatprep.subr.mxu0 0.0
        %2743 = vmatpush1.xpose.msra.mxu0 0.0
        %2744 = vmatprep.subr.mxu0 0.0
        %2745 = vmatpush1.xpose.msra.mxu0 0.0
        %2746 = vmatprep.subr.mxu0 0.0
        %2747 = vmatpush1.xpose.msra.mxu0 0.0
        %2748 = vmatprep.subr.mxu0 0.0
        %2749 = vmatpush1.xpose.msra.mxu0 0.0
        %2750 = vmatprep.subr.mxu0 0.0
        %2751 = vmatpush1.xpose.msra.mxu0 0.0
        %2752 = vmatprep.subr.mxu0 0.0
        %2753 = vmatpush1.xpose.msra.mxu0 0.0
        %2754 = vmatprep.subr.mxu0 0.0
        %2755 = vmatpush1.xpose.msra.mxu0 0.0
        %2756 = vmatprep.subr.mxu0 0.0
        %2757 = vmatpush1.xpose.msra.mxu0 0.0
        %2758 = vmatprep.subr.mxu0 0.0
        %2759 = vmatpush1.xpose.msra.mxu0 0.0
        %2760 = vmatprep.subr.mxu0 0.0
        %2761 = vmatpush1.xpose.msra.mxu0 0.0
        %2762 = vmatprep.subr.mxu0 0.0
        %2763 = vmatpush1.xpose.msra.mxu0 0.0
        %2764 = vmatprep.subr.mxu0 0.0
        %2765 = vmatpush1.xpose.msra.mxu0 0.0
        %2766 = vmatprep.subr.mxu0 0.0
        %2767 = vmatpush1.xpose.msra.mxu0 0.0
        %2768 = vmatprep.subr.mxu0 0.0
        %2769 = vmatpush1.xpose.msra.mxu0 0.0
        %2770 = vmatprep.subr.mxu0 0.0
        %2771 = vmatpush1.xpose.msra.mxu0 0.0
        %2772 = vmatprep.subr.mxu0 0.0
        %2773 = vmatpush1.xpose.msra.mxu0 0.0
        %2774 = vmatprep.subr.mxu0 0.0
        %2775 = vmatpush1.xpose.msra.mxu0 0.0
        %2776 = vmatprep.subr.mxu0 0.0
        %2777 = vmatpush1.xpose.msra.mxu0 0.0
        %2778 = vmatprep.subr.mxu0 0.0
        %2779 = vmatpush1.xpose.msra.mxu0 0.0
        %2780 = vmatprep.subr.mxu0 0.0
        %2781 = vmatpush1.xpose.msra.mxu0 0.0
        %2782 = vmatprep.subr.mxu0 0.0
        %2783 = vmatpush1.xpose.msra.mxu0 0.0
        %2784 = vmatprep.subr.mxu0 0.0
        %2785 = vmatpush1.xpose.msra.mxu0 0.0
        %2786 = vmatprep.subr.mxu0 0.0
        %2787 = vmatpush1.xpose.msra.mxu0 0.0
        %2788 = vmatprep.subr.mxu0 0.0
        %2789 = vmatpush1.xpose.msra.mxu0 0.0
        %2790 = vmatprep.subr.mxu0 0.0
        %2791 = vmatpush1.xpose.msra.mxu0 0.0
        %2792 = vmatprep.subr.mxu0 0.0
        %2793 = vmatpush1.xpose.msra.mxu0 0.0
        %2794 = vmatprep.subr.mxu0 0.0
        %2795 = vmatpush1.xpose.msra.mxu0 0.0
        %2796 = vmatprep.subr.mxu0 0.0
        %2797 = vmatpush1.xpose.msra.mxu0 0.0
        %2798 = vmatprep.subr.mxu0 0.0
        %2799 = vmatpush1.xpose.msra.mxu0 0.0
        %2800 = vmatprep.mubr.f32.mxu0 0.0
        %2801 = vmatmul.mubr.f32.gmra.mrb[0].mxu0 %v2732
        %v2802 = vpop.f32.mrb[0].mxu0
        %v2803 = vadd.f32 0.0, %v2802
        %v2804 = vpop.f32.mrb[0].mxu0
        %2805 = vdwg.mxu0
        %v2806 = vsel %vm540, %v2803, -1e+30
        %v2807 = vsel %vm878, %v2806, -inf
        %2808 = vmax.xlane.f32.xlu0 %v2807
        %v2809 = vpop.xlane.xlu0 %2808
        %v2810 = vsub.f32 %v2806, %v2809
        %v2811 = vmul.f32 %v2810, 1.442695
        %v2812 = vpow.pop %v2811
        %v2813 = vsel %vm878, %v2812, 0.0
        %2814 = vadd.xlane.f32.xlu0 %v2813
        %v2815 = vpop.xlane.xlu0 %2814
        %v2816 = vrcp.pop %v2815
        %v2817 = vmul.f32 %v2812, %v2816
        %v2818 = vpack.c.bf16 %v2817, %v2817
        %2819 = vrot.lane.b32.xlu0 %v2541, 64
        %v2820 = vpop.permute.xlu0 %2819
        %v2822 = vsel %vm878, %v2818, 0
        %v2825 = vsel %vm895, %v2820, 0
        %2827 = vmatprep.subr.bf16.mxu0 0
        %2828 = vmatpush1.bf16.msra.mxu0 %v2825
        %2829 = vmatprep.subr.bf16.mxu0 0
        %2830 = vmatpush1.bf16.msra.mxu0 0
        %2831 = vmatprep.subr.bf16.mxu0 0
        %2832 = vmatpush1.bf16.msra.mxu0 0
        %2833 = vmatprep.subr.bf16.mxu0 0
        %2834 = vmatpush1.bf16.msra.mxu0 0
        %2835 = vmatprep.subr.bf16.mxu0 0
        %2836 = vmatpush1.bf16.msra.mxu0 0
        %2837 = vmatprep.subr.bf16.mxu0 0
        %2838 = vmatpush1.bf16.msra.mxu0 0
        %2839 = vmatprep.subr.bf16.mxu0 0
        %2840 = vmatpush1.bf16.msra.mxu0 0
        %2841 = vmatprep.subr.bf16.mxu0 0
        %2842 = vmatpush1.bf16.msra.mxu0 0
        %2843 = vmatprep.subr.bf16.mxu0 0
        %2844 = vmatpush1.bf16.msra.mxu0 0
        %2845 = vmatprep.subr.bf16.mxu0 0
        %2846 = vmatpush1.bf16.msra.mxu0 0
        %2847 = vmatprep.subr.bf16.mxu0 0
        %2848 = vmatpush1.bf16.msra.mxu0 0
        %2849 = vmatprep.subr.bf16.mxu0 0
        %2850 = vmatpush1.bf16.msra.mxu0 0
        %2851 = vmatprep.subr.bf16.mxu0 0
        %2852 = vmatpush1.bf16.msra.mxu0 0
        %2853 = vmatprep.subr.bf16.mxu0 0
        %2854 = vmatpush1.bf16.msra.mxu0 0
        %2855 = vmatprep.subr.bf16.mxu0 0
        %2856 = vmatpush1.bf16.msra.mxu0 0
        %2857 = vmatprep.subr.bf16.mxu0 0
        %2858 = vmatpush1.bf16.msra.mxu0 0
        %2859 = vmatprep.mubr.bf16.mxu0 0
        %2860 = vmatmul.mubr.bf16.gmra.mrb[0].mxu0 %v2822
        %v2861 = vpop.f32.mrb[0].mxu0
        %v2862 = vadd.f32 0.0, %v2861
        %v2863 = vpop.f32.mrb[0].mxu0
        %v2864 = vpop.f32.mrb[0].mxu0
        %v2865 = vpop.f32.mrb[0].mxu0
        %2866 = vdwg.mxu0
        %2867 = vrot.lane.b32.xlu0 %v2406, 32
        %v2868 = vpop.permute.xlu0 %2867
        %2869 = vrot.lane.b32.xlu0 %v2408, 32
        %v2870 = vpop.permute.xlu0 %2869
        %v2871 = vsel %vm800, %v2868, 0
        %v2873 = vsel %vm800, %v2870, 0
        %2875 = vmatprep.subr.mxu0 0.0
        %2876 = vmatpush1.xpose.msra.mxu0 %v2873
        %2877 = vmatprep.subr.mxu0 0.0
        %2878 = vmatpush1.xpose.msra.mxu0 0.0
        %2879 = vmatprep.subr.mxu0 0.0
        %2880 = vmatpush1.xpose.msra.mxu0 0.0
        %2881 = vmatprep.subr.mxu0 0.0
        %2882 = vmatpush1.xpose.msra.mxu0 0.0
        %2883 = vmatprep.subr.mxu0 0.0
        %2884 = vmatpush1.xpose.msra.mxu0 0.0
        %2885 = vmatprep.subr.mxu0 0.0
        %2886 = vmatpush1.xpose.msra.mxu0 0.0
        %2887 = vmatprep.subr.mxu0 0.0
        %2888 = vmatpush1.xpose.msra.mxu0 0.0
        %2889 = vmatprep.subr.mxu0 0.0
        %2890 = vmatpush1.xpose.msra.mxu0 0.0
        %2891 = vmatprep.subr.mxu0 0.0
        %2892 = vmatpush1.xpose.msra.mxu0 0.0
        %2893 = vmatprep.subr.mxu0 0.0
        %2894 = vmatpush1.xpose.msra.mxu0 0.0
        %2895 = vmatprep.subr.mxu0 0.0
        %2896 = vmatpush1.xpose.msra.mxu0 0.0
        %2897 = vmatprep.subr.mxu0 0.0
        %2898 = vmatpush1.xpose.msra.mxu0 0.0
        %2899 = vmatprep.subr.mxu0 0.0
        %2900 = vmatpush1.xpose.msra.mxu0 0.0
        %2901 = vmatprep.subr.mxu0 0.0
        %2902 = vmatpush1.xpose.msra.mxu0 0.0
        %2903 = vmatprep.subr.mxu0 0.0
        %2904 = vmatpush1.xpose.msra.mxu0 0.0
        %2905 = vmatprep.subr.mxu0 0.0
        %2906 = vmatpush1.xpose.msra.mxu0 0.0
        %2907 = vmatprep.subr.mxu0 0.0
        %2908 = vmatpush1.xpose.msra.mxu0 0.0
        %2909 = vmatprep.subr.mxu0 0.0
        %2910 = vmatpush1.xpose.msra.mxu0 0.0
        %2911 = vmatprep.subr.mxu0 0.0
        %2912 = vmatpush1.xpose.msra.mxu0 0.0
        %2913 = vmatprep.subr.mxu0 0.0
        %2914 = vmatpush1.xpose.msra.mxu0 0.0
        %2915 = vmatprep.subr.mxu0 0.0
        %2916 = vmatpush1.xpose.msra.mxu0 0.0
        %2917 = vmatprep.subr.mxu0 0.0
        %2918 = vmatpush1.xpose.msra.mxu0 0.0
        %2919 = vmatprep.subr.mxu0 0.0
        %2920 = vmatpush1.xpose.msra.mxu0 0.0
        %2921 = vmatprep.subr.mxu0 0.0
        %2922 = vmatpush1.xpose.msra.mxu0 0.0
        %2923 = vmatprep.subr.mxu0 0.0
        %2924 = vmatpush1.xpose.msra.mxu0 0.0
        %2925 = vmatprep.subr.mxu0 0.0
        %2926 = vmatpush1.xpose.msra.mxu0 0.0
        %2927 = vmatprep.subr.mxu0 0.0
        %2928 = vmatpush1.xpose.msra.mxu0 0.0
        %2929 = vmatprep.subr.mxu0 0.0
        %2930 = vmatpush1.xpose.msra.mxu0 0.0
        %2931 = vmatprep.subr.mxu0 0.0
        %2932 = vmatpush1.xpose.msra.mxu0 0.0
        %2933 = vmatprep.subr.mxu0 0.0
        %2934 = vmatpush1.xpose.msra.mxu0 0.0
        %2935 = vmatprep.subr.mxu0 0.0
        %2936 = vmatpush1.xpose.msra.mxu0 0.0
        %2937 = vmatprep.subr.mxu0 0.0
        %2938 = vmatpush1.xpose.msra.mxu0 0.0
        %2939 = vmatprep.mubr.f32.mxu0 0.0
        %2940 = vmatmul.mubr.f32.gmra.mrb[0].mxu0 %v2871
        %v2941 = vpop.f32.mrb[0].mxu0
        %v2942 = vadd.f32 0.0, %v2941
        %v2943 = vpop.f32.mrb[0].mxu0
        %2944 = vdwg.mxu0
        %v2945 = vsel %vm540, %v2942, -1e+30
        %v2946 = vsel %vm878, %v2945, -inf
        %2947 = vmax.xlane.f32.xlu0 %v2946
        %v2948 = vpop.xlane.xlu0 %2947
        %v2949 = vsub.f32 %v2945, %v2948
        %v2950 = vmul.f32 %v2949, 1.442695
        %v2951 = vpow.pop %v2950
        %v2952 = vsel %vm878, %v2951, 0.0
        %2953 = vadd.xlane.f32.xlu0 %v2952
        %v2954 = vpop.xlane.xlu0 %2953
        %v2955 = vrcp.pop %v2954
        %v2956 = vmul.f32 %v2951, %v2955
        %v2957 = vpack.c.bf16 %v2956, %v2956
        %2958 = vrot.lane.b32.xlu0 %v2541, 32
        %v2959 = vpop.permute.xlu0 %2958
        %v2961 = vsel %vm878, %v2957, 0
        %v2964 = vsel %vm895, %v2959, 0
        %2966 = vmatprep.subr.bf16.mxu0 0
        %2967 = vmatpush1.bf16.msra.mxu0 %v2964
        %2968 = vmatprep.subr.bf16.mxu0 0
        %2969 = vmatpush1.bf16.msra.mxu0 0
        %2970 = vmatprep.subr.bf16.mxu0 0
        %2971 = vmatpush1.bf16.msra.mxu0 0
        %2972 = vmatprep.subr.bf16.mxu0 0
        %2973 = vmatpush1.bf16.msra.mxu0 0
        %2974 = vmatprep.subr.bf16.mxu0 0
        %2975 = vmatpush1.bf16.msra.mxu0 0
        %2976 = vmatprep.subr.bf16.mxu0 0
        %2977 = vmatpush1.bf16.msra.mxu0 0
        %2978 = vmatprep.subr.bf16.mxu0 0
        %2979 = vmatpush1.bf16.msra.mxu0 0
        %2980 = vmatprep.subr.bf16.mxu0 0
        %2981 = vmatpush1.bf16.msra.mxu0 0
        %2982 = vmatprep.subr.bf16.mxu0 0
        %2983 = vmatpush1.bf16.msra.mxu0 0
        %2984 = vmatprep.subr.bf16.mxu0 0
        %2985 = vmatpush1.bf16.msra.mxu0 0
        %2986 = vmatprep.subr.bf16.mxu0 0
        %2987 = vmatpush1.bf16.msra.mxu0 0
        %2988 = vmatprep.subr.bf16.mxu0 0
        %2989 = vmatpush1.bf16.msra.mxu0 0
        %2990 = vmatprep.subr.bf16.mxu0 0
        %2991 = vmatpush1.bf16.msra.mxu0 0
        %2992 = vmatprep.subr.bf16.mxu0 0
        %2993 = vmatpush1.bf16.msra.mxu0 0
        %2994 = vmatprep.subr.bf16.mxu0 0
        %2995 = vmatpush1.bf16.msra.mxu0 0
        %2996 = vmatprep.subr.bf16.mxu0 0
        %2997 = vmatpush1.bf16.msra.mxu0 0
        %2998 = vmatprep.mubr.bf16.mxu0 0
        %2999 = vmatmul.mubr.bf16.gmra.mrb[0].mxu0 %v2961
        %v3000 = vpop.f32.mrb[0].mxu0
        %v3001 = vadd.f32 0.0, %v3000
        %v3002 = vpop.f32.mrb[0].mxu0
        %v3003 = vpop.f32.mrb[0].mxu0
        %v3004 = vpop.f32.mrb[0].mxu0
        %3005 = vdwg.mxu0
        %3007 = vrot.lane.b32.xlu0 %v2723, 32
        %v3008 = vpop.permute.xlu0 %3007
        %3011 = vrot.lane.b32.xlu0 %v2862, 64
        %v3012 = vpop.permute.xlu0 %3011
        %3015 = vrot.lane.b32.xlu0 %v3001, 96
        %v3016 = vpop.permute.xlu0 %3015
        %v3018 = vsel %vm800, %v2583, %v3008
        %v3019 = vsel %vm1370, %v3018, %v3012
        %v3020 = vsel %vm1372, %v3019, %v3016
        %v3021 = vpack.c.bf16 %v3020, %v3020
        %s3022 = scalar_lea.vmem [#allocation5], 64
        %v3023 = vld [vmem:[%s3022] sm:$0xf]
        %v3024 = vld [vmem:[%s3022 + $0x4] sm:$0xf]
        %v3025 = vld [vmem:[%s3022 + $0x8] sm:$0xf]
        %v3026 = vld [vmem:[%s3022 + $0xc] sm:$0xf]
        %v3027 = vld [vmem:[%s3022 + $0x10] sm:$0xf]
        %v3028 = vld [vmem:[%s3022 + $0x14] sm:$0xf]
        %v3029 = vld [vmem:[%s3022 + $0x18] sm:$0xf]
        %v3030 = vld [vmem:[%s3022 + $0x1c] sm:$0xf]
        %v3031 = vld [vmem:[%s3022 + $0x20] sm:$0xf]
        %v3032 = vld [vmem:[%s3022 + $0x24] sm:$0xf]
        %v3033 = vld [vmem:[%s3022 + $0x28] sm:$0xf]
        %v3034 = vld [vmem:[%s3022 + $0x2c] sm:$0xf]
        %v3035 = vld [vmem:[%s3022 + $0x30] sm:$0xf]
        %v3036 = vld [vmem:[%s3022 + $0x34] sm:$0xf]
        %v3037 = vld [vmem:[%s3022 + $0x38] sm:$0xf]
        %v3038 = vld [vmem:[%s3022 + $0x3c] sm:$0xf]
        %s3039 = scalar_lea.vmem %s4, 1
        %v3040 = vld [vmem:[%s3039] sm:$0x1]
        %v3042 = vlaneseq
        %v3043 = vshrl.u32 %v3042, 7
        %v3044 = vsub.s32 0, %v3043
        %v3045 = vrot.slane %v3040, %v3044
        %v3063 = vunpack.c.l.b16 %v3023
        %v3064 = vunpack.c.l.b16 %v3024
        %v3065 = vunpack.c.l.b16 %v3025
        %v3066 = vunpack.c.l.b16 %v3026
        %v3067 = vunpack.c.l.b16 %v3027
        %v3068 = vunpack.c.l.b16 %v3028
        %v3069 = vunpack.c.l.b16 %v3029
        %v3070 = vunpack.c.l.b16 %v3030
        %v3071 = vunpack.c.l.b16 %v3031
        %v3072 = vunpack.c.l.b16 %v3032
        %v3073 = vunpack.c.l.b16 %v3033
        %v3074 = vunpack.c.l.b16 %v3034
        %v3075 = vunpack.c.l.b16 %v3035
        %v3076 = vunpack.c.l.b16 %v3036
        %v3077 = vunpack.c.l.b16 %v3037
        %v3078 = vunpack.c.l.b16 %v3038
        %v3079 = vpack.c.b16 %v3064, %v3063
        %v3080 = vpack.c.b16 %v3066, %v3065
        %v3081 = vpack.c.b16 %v3068, %v3067
        %v3082 = vpack.c.b16 %v3070, %v3069
        %v3083 = vpack.c.b16 %v3072, %v3071
        %v3084 = vpack.c.b16 %v3074, %v3073
        %v3085 = vpack.c.b16 %v3076, %v3075
        %v3086 = vpack.c.b16 %v3078, %v3077
        %3095 = vmatprep.subr.bf16.mxu0 0
        %3096 = vmatpush1.bf16.msra.mxu0 %v3079
        %3097 = vmatprep.subr.bf16.mxu0 0
        %3098 = vmatpush1.bf16.msra.mxu0 %v3080
        %3099 = vmatprep.subr.bf16.mxu0 0
        %3100 = vmatpush1.bf16.msra.mxu0 %v3081
        %3101 = vmatprep.subr.bf16.mxu0 0
        %3102 = vmatpush1.bf16.msra.mxu0 %v3082
        %3103 = vmatprep.subr.bf16.mxu0 0
        %3104 = vmatpush1.bf16.msra.mxu0 %v3083
        %3105 = vmatprep.subr.bf16.mxu0 0
        %3106 = vmatpush1.bf16.msra.mxu0 %v3084
        %3107 = vmatprep.subr.bf16.mxu0 0
        %3108 = vmatpush1.bf16.msra.mxu0 %v3085
        %3109 = vmatprep.subr.bf16.mxu0 0
        %3110 = vmatpush1.bf16.msra.mxu0 %v3086
        %3111 = vmatprep.subr.bf16.mxu0 0
        %3112 = vmatpush1.bf16.msra.mxu0 0
        %3113 = vmatprep.subr.bf16.mxu0 0
        %3114 = vmatpush1.bf16.msra.mxu0 0
        %3115 = vmatprep.subr.bf16.mxu0 0
        %3116 = vmatpush1.bf16.msra.mxu0 0
        %3117 = vmatprep.subr.bf16.mxu0 0
        %3118 = vmatpush1.bf16.msra.mxu0 0
        %3119 = vmatprep.subr.bf16.mxu0 0
        %3120 = vmatpush1.bf16.msra.mxu0 0
        %3121 = vmatprep.subr.bf16.mxu0 0
        %3122 = vmatpush1.bf16.msra.mxu0 0
        %3123 = vmatprep.subr.bf16.mxu0 0
        %3124 = vmatpush1.bf16.msra.mxu0 0
        %3125 = vmatprep.subr.bf16.mxu0 0
        %3126 = vmatpush1.bf16.msra.mxu0 0
        %3127 = vmatprep.mubr.bf16.mxu0 0
        %3128 = vmatmul.mubr.bf16.gmra.mrb[0].mxu0 %v3021
        %v3129 = vpop.f32.mrb[0].mxu0
        %v3130 = vadd.f32 %v3045, %v3129
        %v3131 = vpop.f32.mrb[0].mxu0
        %v3132 = vpop.f32.mrb[0].mxu0
        %v3133 = vpop.f32.mrb[0].mxu0
        %3134 = vdwg.mxu0
        %v3135 = vadd.f32 %v2190, %v3130
        %s3136 = scalar_lea.vmem %s5, 1
        %v3137 = vld [vmem:[%s3136] sm:$0x1]
        %s3138 = scalar_lea.vmem %s6, 1
        %v3139 = vld [vmem:[%s3138] sm:$0x1]
        %3140 = vadd.xlane.f32.xlu0 %v3135
        %v3141 = vpop.xlane.xlu0 %3140
        %v3142 = vmul.f32 %v3141, %v1491
        %v3143 = vsub.f32 %v3135, %v3142
        %v3144 = vmul.f32 %v3143, %v3143
        %3145 = vadd.xlane.f32.xlu0 %v3144
        %v3146 = vpop.xlane.xlu0 %3145
        %v3147 = vmul.f32 %v3146, %v1491
        %v3148 = vadd.f32 %v3147, 1e-05
        %v3149 = vrsqrt.pop %v3148
        %v3150 = vmul.f32 %v3143, %v3149
        %v3152 = vlaneseq
        %v3153 = vshrl.u32 %v3152, 7
        %v3154 = vsub.s32 0, %v3153
        %v3155 = vrot.slane %v3137, %v3154
        %v3157 = vmul.f32 %v3150, %v3155
        %v3159 = vlaneseq
        %v3160 = vshrl.u32 %v3159, 7
        %v3161 = vsub.s32 0, %v3160
        %v3162 = vrot.slane %v3139, %v3161
        %v3164 = vadd.f32 %v3157, %v3162
        %v3165 = vpack.c.bf16 %v3164, %v3164
        %s3166 = scalar_lea.vmem %s7, 256
        %v3167 = vld [vmem:[%s3166] sm:$0xff]
        %v3168 = vld [vmem:[%s3166 + $0x8] sm:$0xff]
        %v3169 = vld [vmem:[%s3166 + $0x10] sm:$0xff]
        %v3170 = vld [vmem:[%s3166 + $0x18] sm:$0xff]
        %v3171 = vld [vmem:[%s3166 + $0x20] sm:$0xff]
        %v3172 = vld [vmem:[%s3166 + $0x28] sm:$0xff]
        %v3173 = vld [vmem:[%s3166 + $0x30] sm:$0xff]
        %v3174 = vld [vmem:[%s3166 + $0x38] sm:$0xff]
        %v3175 = vld [vmem:[%s3166 + $0x40] sm:$0xff]
        %v3176 = vld [vmem:[%s3166 + $0x48] sm:$0xff]
        %v3177 = vld [vmem:[%s3166 + $0x50] sm:$0xff]
        %v3178 = vld [vmem:[%s3166 + $0x58] sm:$0xff]
        %v3179 = vld [vmem:[%s3166 + $0x60] sm:$0xff]
        %v3180 = vld [vmem:[%s3166 + $0x68] sm:$0xff]
        %v3181 = vld [vmem:[%s3166 + $0x70] sm:$0xff]
        %v3182 = vld [vmem:[%s3166 + $0x78] sm:$0xff]
        %v3183 = vld [vmem:[%s3166 + $0x80] sm:$0xff]
        %v3184 = vld [vmem:[%s3166 + $0x88] sm:$0xff]
        %v3185 = vld [vmem:[%s3166 + $0x90] sm:$0xff]
        %v3186 = vld [vmem:[%s3166 + $0x98] sm:$0xff]
        %v3187 = vld [vmem:[%s3166 + $0xa0] sm:$0xff]
        %v3188 = vld [vmem:[%s3166 + $0xa8] sm:$0xff]
        %v3189 = vld [vmem:[%s3166 + $0xb0] sm:$0xff]
        %v3190 = vld [vmem:[%s3166 + $0xb8] sm:$0xff]
        %v3191 = vld [vmem:[%s3166 + $0xc0] sm:$0xff]
        %v3192 = vld [vmem:[%s3166 + $0xc8] sm:$0xff]
        %v3193 = vld [vmem:[%s3166 + $0xd0] sm:$0xff]
        %v3194 = vld [vmem:[%s3166 + $0xd8] sm:$0xff]
        %v3195 = vld [vmem:[%s3166 + $0xe0] sm:$0xff]
        %v3196 = vld [vmem:[%s3166 + $0xe8] sm:$0xff]
        %v3197 = vld [vmem:[%s3166 + $0xf0] sm:$0xff]
        %v3198 = vld [vmem:[%s3166 + $0xf8] sm:$0xff]
        %s3199 = scalar_lea.vmem %s8, 4
        %v3200 = vld [vmem:[%s3199] sm:$0xf]
        %v3202 = vlaneseq
        %v3203 = vshrl.u32 %v3202, 7
        %v3204 = vsub.s32 0, %v3203
        %v3205 = vrot.slane %v3200, %v3204
        %v3206 = vlaneseq
        %v3207 = vshrl.u32 %v3206, 7
        %v3208 = vsub.s32 1, %v3207
        %v3209 = vrot.slane %v3200, %v3208
        %v3210 = vlaneseq
        %v3211 = vshrl.u32 %v3210, 7
        %v3212 = vsub.s32 2, %v3211
        %v3213 = vrot.slane %v3200, %v3212
        %v3214 = vlaneseq
        %v3215 = vshrl.u32 %v3214, 7
        %v3216 = vsub.s32 3, %v3215
        %v3217 = vrot.slane %v3200, %v3216
        %v3254 = vunpack.c.l.b16 %v3167
        %v3255 = vunpack.c.h.b16 %v3167
        %v3256 = vunpack.c.l.b16 %v3168
        %v3257 = vunpack.c.h.b16 %v3168
        %v3258 = vunpack.c.l.b16 %v3169
        %v3259 = vunpack.c.h.b16 %v3169
        %v3260 = vunpack.c.l.b16 %v3170
        %v3261 = vunpack.c.h.b16 %v3170
        %v3262 = vunpack.c.l.b16 %v3171
        %v3263 = vunpack.c.h.b16 %v3171
        %v3264 = vunpack.c.l.b16 %v3172
        %v3265 = vunpack.c.h.b16 %v3172
        %v3266 = vunpack.c.l.b16 %v3173
        %v3267 = vunpack.c.h.b16 %v3173
        %v3268 = vunpack.c.l.b16 %v3174
        %v3269 = vunpack.c.h.b16 %v3174
        %v3270 = vunpack.c.l.b16 %v3175
        %v3271 = vunpack.c.h.b16 %v3175
        %v3272 = vunpack.c.l.b16 %v3176
        %v3273 = vunpack.c.h.b16 %v3176
        %v3274 = vunpack.c.l.b16 %v3177
        %v3275 = vunpack.c.h.b16 %v3177
        %v3276 = vunpack.c.l.b16 %v3178
        %v3277 = vunpack.c.h.b16 %v3178
        %v3278 = vunpack.c.l.b16 %v3179
        %v3279 = vunpack.c.h.b16 %v3179
        %v3280 = vunpack.c.l.b16 %v3180
        %v3281 = vunpack.c.h.b16 %v3180
        %v3282 = vunpack.c.l.b16 %v3181
        %v3283 = vunpack.c.h.b16 %v3181
        %v3284 = vunpack.c.l.b16 %v3182
        %v3285 = vunpack.c.h.b16 %v3182
        %v3286 = vunpack.c.l.b16 %v3183
        %v3287 = vunpack.c.h.b16 %v3183
        %v3288 = vunpack.c.l.b16 %v3184
        %v3289 = vunpack.c.h.b16 %v3184
        %v3290 = vunpack.c.l.b16 %v3185
        %v3291 = vunpack.c.h.b16 %v3185
        %v3292 = vunpack.c.l.b16 %v3186
        %v3293 = vunpack.c.h.b16 %v3186
        %v3294 = vunpack.c.l.b16 %v3187
        %v3295 = vunpack.c.h.b16 %v3187
        %v3296 = vunpack.c.l.b16 %v3188
        %v3297 = vunpack.c.h.b16 %v3188
        %v3298 = vunpack.c.l.b16 %v3189
        %v3299 = vunpack.c.h.b16 %v3189
        %v3300 = vunpack.c.l.b16 %v3190
        %v3301 = vunpack.c.h.b16 %v3190
        %v3302 = vunpack.c.l.b16 %v3191
        %v3303 = vunpack.c.h.b16 %v3191
        %v3304 = vunpack.c.l.b16 %v3192
        %v3305 = vunpack.c.h.b16 %v3192
        %v3306 = vunpack.c.l.b16 %v3193
        %v3307 = vunpack.c.h.b16 %v3193
        %v3308 = vunpack.c.l.b16 %v3194
        %v3309 = vunpack.c.h.b16 %v3194
        %v3310 = vunpack.c.l.b16 %v3195
        %v3311 = vunpack.c.h.b16 %v3195
        %v3312 = vunpack.c.l.b16 %v3196
        %v3313 = vunpack.c.h.b16 %v3196
        %v3314 = vunpack.c.l.b16 %v3197
        %v3315 = vunpack.c.h.b16 %v3197
        %v3316 = vunpack.c.l.b16 %v3198
        %v3317 = vunpack.c.h.b16 %v3198
        %v3318 = vpack.c.b16 %v3258, %v3254
        %v3319 = vpack.c.b16 %v3259, %v3255
        %v3320 = vpack.c.b16 %v3260, %v3256
        %v3321 = vpack.c.b16 %v3261, %v3257
        %v3322 = vpack.c.b16 %v3266, %v3262
        %v3323 = vpack.c.b16 %v3267, %v3263
        %v3324 = vpack.c.b16 %v3268, %v3264
        %v3325 = vpack.c.b16 %v3269, %v3265
        %v3326 = vpack.c.b16 %v3274, %v3270
        %v3327 = vpack.c.b16 %v3275, %v3271
        %v3328 = vpack.c.b16 %v3276, %v3272
        %v3329 = vpack.c.b16 %v3277, %v3273
        %v3330 = vpack.c.b16 %v3282, %v3278
        %v3331 = vpack.c.b16 %v3283, %v3279
        %v3332 = vpack.c.b16 %v3284, %v3280
        %v3333 = vpack.c.b16 %v3285, %v3281
        %v3334 = vpack.c.b16 %v3290, %v3286
        %v3335 = vpack.c.b16 %v3291, %v3287
        %v3336 = vpack.c.b16 %v3292, %v3288
        %v3337 = vpack.c.b16 %v3293, %v3289
        %v3338 = vpack.c.b16 %v3298, %v3294
        %v3339 = vpack.c.b16 %v3299, %v3295
        %v3340 = vpack.c.b16 %v3300, %v3296
        %v3341 = vpack.c.b16 %v3301, %v3297
        %v3342 = vpack.c.b16 %v3306, %v3302
        %v3343 = vpack.c.b16 %v3307, %v3303
        %v3344 = vpack.c.b16 %v3308, %v3304
        %v3345 = vpack.c.b16 %v3309, %v3305
        %v3346 = vpack.c.b16 %v3314, %v3310
        %v3347 = vpack.c.b16 %v3315, %v3311
        %v3348 = vpack.c.b16 %v3316, %v3312
        %v3349 = vpack.c.b16 %v3317, %v3313
        %3382 = vmatprep.subr.bf16.mxu0 %v3319
        %3383 = vmatpush1.bf16.msra.mxu0 %v3318
        %3384 = vmatprep.subr.bf16.mxu0 %v3323
        %3385 = vmatpush1.bf16.msra.mxu0 %v3322
        %3386 = vmatprep.subr.bf16.mxu0 %v3327
        %3387 = vmatpush1.bf16.msra.mxu0 %v3326
        %3388 = vmatprep.subr.bf16.mxu0 %v3331
        %3389 = vmatpush1.bf16.msra.mxu0 %v3330
        %3390 = vmatprep.subr.bf16.mxu0 %v3335
        %3391 = vmatpush1.bf16.msra.mxu0 %v3334
        %3392 = vmatprep.subr.bf16.mxu0 %v3339
        %3393 = vmatpush1.bf16.msra.mxu0 %v3338
        %3394 = vmatprep.subr.bf16.mxu0 %v3343
        %3395 = vmatpush1.bf16.msra.mxu0 %v3342
        %3396 = vmatprep.subr.bf16.mxu0 %v3347
        %3397 = vmatpush1.bf16.msra.mxu0 %v3346
        %3398 = vmatprep.subr.bf16.mxu0 0
        %3399 = vmatpush1.bf16.msra.mxu0 0
        %3400 = vmatprep.subr.bf16.mxu0 0
        %3401 = vmatpush1.bf16.msra.mxu0 0
        %3402 = vmatprep.subr.bf16.mxu0 0
        %3403 = vmatpush1.bf16.msra.mxu0 0
        %3404 = vmatprep.subr.bf16.mxu0 0
        %3405 = vmatpush1.bf16.msra.mxu0 0
        %3406 = vmatprep.subr.bf16.mxu0 0
        %3407 = vmatpush1.bf16.msra.mxu0 0
        %3408 = vmatprep.subr.bf16.mxu0 0
        %3409 = vmatpush1.bf16.msra.mxu0 0
        %3410 = vmatprep.subr.bf16.mxu0 0
        %3411 = vmatpush1.bf16.msra.mxu0 0
        %3412 = vmatprep.subr.bf16.mxu0 0
        %3413 = vmatpush1.bf16.msra.mxu0 0
        %3414 = vmatprep.mubr.bf16.mxu0 0
        %3415 = vmatmul.mubr.bf16.gmra.mrb[0].mxu0 %v3165
        %v3416 = vpop.f32.mrb[0].mxu0
        %v3417 = vadd.f32 %v3205, %v3416
        %v3418 = vpop.f32.mrb[0].mxu0
        %v3419 = vadd.f32 %v3209, %v3418
        %v3420 = vpop.f32.mrb[0].mxu0
        %v3421 = vpop.f32.mrb[0].mxu0
        %3422 = vdwg.mxu0
        %3423 = vmatprep.subr.bf16.mxu0 %v3321
        %3424 = vmatpush1.bf16.msra.mxu0 %v3320
        %3425 = vmatprep.subr.bf16.mxu0 %v3325
        %3426 = vmatpush1.bf16.msra.mxu0 %v3324
        %3427 = vmatprep.subr.bf16.mxu0 %v3329
        %3428 = vmatpush1.bf16.msra.mxu0 %v3328
        %3429 = vmatprep.subr.bf16.mxu0 %v3333
        %3430 = vmatpush1.bf16.msra.mxu0 %v3332
        %3431 = vmatprep.subr.bf16.mxu0 %v3337
        %3432 = vmatpush1.bf16.msra.mxu0 %v3336
        %3433 = vmatprep.subr.bf16.mxu0 %v3341
        %3434 = vmatpush1.bf16.msra.mxu0 %v3340
        %3435 = vmatprep.subr.bf16.mxu0 %v3345
        %3436 = vmatpush1.bf16.msra.mxu0 %v3344
        %3437 = vmatprep.subr.bf16.mxu0 %v3349
        %3438 = vmatpush1.bf16.msra.mxu0 %v3348
        %3439 = vmatprep.subr.bf16.mxu0 0
        %3440 = vmatpush1.bf16.msra.mxu0 0
        %3441 = vmatprep.subr.bf16.mxu0 0
        %3442 = vmatpush1.bf16.msra.mxu0 0
        %3443 = vmatprep.subr.bf16.mxu0 0
        %3444 = vmatpush1.bf16.msra.mxu0 0
        %3445 = vmatprep.subr.bf16.mxu0 0
        %3446 = vmatpush1.bf16.msra.mxu0 0
        %3447 = vmatprep.subr.bf16.mxu0 0
        %3448 = vmatpush1.bf16.msra.mxu0 0
        %3449 = vmatprep.subr.bf16.mxu0 0
        %3450 = vmatpush1.bf16.msra.mxu0 0
        %3451 = vmatprep.subr.bf16.mxu0 0
        %3452 = vmatpush1.bf16.msra.mxu0 0
        %3453 = vmatprep.subr.bf16.mxu0 0
        %3454 = vmatpush1.bf16.msra.mxu0 0
        %3455 = vmatprep.mubr.bf16.mxu0 0
        %3456 = vmatmul.mubr.bf16.gmra.mrb[0].mxu0 %v3165
        %v3457 = vpop.f32.mrb[0].mxu0
        %v3458 = vadd.f32 %v3213, %v3457
        %v3459 = vpop.f32.mrb[0].mxu0
        %v3460 = vadd.f32 %v3217, %v3459
        %v3461 = vpop.f32.mrb[0].mxu0
        %v3462 = vpop.f32.mrb[0].mxu0
        %3463 = vdwg.mxu0
        %v3464 = vmax.f32 %v3417, 0.0
        %v3465 = vmax.f32 %v3419, 0.0
        %v3466 = vmax.f32 %v3458, 0.0
        %v3467 = vmax.f32 %v3460, 0.0
        %v3468 = vpack.c.bf16 %v3464, %v3464
        %v3469 = vpack.c.bf16 %v3465, %v3465
        %v3470 = vpack.c.bf16 %v3466, %v3466
        %v3471 = vpack.c.bf16 %v3467, %v3467
        %s3472 = scalar_lea.vmem [#allocation7], 256
        %v3473 = vld [vmem:[%s3472] sm:$0xf]
        %v3474 = vld [vmem:[%s3472 + $0x4] sm:$0xf]
        %v3475 = vld [vmem:[%s3472 + $0x8] sm:$0xf]
        %v3476 = vld [vmem:[%s3472 + $0xc] sm:$0xf]
        %v3477 = vld [vmem:[%s3472 + $0x10] sm:$0xf]
        %v3478 = vld [vmem:[%s3472 + $0x14] sm:$0xf]
        %v3479 = vld [vmem:[%s3472 + $0x18] sm:$0xf]
        %v3480 = vld [vmem:[%s3472 + $0x1c] sm:$0xf]
        %v3481 = vld [vmem:[%s3472 + $0x20] sm:$0xf]
        %v3482 = vld [vmem:[%s3472 + $0x24] sm:$0xf]
        %v3483 = vld [vmem:[%s3472 + $0x28] sm:$0xf]
        %v3484 = vld [vmem:[%s3472 + $0x2c] sm:$0xf]
        %v3485 = vld [vmem:[%s3472 + $0x30] sm:$0xf]
        %v3486 = vld [vmem:[%s3472 + $0x34] sm:$0xf]
        %v3487 = vld [vmem:[%s3472 + $0x38] sm:$0xf]
        %v3488 = vld [vmem:[%s3472 + $0x3c] sm:$0xf]
        %v3489 = vld [vmem:[%s3472 + $0x40] sm:$0xf]
        %v3490 = vld [vmem:[%s3472 + $0x44] sm:$0xf]
        %v3491 = vld [vmem:[%s3472 + $0x48] sm:$0xf]
        %v3492 = vld [vmem:[%s3472 + $0x4c] sm:$0xf]
        %v3493 = vld [vmem:[%s3472 + $0x50] sm:$0xf]
        %v3494 = vld [vmem:[%s3472 + $0x54] sm:$0xf]
        %v3495 = vld [vmem:[%s3472 + $0x58] sm:$0xf]
        %v3496 = vld [vmem:[%s3472 + $0x5c] sm:$0xf]
        %v3497 = vld [vmem:[%s3472 + $0x60] sm:$0xf]
        %v3498 = vld [vmem:[%s3472 + $0x64] sm:$0xf]
        %v3499 = vld [vmem:[%s3472 + $0x68] sm:$0xf]
        %v3500 = vld [vmem:[%s3472 + $0x6c] sm:$0xf]
        %v3501 = vld [vmem:[%s3472 + $0x70] sm:$0xf]
        %v3502 = vld [vmem:[%s3472 + $0x74] sm:$0xf]
        %v3503 = vld [vmem:[%s3472 + $0x78] sm:$0xf]
        %v3504 = vld [vmem:[%s3472 + $0x7c] sm:$0xf]
        %v3505 = vld [vmem:[%s3472 + $0x80] sm:$0xf]
        %v3506 = vld [vmem:[%s3472 + $0x84] sm:$0xf]
        %v3507 = vld [vmem:[%s3472 + $0x88] sm:$0xf]
        %v3508 = vld [vmem:[%s3472 + $0x8c] sm:$0xf]
        %v3509 = vld [vmem:[%s3472 + $0x90] sm:$0xf]
        %v3510 = vld [vmem:[%s3472 + $0x94] sm:$0xf]
        %v3511 = vld [vmem:[%s3472 + $0x98] sm:$0xf]
        %v3512 = vld [vmem:[%s3472 + $0x9c] sm:$0xf]
        %v3513 = vld [vmem:[%s3472 + $0xa0] sm:$0xf]
        %v3514 = vld [vmem:[%s3472 + $0xa4] sm:$0xf]
        %v3515 = vld [vmem:[%s3472 + $0xa8] sm:$0xf]
        %v3516 = vld [vmem:[%s3472 + $0xac] sm:$0xf]
        %v3517 = vld [vmem:[%s3472 + $0xb0] sm:$0xf]
        %v3518 = vld [vmem:[%s3472 + $0xb4] sm:$0xf]
        %v3519 = vld [vmem:[%s3472 + $0xb8] sm:$0xf]
        %v3520 = vld [vmem:[%s3472 + $0xbc] sm:$0xf]
        %v3521 = vld [vmem:[%s3472 + $0xc0] sm:$0xf]
        %v3522 = vld [vmem:[%s3472 + $0xc4] sm:$0xf]
        %v3523 = vld [vmem:[%s3472 + $0xc8] sm:$0xf]
        %v3524 = vld [vmem:[%s3472 + $0xcc] sm:$0xf]
        %v3525 = vld [vmem:[%s3472 + $0xd0] sm:$0xf]
        %v3526 = vld [vmem:[%s3472 + $0xd4] sm:$0xf]
        %v3527 = vld [vmem:[%s3472 + $0xd8] sm:$0xf]
        %v3528 = vld [vmem:[%s3472 + $0xdc] sm:$0xf]
        %v3529 = vld [vmem:[%s3472 + $0xe0] sm:$0xf]
        %v3530 = vld [vmem:[%s3472 + $0xe4] sm:$0xf]
        %v3531 = vld [vmem:[%s3472 + $0xe8] sm:$0xf]
        %v3532 = vld [vmem:[%s3472 + $0xec] sm:$0xf]
        %v3533 = vld [vmem:[%s3472 + $0xf0] sm:$0xf]
        %v3534 = vld [vmem:[%s3472 + $0xf4] sm:$0xf]
        %v3535 = vld [vmem:[%s3472 + $0xf8] sm:$0xf]
        %v3536 = vld [vmem:[%s3472 + $0xfc] sm:$0xf]
        %s3537 = scalar_lea.vmem %s10, 1
        %v3538 = vld [vmem:[%s3537] sm:$0x1]
        %v3540 = vlaneseq
        %v3541 = vshrl.u32 %v3540, 7
        %v3542 = vsub.s32 0, %v3541
        %v3543 = vrot.slane %v3538, %v3542
        %v3609 = vunpack.c.l.b16 %v3473
        %v3610 = vunpack.c.l.b16 %v3474
        %v3611 = vunpack.c.l.b16 %v3475
        %v3612 = vunpack.c.l.b16 %v3476
        %v3613 = vunpack.c.l.b16 %v3477
        %v3614 = vunpack.c.l.b16 %v3478
        %v3615 = vunpack.c.l.b16 %v3479
        %v3616 = vunpack.c.l.b16 %v3480
        %v3617 = vunpack.c.l.b16 %v3481
        %v3618 = vunpack.c.l.b16 %v3482
        %v3619 = vunpack.c.l.b16 %v3483
        %v3620 = vunpack.c.l.b16 %v3484
        %v3621 = vunpack.c.l.b16 %v3485
        %v3622 = vunpack.c.l.b16 %v3486
        %v3623 = vunpack.c.l.b16 %v3487
        %v3624 = vunpack.c.l.b16 %v3488
        %v3625 = vunpack.c.l.b16 %v3489
        %v3626 = vunpack.c.l.b16 %v3490
        %v3627 = vunpack.c.l.b16 %v3491
        %v3628 = vunpack.c.l.b16 %v3492
        %v3629 = vunpack.c.l.b16 %v3493
        %v3630 = vunpack.c.l.b16 %v3494
        %v3631 = vunpack.c.l.b16 %v3495
        %v3632 = vunpack.c.l.b16 %v3496
        %v3633 = vunpack.c.l.b16 %v3497
        %v3634 = vunpack.c.l.b16 %v3498
        %v3635 = vunpack.c.l.b16 %v3499
        %v3636 = vunpack.c.l.b16 %v3500
        %v3637 = vunpack.c.l.b16 %v3501
        %v3638 = vunpack.c.l.b16 %v3502
        %v3639 = vunpack.c.l.b16 %v3503
        %v3640 = vunpack.c.l.b16 %v3504
        %v3641 = vunpack.c.l.b16 %v3505
        %v3642 = vunpack.c.l.b16 %v3506
        %v3643 = vunpack.c.l.b16 %v3507
        %v3644 = vunpack.c.l.b16 %v3508
        %v3645 = vunpack.c.l.b16 %v3509
        %v3646 = vunpack.c.l.b16 %v3510
        %v3647 = vunpack.c.l.b16 %v3511
        %v3648 = vunpack.c.l.b16 %v3512
        %v3649 = vunpack.c.l.b16 %v3513
        %v3650 = vunpack.c.l.b16 %v3514
        %v3651 = vunpack.c.l.b16 %v3515
        %v3652 = vunpack.c.l.b16 %v3516
        %v3653 = vunpack.c.l.b16 %v3517
        %v3654 = vunpack.c.l.b16 %v3518
        %v3655 = vunpack.c.l.b16 %v3519
        %v3656 = vunpack.c.l.b16 %v3520
        %v3657 = vunpack.c.l.b16 %v3521
        %v3658 = vunpack.c.l.b16 %v3522
        %v3659 = vunpack.c.l.b16 %v3523
        %v3660 = vunpack.c.l.b16 %v3524
        %v3661 = vunpack.c.l.b16 %v3525
        %v3662 = vunpack.c.l.b16 %v3526
        %v3663 = vunpack.c.l.b16 %v3527
        %v3664 = vunpack.c.l.b16 %v3528
        %v3665 = vunpack.c.l.b16 %v3529
        %v3666 = vunpack.c.l.b16 %v3530
        %v3667 = vunpack.c.l.b16 %v3531
        %v3668 = vunpack.c.l.b16 %v3532
        %v3669 = vunpack.c.l.b16 %v3533
        %v3670 = vunpack.c.l.b16 %v3534
        %v3671 = vunpack.c.l.b16 %v3535
        %v3672 = vunpack.c.l.b16 %v3536
        %v3673 = vpack.c.b16 %v3610, %v3609
        %v3674 = vpack.c.b16 %v3612, %v3611
        %v3675 = vpack.c.b16 %v3614, %v3613
        %v3676 = vpack.c.b16 %v3616, %v3615
        %v3677 = vpack.c.b16 %v3618, %v3617
        %v3678 = vpack.c.b16 %v3620, %v3619
        %v3679 = vpack.c.b16 %v3622, %v3621
        %v3680 = vpack.c.b16 %v3624, %v3623
        %v3681 = vpack.c.b16 %v3626, %v3625
        %v3682 = vpack.c.b16 %v3628, %v3627
        %v3683 = vpack.c.b16 %v3630, %v3629
        %v3684 = vpack.c.b16 %v3632, %v3631
        %v3685 = vpack.c.b16 %v3634, %v3633
        %v3686 = vpack.c.b16 %v3636, %v3635
        %v3687 = vpack.c.b16 %v3638, %v3637
        %v3688 = vpack.c.b16 %v3640, %v3639
        %v3689 = vpack.c.b16 %v3642, %v3641
        %v3690 = vpack.c.b16 %v3644, %v3643
        %v3691 = vpack.c.b16 %v3646, %v3645
        %v3692 = vpack.c.b16 %v3648, %v3647
        %v3693 = vpack.c.b16 %v3650, %v3649
        %v3694 = vpack.c.b16 %v3652, %v3651
        %v3695 = vpack.c.b16 %v3654, %v3653
        %v3696 = vpack.c.b16 %v3656, %v3655
        %v3697 = vpack.c.b16 %v3658, %v3657
        %v3698 = vpack.c.b16 %v3660, %v3659
        %v3699 = vpack.c.b16 %v3662, %v3661
        %v3700 = vpack.c.b16 %v3664, %v3663
        %v3701 = vpack.c.b16 %v3666, %v3665
        %v3702 = vpack.c.b16 %v3668, %v3667
        %v3703 = vpack.c.b16 %v3670, %v3669
        %v3704 = vpack.c.b16 %v3672, %v3671
        %3737 = vmatprep.subr.bf16.mxu0 0
        %3738 = vmatpush1.bf16.msra.mxu0 %v3673
        %3739 = vmatprep.subr.bf16.mxu0 0
        %3740 = vmatpush1.bf16.msra.mxu0 %v3674
        %3741 = vmatprep.subr.bf16.mxu0 0
        %3742 = vmatpush1.bf16.msra.mxu0 %v3675
        %3743 = vmatprep.subr.bf16.mxu0 0
        %3744 = vmatpush1.bf16.msra.mxu0 %v3676
        %3745 = vmatprep.subr.bf16.mxu0 0
        %3746 = vmatpush1.bf16.msra.mxu0 %v3677
        %3747 = vmatprep.subr.bf16.mxu0 0
        %3748 = vmatpush1.bf16.msra.mxu0 %v3678
        %3749 = vmatprep.subr.bf16.mxu0 0
        %3750 = vmatpush1.bf16.msra.mxu0 %v3679
        %3751 = vmatprep.subr.bf16.mxu0 0
        %3752 = vmatpush1.bf16.msra.mxu0 %v3680
        %3753 = vmatprep.subr.bf16.mxu0 0
        %3754 = vmatpush1.bf16.msra.mxu0 %v3681
        %3755 = vmatprep.subr.bf16.mxu0 0
        %3756 = vmatpush1.bf16.msra.mxu0 %v3682
        %3757 = vmatprep.subr.bf16.mxu0 0
        %3758 = vmatpush1.bf16.msra.mxu0 %v3683
        %3759 = vmatprep.subr.bf16.mxu0 0
        %3760 = vmatpush1.bf16.msra.mxu0 %v3684
        %3761 = vmatprep.subr.bf16.mxu0 0
        %3762 = vmatpush1.bf16.msra.mxu0 %v3685
        %3763 = vmatprep.subr.bf16.mxu0 0
        %3764 = vmatpush1.bf16.msra.mxu0 %v3686
        %3765 = vmatprep.subr.bf16.mxu0 0
        %3766 = vmatpush1.bf16.msra.mxu0 %v3687
        %3767 = vmatprep.subr.bf16.mxu0 0
        %3768 = vmatpush1.bf16.msra.mxu0 %v3688
        %3769 = vmatprep.mubr.bf16.mxu0 %v3469
        %3770 = vmatmul.mubr.bf16.gmra.mrb[0].mxu0 %v3468
        %v3771 = vpop.f32.mrb[0].mxu0
        %v3772 = vadd.f32 %v3543, %v3771
        %v3773 = vpop.f32.mrb[0].mxu0
        %v3774 = vpop.f32.mrb[0].mxu0
        %v3775 = vpop.f32.mrb[0].mxu0
        %3776 = vdwg.mxu0
        %3777 = vmatprep.subr.bf16.mxu0 0
        %3778 = vmatpush1.bf16.msra.mxu0 %v3689
        %3779 = vmatprep.subr.bf16.mxu0 0
        %3780 = vmatpush1.bf16.msra.mxu0 %v3690
        %3781 = vmatprep.subr.bf16.mxu0 0
        %3782 = vmatpush1.bf16.msra.mxu0 %v3691
        %3783 = vmatprep.subr.bf16.mxu0 0
        %3784 = vmatpush1.bf16.msra.mxu0 %v3692
        %3785 = vmatprep.subr.bf16.mxu0 0
        %3786 = vmatpush1.bf16.msra.mxu0 %v3693
        %3787 = vmatprep.subr.bf16.mxu0 0
        %3788 = vmatpush1.bf16.msra.mxu0 %v3694
        %3789 = vmatprep.subr.bf16.mxu0 0
        %3790 = vmatpush1.bf16.msra.mxu0 %v3695
        %3791 = vmatprep.subr.bf16.mxu0 0
        %3792 = vmatpush1.bf16.msra.mxu0 %v3696
        %3793 = vmatprep.subr.bf16.mxu0 0
        %3794 = vmatpush1.bf16.msra.mxu0 %v3697
        %3795 = vmatprep.subr.bf16.mxu0 0
        %3796 = vmatpush1.bf16.msra.mxu0 %v3698
        %3797 = vmatprep.subr.bf16.mxu0 0
        %3798 = vmatpush1.bf16.msra.mxu0 %v3699
        %3799 = vmatprep.subr.bf16.mxu0 0
        %3800 = vmatpush1.bf16.msra.mxu0 %v3700
        %3801 = vmatprep.subr.bf16.mxu0 0
        %3802 = vmatpush1.bf16.msra.mxu0 %v3701
        %3803 = vmatprep.subr.bf16.mxu0 0
        %3804 = vmatpush1.bf16.msra.mxu0 %v3702
        %3805 = vmatprep.subr.bf16.mxu0 0
        %3806 = vmatpush1.bf16.msra.mxu0 %v3703
        %3807 = vmatprep.subr.bf16.mxu0 0
        %3808 = vmatpush1.bf16.msra.mxu0 %v3704
        %3809 = vmatprep.mubr.bf16.mxu0 %v3471
        %3810 = vmatmul.mubr.bf16.gmra.mrb[0].mxu0 %v3470
        %v3811 = vpop.f32.mrb[0].mxu0
        %v3812 = vadd.f32 %v3772, %v3811
        %v3813 = vpop.f32.mrb[0].mxu0
        %v3814 = vpop.f32.mrb[0].mxu0
        %v3815 = vpop.f32.mrb[0].mxu0
        %3816 = vdwg.mxu0
        %v3817 = vadd.f32 %v3164, %v3812
        %s3818 = scalar_lea.vmem %s11, 1
        %v3819 = vld [vmem:[%s3818] sm:$0x1]
        %s3820 = scalar_lea.vmem %s12, 1
        %v3821 = vld [vmem:[%s3820] sm:$0x1]
        %3822 = vadd.xlane.f32.xlu0 %v3817
        %v3823 = vpop.xlane.xlu0 %3822
        %v3824 = vmul.f32 %v3823, %v1491
        %v3825 = vsub.f32 %v3817, %v3824
        %v3826 = vmul.f32 %v3825, %v3825
        %3827 = vadd.xlane.f32.xlu0 %v3826
        %v3828 = vpop.xlane.xlu0 %3827
        %v3829 = vmul.f32 %v3828, %v1491
        %v3830 = vadd.f32 %v3829, 1e-05
        %v3831 = vrsqrt.pop %v3830
        %v3832 = vmul.f32 %v3825, %v3831
        %v3834 = vlaneseq
        %v3835 = vshrl.u32 %v3834, 7
        %v3836 = vsub.s32 0, %v3835
        %v3837 = vrot.slane %v3819, %v3836
        %v3839 = vmul.f32 %v3832, %v3837
        %v3841 = vlaneseq
        %v3842 = vshrl.u32 %v3841, 7
        %v3843 = vsub.s32 0, %v3842
        %v3844 = vrot.slane %v3821, %v3843
        %v3846 = vadd.f32 %v3839, %v3844
        %v3847 = vpack.c.bf16 %v3846, %v3846
        %v3848 = vld [vmem:[%s13] sm:$0xf]
        %v3849 = vld [vmem:[%s13 + $0x4] sm:$0xf]
        %v3850 = vld [vmem:[%s13 + $0x8] sm:$0xf]
        %v3851 = vld [vmem:[%s13 + $0xc] sm:$0xf]
        %v3852 = vld [vmem:[%s13 + $0x10] sm:$0xf]
        %v3853 = vld [vmem:[%s13 + $0x14] sm:$0xf]
        %v3854 = vld [vmem:[%s13 + $0x18] sm:$0xf]
        %v3855 = vld [vmem:[%s13 + $0x1c] sm:$0xf]
        %v3856 = vld [vmem:[%s13 + $0x20] sm:$0xf]
        %v3857 = vld [vmem:[%s13 + $0x24] sm:$0xf]
        %v3858 = vld [vmem:[%s13 + $0x28] sm:$0xf]
        %v3859 = vld [vmem:[%s13 + $0x2c] sm:$0xf]
        %v3860 = vld [vmem:[%s13 + $0x30] sm:$0xf]
        %v3861 = vld [vmem:[%s13 + $0x34] sm:$0xf]
        %v3862 = vld [vmem:[%s13 + $0x38] sm:$0xf]
        %v3863 = vld [vmem:[%s13 + $0x3c] sm:$0xf]
        %v3864 = vld [vmem:[%s14] sm:$0x1]
        %v3866 = vlaneseq
        %v3867 = vshrl.u32 %v3866, 7
        %v3868 = vsub.s32 0, %v3867
        %v3869 = vrot.slane %v3864, %v3868
        %v3887 = vunpack.c.l.b16 %v3848
        %v3888 = vunpack.c.l.b16 %v3849
        %v3889 = vunpack.c.l.b16 %v3850
        %v3890 = vunpack.c.l.b16 %v3851
        %v3891 = vunpack.c.l.b16 %v3852
        %v3892 = vunpack.c.l.b16 %v3853
        %v3893 = vunpack.c.l.b16 %v3854
        %v3894 = vunpack.c.l.b16 %v3855
        %v3895 = vunpack.c.l.b16 %v3856
        %v3896 = vunpack.c.l.b16 %v3857
        %v3897 = vunpack.c.l.b16 %v3858
        %v3898 = vunpack.c.l.b16 %v3859
        %v3899 = vunpack.c.l.b16 %v3860
        %v3900 = vunpack.c.l.b16 %v3861
        %v3901 = vunpack.c.l.b16 %v3862
        %v3902 = vunpack.c.l.b16 %v3863
        %v3903 = vpack.c.b16 %v3888, %v3887
        %v3904 = vpack.c.b16 %v3890, %v3889
        %v3905 = vpack.c.b16 %v3892, %v3891
        %v3906 = vpack.c.b16 %v3894, %v3893
        %v3907 = vpack.c.b16 %v3896, %v3895
        %v3908 = vpack.c.b16 %v3898, %v3897
        %v3909 = vpack.c.b16 %v3900, %v3899
        %v3910 = vpack.c.b16 %v3902, %v3901
        %3919 = vmatprep.subr.bf16.mxu0 0
        %3920 = vmatpush1.bf16.msra.mxu0 %v3903
        %3921 = vmatprep.subr.bf16.mxu0 0
        %3922 = vmatpush1.bf16.msra.mxu0 %v3904
        %3923 = vmatprep.subr.bf16.mxu0 0
        %3924 = vmatpush1.bf16.msra.mxu0 %v3905
        %3925 = vmatprep.subr.bf16.mxu0 0
        %3926 = vmatpush1.bf16.msra.mxu0 %v3906
        %3927 = vmatprep.subr.bf16.mxu0 0
        %3928 = vmatpush1.bf16.msra.mxu0 %v3907
        %3929 = vmatprep.subr.bf16.mxu0 0
        %3930 = vmatpush1.bf16.msra.mxu0 %v3908
        %3931 = vmatprep.subr.bf16.mxu0 0
        %3932 = vmatpush1.bf16.msra.mxu0 %v3909
        %3933 = vmatprep.subr.bf16.mxu0 0
        %3934 = vmatpush1.bf16.msra.mxu0 %v3910
        %3935 = vmatprep.subr.bf16.mxu0 0
        %3936 = vmatpush1.bf16.msra.mxu0 0
        %3937 = vmatprep.subr.bf16.mxu0 0
        %3938 = vmatpush1.bf16.msra.mxu0 0
        %3939 = vmatprep.subr.bf16.mxu0 0
        %3940 = vmatpush1.bf16.msra.mxu0 0
        %3941 = vmatprep.subr.bf16.mxu0 0
        %3942 = vmatpush1.bf16.msra.mxu0 0
        %3943 = vmatprep.subr.bf16.mxu0 0
        %3944 = vmatpush1.bf16.msra.mxu0 0
        %3945 = vmatprep.subr.bf16.mxu0 0
        %3946 = vmatpush1.bf16.msra.mxu0 0
        %3947 = vmatprep.subr.bf16.mxu0 0
        %3948 = vmatpush1.bf16.msra.mxu0 0
        %3949 = vmatprep.subr.bf16.mxu0 0
        %3950 = vmatpush1.bf16.msra.mxu0 0
        %3951 = vmatprep.mubr.bf16.mxu0 0
        %3952 = vmatmul.mubr.bf16.gmra.mrb[0].mxu0 %v3847
        %v3953 = vpop.f32.mrb[0].mxu0
        %v3954 = vadd.f32 %v3869, %v3953
        %v3955 = vpop.f32.mrb[0].mxu0
        %v3956 = vpop.f32.mrb[0].mxu0
        %v3957 = vpop.f32.mrb[0].mxu0
        %3958 = vdwg.mxu0
        %3959 = vst [vmem:[%s529] sm:$0xff] %v3954
        %s3960 = sand.u32 %s359, 1
        %s3961 = scalar_lea.sflag [#allocation4], %s3960
        %s3962 = sand.u32 %s359, 1
        %s3963 = smul.addr %s3962, 8
        %s3964 = scalar_lea.vmem [#allocation8], %s3963
        // Predicated region
        $region93: #{forward.1} parent=79 // pred_check
          %p3965 = pneg %p369
        $region94: #{forward.1} parent=79 // pred_check_branch
          %3967 = sbr.rel (%p3965) target = $region96
        $region95: #{forward.1} parent=79 // pred_region
          %s3969 = ssub.s32 128, 128
          %3970 = vsyncadd %s3961, %s3969
          %s3971 = smul.addr %s31, 128
          %s3972 = scalar_lea.hbm %s15, %s3971
          %s3974 = sshll.u32 %s3964, 4
          %s3975 = int_to_ptr.vmem [resolvable:$true] %s3974
          %3977 = dma.vmem_to_hbm [thread:$0]  %s3975, 128, %s3972, %s3961
        $region96: #{forward.1} parent=79 // pred_fallthru
          _
      $region80: #{forward.1} parent=5 // pred_fallthru
        _
      %p3978 = scmp.le.s32.totalorder 2, %s26
      // Predicated region
      $region97: #{forward.1} parent=5 // pred_check
        %p3979 = pneg %p3978
      $region98: #{forward.1} parent=5 // pred_check_branch
        %3981 = sbr.rel (%p3979) target = $region100
      $region99: #{forward.1} parent=5 // pred_region
        %s3982 = ssub.s32 %s26, 2
        // Predicated region
        $region101: #{forward.1} parent=99 // pred_check
          %p3983 = pneg %p375
        $region102: #{forward.1} parent=99 // pred_check_branch
          %3985 = sbr.rel (%p3983) target = $region104
        $region103: #{forward.1} parent=99 // pred_region
          %s3986 = sand.u32 %s360, 1
          %s3987 = scalar_lea.sflag [#allocation4], %s3986
          %s3988 = sand.u32 %s360, 1
          %s3989 = smul.addr %s3988, 8
          %s3990 = scalar_lea.vmem [#allocation8], %s3989
          %3991 = dma.done %s3987, 128
        $region104: #{forward.1} parent=99 // pred_fallthru
          _
      $region100: #{forward.1} parent=5 // pred_fallthru
        _
    $region6: #{forward.1} parent=1 // loop_footer
      %s30 = sadd.s32 1, %s26
    $region7: #{forward.1} parent=1 // loop_footer_branch
      %25 = sbr.rel target = $region3
    $region8: #{forward.1} parent=1 // loop_exit
      _
    %3992 = vsyncpa [#allocation3], 1
    %s3993 = scalar_lea.sflag [#allocation3], 1
    %3994 = vsyncpa %s3993, 1
    %3995 = vsyncpa [#allocation6], 1
    %3996 = vsyncpa [#allocation4], 1
    %s3997 = scalar_lea.sflag [#allocation4], 1
    %3998 = vsyncpa %s3997, 1

</llo_original>
